<compile_context>
chip_gen: v7x
topology: tpu7x:2x2x1
jax: 0.10.0
libtpu: 0.0.40
codegen_flags: <defaults>
</compile_context>

<pallas_src>
import functools

import jax
import jax.numpy as jnp
import numpy as np
from jax import lax
from jax.experimental import pallas as pl
from jax.experimental.pallas import tpu as pltpu

MIN_EXPERT_CAPACITY = 4
EPS = 1e-9


def _round_up(v, m):
    return ((v + m - 1) // m) * m


def _vmem_limit(estimate_bytes):
    # Floor at a useful scoped-VMEM size, cap at v7x's physical 64 MiB.
    return int(min(max(estimate_bytes, 16 << 20), 64 << 20))


# ---------------------------------------------------------------------------
# Kernel 1: Top-2 gating.  One grid step per group; emits a lane-dense combine
# tensor (E, C_pad, n) plus a packed stats row (loss | m1_count | m2_count).
# ---------------------------------------------------------------------------
def _top2_gating_kernel(x_ref, tril_ref, w_ref, combine_ref, stats_ref, *,
                        num_gates, capacity, cap_pad):
    _, n, _ = x_ref.shape
    E = num_gates
    W = stats_ref.shape[-1]
    cap_f = float(capacity)

    x = x_ref[0]                                                  # (n, d) f32
    w = w_ref[...]                                                # (d, E) f32

    # gating logits (tiny MXU op, f32) + softmax over experts
    logits = jnp.dot(x, w, preferred_element_type=jnp.float32)    # (n, E)
    m = jnp.max(logits, axis=-1, keepdims=True)
    ex = jnp.exp(logits - m)
    raw_gates = ex / jnp.sum(ex, axis=-1, keepdims=True)

    iota_e = lax.broadcasted_iota(jnp.int32, (n, E), 1)

    # ---- top-1 ----
    gate_1 = jnp.max(raw_gates, axis=-1, keepdims=True)                       # (n,1)
    index_1 = jnp.min(jnp.where(raw_gates >= gate_1, iota_e, E),
                      axis=-1, keepdims=True)                                 # (n,1)
    mask_1 = (iota_e == index_1).astype(jnp.float32)                          # (n,E)

    # ---- top-2 (softmax > 0, so zeroing top-1 is safe) ----
    gates_wo1 = raw_gates * (1.0 - mask_1)
    gate_2 = jnp.max(gates_wo1, axis=-1, keepdims=True)
    index_2 = jnp.min(jnp.where(gates_wo1 >= gate_2, iota_e, E),
                      axis=-1, keepdims=True)
    mask_2 = (iota_e == index_2).astype(jnp.float32)

    denom = gate_1 + gate_2 + EPS
    gate_1 = gate_1 / denom
    gate_2 = gate_2 / denom

    # ---- load-balancing aux loss (pre-capacity masks, as in the reference) ----
    density_1 = jnp.mean(mask_1, axis=0, keepdims=True)            # (1,E)
    density_1_proxy = jnp.mean(raw_gates, axis=0, keepdims=True)   # (1,E)
    loss_val = jnp.sum(density_1_proxy * density_1, axis=-1,
                       keepdims=True) * float(E)                   # (1,1)

    # ---- fused exclusive cumsum for BOTH masks: one bf16 MXU pass against the
    #      pre-built strictly-lower-triangular matrix (exact 0/1, f32 accum) ----
    iota_2e = lax.broadcasted_iota(jnp.int32, (n, 2 * E), 1)
    masks12 = ((iota_2e == index_1)
               | (iota_2e == (index_2 + E))).astype(jnp.bfloat16)  # [m1 | m2]
    P = jnp.dot(tril_ref[...], masks12, preferred_element_type=jnp.float32)
    cum1 = P[:, :E]
    cum2 = P[:, E:]

    # ---- capacity trimming (positions are exact ints in f32 for n < 2**24) ----
    pos1 = cum1 * mask_1                                            # (n,E)
    mask_1 = mask_1 * (pos1 < cap_f).astype(jnp.float32)
    mask_1_count = jnp.sum(mask_1, axis=0, keepdims=True)           # (1,E)
    mask_1_flat = jnp.sum(mask_1, axis=-1, keepdims=True)           # (n,1)
    pos1_s = jnp.sum(pos1, axis=-1, keepdims=True)                  # (n,1)
    gate_1 = gate_1 * mask_1_flat

    pos2 = (cum2 + mask_1_count) * mask_2
    mask_2 = mask_2 * (pos2 < cap_f).astype(jnp.float32)
    mask_2_flat = jnp.sum(mask_2, axis=-1, keepdims=True)
    mask_2_count = jnp.sum(mask_2, axis=0, keepdims=True)
    pos2_s = jnp.sum(pos2, axis=-1, keepdims=True)
    gate_2 = gate_2 * mask_2_flat

    # ---- combine tensor, layout (E, C_pad, n): tokens on lanes (n % 128 == 0),
    #      capacity on sublanes (C_pad % 8 == 0).  Built from 2-D one-hots only.
    #      Using the trimmed masks as the expert indicator is equivalent to the
    #      index one-hots because trimmed tokens already carry gate == 0. ----
    c_iota = lax.broadcasted_iota(jnp.int32, (n, cap_pad), 1)
    gpos1 = jnp.where(c_iota == pos1_s.astype(jnp.int32), gate_1, 0.0)   # (n,C_pad)
    gpos2 = jnp.where(c_iota == pos2_s.astype(jnp.int32), gate_2, 0.0)
    combine_ref[0] = (mask_1.T[:, None, :] * gpos1.T[None, :, :]
                      + mask_2.T[:, None, :] * gpos2.T[None, :, :])     # (E,C_pad,n)

    # ---- packed stats row [loss, m1_count(E), m2_count(E), 0...] written with
    #      a single dense lane store (selector matmuls, no masked sub-stores) ----
    lane_w = lax.broadcasted_iota(jnp.int32, (E, W), 1)
    row_w = lax.broadcasted_iota(jnp.int32, (E, W), 0)
    sel1 = (lane_w == row_w + 1).astype(jnp.float32)
    sel2 = (lane_w == row_w + 1 + E).astype(jnp.float32)
    loss_oh = (lax.broadcasted_iota(jnp.int32, (1, W), 1) == 0).astype(jnp.float32)
    stats_ref[0] = (loss_val * loss_oh
                    + jnp.dot(mask_1_count, sel1, preferred_element_type=jnp.float32)
                    + jnp.dot(mask_2_count, sel2, preferred_element_type=jnp.float32))


def top2_gating(x, w_gating, *, capacity_factor=1.25):
    """Returns (combine (G,E,C_pad,n) f32, loss (G,), m1c (G,1,E), m2c (G,1,E), C)."""
    G, n, d = x.shape
    E = w_gating.shape[-1]
    C = max(min(n, int(n * capacity_factor / E)), MIN_EXPERT_CAPACITY)
    C_pad = _round_up(C, 8)
    W = _round_up(1 + 2 * E, 128)

    # strictly-lower-triangular matrix (exact 0/1 in bf16), fetched once
    tril = jnp.tril(jnp.ones((n, n), jnp.float32), -1).astype(jnp.bfloat16)

    kernel = functools.partial(_top2_gating_kernel,
                               num_gates=E, capacity=C, cap_pad=C_pad)

    est = (2 * (n * d * 4 + n * n * 2 + d * E * 4)      # double-buffered inputs
           + 2 * (E * C_pad * n * 4 + W * 4)            # double-buffered outputs
           + 6 * E * C_pad * n * 4                      # in-kernel temporaries
           + (2 << 20))

    combine, stats = pl.pallas_call(
        kernel,
        grid=(G,),
        in_specs=[
            pl.BlockSpec((1, n, d), lambda g: (g, 0, 0)),
            pl.BlockSpec((n, n), lambda g: (0, 0)),        # constant: DMA'd once
            pl.BlockSpec((d, E), lambda g: (0, 0)),        # constant: DMA'd once
        ],
        out_specs=(
            pl.BlockSpec((1, E, C_pad, n), lambda g: (g, 0, 0, 0)),
            pl.BlockSpec((1, 1, W), lambda g: (g, 0, 0)),
        ),
        out_shape=(
            jax.ShapeDtypeStruct((G, E, C_pad, n), jnp.float32),
            jax.ShapeDtypeStruct((G, 1, W), jnp.float32),
        ),
        compiler_params=pltpu.CompilerParams(
            dimension_semantics=("parallel",),
            vmem_limit_bytes=_vmem_limit(est)),
    )(x, tril, w_gating)

    loss = stats[:, 0, 0]                    # (G,)
    m1c = stats[:, :, 1:1 + E]               # (G, 1, E)
    m2c = stats[:, :, 1 + E:1 + 2 * E]       # (G, 1, E)
    return combine, loss, m1c, m2c, C


# ---------------------------------------------------------------------------
# Kernel 2: Experts FFN + combine.  Grid (groups, experts); expert axis is an
# "arbitrary" reduction accumulating into a VMEM scratch.  dispatch is derived
# in-kernel from combine (never materialized in HBM); weights live in VMEM for
# the whole grid (constant index_map) and feed the MXU as bf16.
# ---------------------------------------------------------------------------
def _moe_experts_kernel(x_ref, comb_ref, w1_ref, w2_ref, out_ref, acc_ref):
    e = pl.program_id(1)

    @pl.when(e == 0)
    def _():
        acc_ref[...] = jnp.zeros_like(acc_ref)

    x = x_ref[0]                                  # (n, d) bf16
    comb = comb_ref[0, 0]                         # (C_pad, n) f32
    disp = (comb != 0.0).astype(jnp.bfloat16)     # exact 0/1

    # expert_inputs[c, d] = sum_n dispatch[c, n] * x[n, d]
    ein = jnp.dot(disp, x, preferred_element_type=jnp.float32)          # (C_pad, d)
    w1e = w1_ref[e]                                                     # (d, h) bf16
    w2e = w2_ref[e]                                                     # (h, d_out) bf16
    # MoE() passes activation=nn.ReLU to Experts (overriding the GELU default).
    hid = jnp.maximum(jnp.dot(ein.astype(jnp.bfloat16), w1e,
                              preferred_element_type=jnp.float32), 0.0)  # (C_pad, h)
    out_e = jnp.dot(hid.astype(jnp.bfloat16), w2e,
                    preferred_element_type=jnp.float32)                  # (C_pad, d_out)
    # final combine (tiny, kept f32): acc[n, d_out] += sum_c comb[c, n] * out_e[c, d_out]
    acc_ref[...] += lax.dot_general(comb, out_e, (((0,), (0,)), ((), ())),
                                    preferred_element_type=jnp.float32)

    @pl.when(e == pl.num_programs(1) - 1)
    def _():
        out_ref[0] = acc_ref[...]


def moe_forward(x, w_gating, w1, w2, *, capacity_factor=1.25, loss_coef=0.01):
    """Full MoE forward.  x: (G, n, d); each group follows the b==1 reference."""
    G, n, d = x.shape
    E, _, h = w1.shape
    d_out = w2.shape[-1]

    combine, loss, m1c, m2c, _ = top2_gating(
        x, w_gating, capacity_factor=capacity_factor)
    C_pad = combine.shape[2]

    x_bf = x.astype(jnp.bfloat16)
    w1_bf = w1.astype(jnp.bfloat16)
    w2_bf = w2.astype(jnp.bfloat16)

    est = (2 * (n * d * 2 + C_pad * n * 4 + n * d_out * 4)   # x / comb / out blocks
           + 2 * (E * d * h * 2 + E * h * d_out * 2)         # resident bf16 weights
           + n * d_out * 4                                    # accumulator scratch
           + 6 * C_pad * max(h, d, d_out) * 4                 # in-kernel temporaries
           + (2 << 20))

    out = pl.pallas_call(
        _moe_experts_kernel,
        grid=(G, E),
        in_specs=[
            pl.BlockSpec((1, n, d), lambda g, e: (g, 0, 0)),
            pl.BlockSpec((1, 1, C_pad, n), lambda g, e: (g, e, 0, 0)),
            pl.BlockSpec((E, d, h), lambda g, e: (0, 0, 0)),          # DMA'd once
            pl.BlockSpec((E, h, d_out), lambda g, e: (0, 0, 0)),      # DMA'd once
        ],
        out_specs=pl.BlockSpec((1, n, d_out), lambda g, e: (g, 0, 0)),
        out_shape=jax.ShapeDtypeStruct((G, n, d_out), jnp.float32),
        scratch_shapes=[pltpu.VMEM((n, d_out), jnp.float32)],
        compiler_params=pltpu.CompilerParams(
            dimension_semantics=("parallel", "arbitrary"),
            vmem_limit_bytes=_vmem_limit(est)),
    )(x_bf, combine, w1_bf, w2_bf)

    return out, loss * loss_coef, m1c, m2c


# ---------------------------------------------------------------------------
# Pure-JAX reference mirror of the PyTorch forward (per group, b == 1).
# ---------------------------------------------------------------------------
def _reference_group(x, w, w1, w2, capacity_factor=1.25, loss_coef=0.01):
    n, d = x.shape
    E = w.shape[-1]
    C = max(min(n, int(n * capacity_factor / E)), MIN_EXPERT_CAPACITY)
    logits = x @ w
    raw = jax.nn.softmax(logits, axis=-1)
    idx1 = jnp.argmax(raw, axis=-1)
    m1 = jax.nn.one_hot(idx1, E, dtype=jnp.float32)
    idx2 = jnp.argmax(raw * (1.0 - m1), axis=-1)
    m2 = jax.nn.one_hot(idx2, E, dtype=jnp.float32)
    g1 = jnp.max(raw, axis=-1)
    g2 = jnp.max(raw * (1.0 - m1), axis=-1)
    den = g1 + g2 + EPS
    g1, g2 = g1 / den, g2 / den
    density_1 = m1.mean(axis=0)
    density_1_proxy = raw.mean(axis=0)
    loss = (density_1_proxy * density_1).mean() * float(E * E)
    cume = lambda t: jnp.cumsum(t, axis=0) - t
    p1 = cume(m1) * m1
    m1t = m1 * (p1 < C).astype(jnp.float32)
    m1_count = m1t.sum(axis=0, keepdims=True)
    m1_flat = m1t.sum(axis=-1)
    p1s = p1.sum(axis=-1)
    g1 = g1 * m1_flat
    p2 = (cume(m2) + m1_count) * m2
    m2t = m2 * (p2 < C).astype(jnp.float32)
    m2_flat = m2t.sum(axis=-1)
    m2_count = m2t.sum(axis=0, keepdims=True)
    p2s = p2.sum(axis=-1)
    g2 = g2 * m2_flat
    safe_oh = lambda p: jax.nn.one_hot(p.astype(jnp.int32), C, dtype=jnp.float32)
    combine = ((g1 * m1_flat)[:, None, None]
               * jax.nn.one_hot(idx1, E, dtype=jnp.float32)[:, :, None]
               * safe_oh(p1s)[:, None, :]
               + (g2 * m2_flat)[:, None, None]
               * jax.nn.one_hot(idx2, E, dtype=jnp.float32)[:, :, None]
               * safe_oh(p2s)[:, None, :])                         # (n, E, C)
    dispatch = (combine != 0).astype(jnp.float32)
    expert_inputs = jnp.einsum('nd,nec->ecd', x, dispatch)         # (E, C, d)
    hidden = jnp.maximum(jnp.einsum('ecd,edh->ech', expert_inputs, w1), 0.0)
    expert_outputs = jnp.einsum('ech,ehd->ecd', hidden, w2)        # (E, C, d_out)
    output = jnp.einsum('ecd,nec->nd', expert_outputs, combine)    # (n, d_out)
    return output, loss * loss_coef, m1_count, m2_count, combine, C


if __name__ == "__main__":
    key = jax.random.PRNGKey(0)
    kx, kw, k1, k2 = jax.random.split(key, 4)

    # Small shapes consistent with the module: G groups (each behaving as the
    # b==1 reference), group_size n=128, dim=64, num_gates E=8, hidden=4*dim.
    G, n, d, E = 2, 128, 64, 8
    h = 4 * d
    d_out = d

    x = jax.random.normal(kx, (G, n, d), dtype=jnp.float32)
    w_gating = jax.random.normal(kw, (d, E), dtype=jnp.float32)
    # Expert weights stored bf16 (streamed to the MXU as bf16, f32 accumulate).
    w1 = (jax.random.normal(k1, (E, d, h), dtype=jnp.float32) * 0.02).astype(jnp.bfloat16)
    w2 = (jax.random.normal(k2, (E, h, d_out), dtype=jnp.float32) * 0.02).astype(jnp.bfloat16)

    out, loss, m1c, m2c = moe_forward(x, w_gating, w1, w2,
                                      capacity_factor=1.25, loss_coef=0.01)
    out, loss, m1c, m2c = jax.block_until_ready((out, loss, m1c, m2c))

    # Also grab the combine tensor once for a gating-level check.
    combine_p, g_loss, g_m1c, g_m2c, C = top2_gating(x, w_gating)
    combine_p = jax.block_until_ready(combine_p)

    w1f = w1.astype(jnp.float32)
    w2f = w2.astype(jnp.float32)
    for g in range(G):
        r_out, r_loss, r_m1c, r_m2c, r_comb, r_C = _reference_group(
            x[g], w_gating, w1f, w2f, 1.25, 0.01)
        assert r_C == C
        # gating combine: kernel layout (E, C_pad, n) -> reference (n, E, C)
        k_comb = np.transpose(np.asarray(combine_p[g]), (2, 0, 1))[:, :, :C]
        np.testing.assert_allclose(k_comb, np.asarray(r_comb), rtol=1e-4, atol=1e-6)
        np.testing.assert_allclose(float(loss[g]), float(r_loss), rtol=1e-4, atol=1e-6)
        np.testing.assert_allclose(np.asarray(m1c[g]), np.asarray(r_m1c), atol=1e-6)
        np.testing.assert_allclose(np.asarray(m2c[g]), np.asarray(r_m2c), atol=1e-6)
        # FFN runs bf16 x bf16 -> f32 on the MXU; reference is pure f32, so the
        # output tolerance is loosened accordingly.
        np.testing.assert_allclose(np.asarray(out[g]), np.asarray(r_out),
                                   rtol=2e-2, atol=2e-3)

    print("KERNEL_OK")
</pallas_src>

<mosaic_0001>
module attributes {stable_mosaic.version = 11 : i64} {
  func.func @_top2_gating_kernel(%arg0: i32, %arg1: memref<1x128x64xf32, #tpu.memory_space<vmem>>, %arg2: memref<128x128xbf16, #tpu.memory_space<vmem>>, %arg3: memref<64x8xf32, #tpu.memory_space<vmem>>, %arg4: memref<1x8x24x128xf32, #tpu.memory_space<vmem>>, %arg5: memref<1x1x128xf32, #tpu.memory_space<vmem>>) attributes {dimension_semantics = [#tpu.dimension_semantics<parallel>], iteration_bounds = array<i64: 2>, scalar_prefetch = 0 : i64, scratch_operands = 0 : i64, tpu.core_type = #tpu.core_type<tc>, window_params = [{transform_indices = @transform_0, window_bounds = array<i64: 1, 128, 64>}, {pipeline_mode = #tpu.pipeline_mode<synchronous>, transform_indices = @transform_1, window_bounds = array<i64: 128, 128>}, {pipeline_mode = #tpu.pipeline_mode<synchronous>, transform_indices = @transform_2, window_bounds = array<i64: 64, 8>}, {transform_indices = @transform_3, window_bounds = array<i64: 1, 8, 24, 128>}, {transform_indices = @transform_4, window_bounds = array<i64: 1, 1, 128>}]} {
    %c0 = arith.constant 0 : index
    %c0_0 = arith.constant 0 : index
    %c0_1 = arith.constant 0 : index
    %0 = vector.load %arg1[%c0, %c0_0, %c0_1] : memref<1x128x64xf32, #tpu.memory_space<vmem>>, vector<1x128x64xf32>
    %1 = vector.shape_cast %0 : vector<1x128x64xf32> to vector<128x64xf32>
    %c0_2 = arith.constant 0 : index
    %c0_3 = arith.constant 0 : index
    %2 = vector.load %arg3[%c0_2, %c0_3] : memref<64x8xf32, #tpu.memory_space<vmem>>, vector<64x8xf32>
    %cst = arith.constant dense<0.000000e+00> : vector<128x8xf32>
    %3 = tpu.matmul %1, %2, %cst {dimension_numbers = #tpu.dot_dimension_numbers<[1], [0], [0], [1], [0, 0, 1, 1], [], []>} : vector<128x64xf32>, vector<64x8xf32>, vector<128x8xf32> -> vector<128x8xf32>
    %cst_4 = arith.constant dense<0xFF800000> : vector<128xf32>
    %4 = vector.multi_reduction <maximumf>, %3, %cst_4 [1] : vector<128x8xf32> to vector<128xf32>
    %5 = vector.shape_cast %4 : vector<128xf32> to vector<128x1xf32>
    %6 = vector.broadcast %5 : vector<128x1xf32> to vector<128x8xf32>
    %7 = arith.subf %3, %6 : vector<128x8xf32>
    %8 = math.exp %7 : vector<128x8xf32>
    %cst_5 = arith.constant dense<0.000000e+00> : vector<128xf32>
    %9 = vector.multi_reduction <add>, %8, %cst_5 [1] : vector<128x8xf32> to vector<128xf32>
    %10 = vector.shape_cast %9 : vector<128xf32> to vector<128x1xf32>
    %11 = vector.broadcast %10 : vector<128x1xf32> to vector<128x8xf32>
    %12 = arith.divf %8, %11 : vector<128x8xf32>
    %13 = tpu.iota {dimensions = array<i32: 1>} : vector<128x8xi32>
    %cst_6 = arith.constant dense<0xFF800000> : vector<128xf32>
    %14 = vector.multi_reduction <maximumf>, %12, %cst_6 [1] : vector<128x8xf32> to vector<128xf32>
    %15 = vector.shape_cast %14 : vector<128xf32> to vector<128x1xf32>
    %16 = vector.broadcast %15 : vector<128x1xf32> to vector<128x8xf32>
    %17 = arith.cmpf oge, %12, %16 : vector<128x8xf32>
    %c8_i32 = arith.constant 8 : i32
    %18 = vector.broadcast %c8_i32 : i32 to vector<128x8xi32>
    %19 = arith.select %17, %13, %18 : vector<128x8xi1>, vector<128x8xi32>
    %cst_7 = arith.constant dense<2147483647> : vector<128xi32>
    %20 = vector.multi_reduction <minsi>, %19, %cst_7 [1] : vector<128x8xi32> to vector<128xi32>
    %21 = vector.shape_cast %20 : vector<128xi32> to vector<128x1xi32>
    %22 = vector.broadcast %21 : vector<128x1xi32> to vector<128x8xi32>
    %23 = arith.cmpi eq, %13, %22 : vector<128x8xi32>
    %24 = arith.extui %23 : vector<128x8xi1> to vector<128x8xi32>
    %25 = arith.sitofp %24 : vector<128x8xi32> to vector<128x8xf32>
    %cst_8 = arith.constant 1.000000e+00 : f32
    %26 = vector.broadcast %cst_8 : f32 to vector<128x8xf32>
    %27 = arith.subf %26, %25 : vector<128x8xf32>
    %28 = arith.mulf %12, %27 : vector<128x8xf32>
    %cst_9 = arith.constant dense<0xFF800000> : vector<128xf32>
    %29 = vector.multi_reduction <maximumf>, %28, %cst_9 [1] : vector<128x8xf32> to vector<128xf32>
    %30 = vector.shape_cast %29 : vector<128xf32> to vector<128x1xf32>
    %31 = vector.broadcast %30 : vector<128x1xf32> to vector<128x8xf32>
    %32 = arith.cmpf oge, %28, %31 : vector<128x8xf32>
    %c8_i32_10 = arith.constant 8 : i32
    %33 = vector.broadcast %c8_i32_10 : i32 to vector<128x8xi32>
    %34 = arith.select %32, %13, %33 : vector<128x8xi1>, vector<128x8xi32>
    %cst_11 = arith.constant dense<2147483647> : vector<128xi32>
    %35 = vector.multi_reduction <minsi>, %34, %cst_11 [1] : vector<128x8xi32> to vector<128xi32>
    %36 = vector.shape_cast %35 : vector<128xi32> to vector<128x1xi32>
    %37 = vector.broadcast %36 : vector<128x1xi32> to vector<128x8xi32>
    %38 = arith.cmpi eq, %13, %37 : vector<128x8xi32>
    %39 = arith.extui %38 : vector<128x8xi1> to vector<128x8xi32>
    %40 = arith.sitofp %39 : vector<128x8xi32> to vector<128x8xf32>
    %41 = arith.addf %15, %30 : vector<128x1xf32>
    %cst_12 = arith.constant 9.99999971E-10 : f32
    %42 = vector.broadcast %cst_12 : f32 to vector<128x1xf32>
    %43 = arith.addf %41, %42 : vector<128x1xf32>
    %44 = arith.divf %15, %43 : vector<128x1xf32>
    %45 = arith.divf %30, %43 : vector<128x1xf32>
    %cst_13 = arith.constant dense<0.000000e+00> : vector<8xf32>
    %46 = vector.multi_reduction <add>, %25, %cst_13 [0] : vector<128x8xf32> to vector<8xf32>
    %47 = vector.shape_cast %46 : vector<8xf32> to vector<1x8xf32>
    %cst_14 = arith.constant 1.280000e+02 : f32
    %48 = vector.broadcast %cst_14 : f32 to vector<1x8xf32>
    %49 = arith.divf %47, %48 : vector<1x8xf32>
    %cst_15 = arith.constant dense<0.000000e+00> : vector<8xf32>
    %50 = vector.multi_reduction <add>, %12, %cst_15 [0] : vector<128x8xf32> to vector<8xf32>
    %51 = vector.shape_cast %50 : vector<8xf32> to vector<1x8xf32>
    %cst_16 = arith.constant 1.280000e+02 : f32
    %52 = vector.broadcast %cst_16 : f32 to vector<1x8xf32>
    %53 = arith.divf %51, %52 : vector<1x8xf32>
    %54 = arith.mulf %53, %49 : vector<1x8xf32>
    %cst_17 = arith.constant dense<0.000000e+00> : vector<1xf32>
    %55 = vector.multi_reduction <add>, %54, %cst_17 [1] : vector<1x8xf32> to vector<1xf32>
    %56 = vector.shape_cast %55 : vector<1xf32> to vector<1x1xf32>
    %cst_18 = arith.constant 8.000000e+00 : f32
    %57 = vector.broadcast %cst_18 : f32 to vector<1x1xf32>
    %58 = arith.mulf %56, %57 : vector<1x1xf32>
    %59 = tpu.iota {dimensions = array<i32: 1>} : vector<128x16xi32>
    %60 = vector.broadcast %21 : vector<128x1xi32> to vector<128x16xi32>
    %61 = arith.cmpi eq, %59, %60 : vector<128x16xi32>
    %c8_i32_19 = arith.constant 8 : i32
    %62 = vector.broadcast %c8_i32_19 : i32 to vector<128x1xi32>
    %63 = arith.addi %36, %62 : vector<128x1xi32>
    %64 = vector.broadcast %63 : vector<128x1xi32> to vector<128x16xi32>
    %65 = arith.cmpi eq, %59, %64 : vector<128x16xi32>
    %66 = arith.ori %61, %65 : vector<128x16xi1>
    %67 = arith.extui %66 : vector<128x16xi1> to vector<128x16xi32>
    %68 = arith.sitofp %67 : vector<128x16xi32> to vector<128x16xf32>
    %69 = arith.truncf %68 : vector<128x16xf32> to vector<128x16xbf16>
    %c0_20 = arith.constant 0 : index
    %c0_21 = arith.constant 0 : index
    %70 = vector.load %arg2[%c0_20, %c0_21] : memref<128x128xbf16, #tpu.memory_space<vmem>>, vector<128x128xbf16>
    %cst_22 = arith.constant dense<0.000000e+00> : vector<128x16xf32>
    %71 = tpu.matmul %70, %69, %cst_22 {dimension_numbers = #tpu.dot_dimension_numbers<[1], [0], [0], [1], [0, 0, 1, 1], [], []>} : vector<128x128xbf16>, vector<128x16xbf16>, vector<128x16xf32> -> vector<128x16xf32>
    %72 = vector.extract_strided_slice %71 {offsets = [0, 0], sizes = [128, 8], strides = [1, 1]} : vector<128x16xf32> to vector<128x8xf32>
    %73 = vector.extract_strided_slice %71 {offsets = [0, 8], sizes = [128, 8], strides = [1, 1]} : vector<128x16xf32> to vector<128x8xf32>
    %74 = arith.mulf %72, %25 : vector<128x8xf32>
    %cst_23 = arith.constant 2.000000e+01 : f32
    %75 = vector.broadcast %cst_23 : f32 to vector<128x8xf32>
    %76 = arith.cmpf olt, %74, %75 : vector<128x8xf32>
    %77 = arith.extui %76 : vector<128x8xi1> to vector<128x8xi32>
    %78 = arith.sitofp %77 : vector<128x8xi32> to vector<128x8xf32>
    %79 = arith.mulf %25, %78 : vector<128x8xf32>
    %cst_24 = arith.constant dense<0.000000e+00> : vector<8xf32>
    %80 = vector.multi_reduction <add>, %79, %cst_24 [0] : vector<128x8xf32> to vector<8xf32>
    %81 = vector.shape_cast %80 : vector<8xf32> to vector<1x8xf32>
    %cst_25 = arith.constant dense<0.000000e+00> : vector<128xf32>
    %82 = vector.multi_reduction <add>, %79, %cst_25 [1] : vector<128x8xf32> to vector<128xf32>
    %83 = vector.shape_cast %82 : vector<128xf32> to vector<128x1xf32>
    %cst_26 = arith.constant dense<0.000000e+00> : vector<128xf32>
    %84 = vector.multi_reduction <add>, %74, %cst_26 [1] : vector<128x8xf32> to vector<128xf32>
    %85 = vector.shape_cast %84 : vector<128xf32> to vector<128x1xf32>
    %86 = arith.mulf %44, %83 : vector<128x1xf32>
    %87 = vector.broadcast %81 : vector<1x8xf32> to vector<128x8xf32>
    %88 = arith.addf %73, %87 : vector<128x8xf32>
    %89 = arith.mulf %88, %40 : vector<128x8xf32>
    %cst_27 = arith.constant 2.000000e+01 : f32
    %90 = vector.broadcast %cst_27 : f32 to vector<128x8xf32>
    %91 = arith.cmpf olt, %89, %90 : vector<128x8xf32>
    %92 = arith.extui %91 : vector<128x8xi1> to vector<128x8xi32>
    %93 = arith.sitofp %92 : vector<128x8xi32> to vector<128x8xf32>
    %94 = arith.mulf %40, %93 : vector<128x8xf32>
    %cst_28 = arith.constant dense<0.000000e+00> : vector<128xf32>
    %95 = vector.multi_reduction <add>, %94, %cst_28 [1] : vector<128x8xf32> to vector<128xf32>
    %96 = vector.shape_cast %95 : vector<128xf32> to vector<128x1xf32>
    %cst_29 = arith.constant dense<0.000000e+00> : vector<8xf32>
    %97 = vector.multi_reduction <add>, %94, %cst_29 [0] : vector<128x8xf32> to vector<8xf32>
    %98 = vector.shape_cast %97 : vector<8xf32> to vector<1x8xf32>
    %cst_30 = arith.constant dense<0.000000e+00> : vector<128xf32>
    %99 = vector.multi_reduction <add>, %89, %cst_30 [1] : vector<128x8xf32> to vector<128xf32>
    %100 = vector.shape_cast %99 : vector<128xf32> to vector<128x1xf32>
    %101 = arith.mulf %45, %96 : vector<128x1xf32>
    %102 = tpu.iota {dimensions = array<i32: 1>} : vector<128x24xi32>
    %103 = arith.fptosi %85 : vector<128x1xf32> to vector<128x1xi32>
    %104 = vector.broadcast %103 : vector<128x1xi32> to vector<128x24xi32>
    %105 = arith.cmpi eq, %102, %104 : vector<128x24xi32>
    %cst_31 = arith.constant 0.000000e+00 : f32
    %106 = vector.shape_cast %86 : vector<128x1xf32> to vector<128x1xf32>
    %107 = vector.broadcast %106 : vector<128x1xf32> to vector<128x24xf32>
    %108 = vector.broadcast %cst_31 : f32 to vector<128x24xf32>
    %109 = arith.select %105, %107, %108 : vector<128x24xi1>, vector<128x24xf32>
    %110 = arith.fptosi %100 : vector<128x1xf32> to vector<128x1xi32>
    %111 = vector.broadcast %110 : vector<128x1xi32> to vector<128x24xi32>
    %112 = arith.cmpi eq, %102, %111 : vector<128x24xi32>
    %cst_32 = arith.constant 0.000000e+00 : f32
    %113 = vector.shape_cast %101 : vector<128x1xf32> to vector<128x1xf32>
    %114 = vector.broadcast %113 : vector<128x1xf32> to vector<128x24xf32>
    %115 = vector.broadcast %cst_32 : f32 to vector<128x24xf32>
    %116 = arith.select %112, %114, %115 : vector<128x24xi1>, vector<128x24xf32>
    %117 = tpu.transpose %79, [1, 0] : vector<128x8xf32> -> vector<8x128xf32>
    %118 = vector.shape_cast %117 : vector<8x128xf32> to vector<8x1x128xf32>
    %119 = tpu.transpose %109, [1, 0] : vector<128x24xf32> -> vector<24x128xf32>
    %120 = vector.shape_cast %119 : vector<24x128xf32> to vector<1x24x128xf32>
    %121 = vector.broadcast %118 : vector<8x1x128xf32> to vector<8x24x128xf32>
    %122 = vector.broadcast %120 : vector<1x24x128xf32> to vector<8x24x128xf32>
    %123 = arith.mulf %121, %122 : vector<8x24x128xf32>
    %124 = tpu.transpose %94, [1, 0] : vector<128x8xf32> -> vector<8x128xf32>
    %125 = vector.shape_cast %124 : vector<8x128xf32> to vector<8x1x128xf32>
    %126 = tpu.transpose %116, [1, 0] : vector<128x24xf32> -> vector<24x128xf32>
    %127 = vector.shape_cast %126 : vector<24x128xf32> to vector<1x24x128xf32>
    %128 = vector.broadcast %125 : vector<8x1x128xf32> to vector<8x24x128xf32>
    %129 = vector.broadcast %127 : vector<1x24x128xf32> to vector<8x24x128xf32>
    %130 = arith.mulf %128, %129 : vector<8x24x128xf32>
    %131 = arith.addf %123, %130 : vector<8x24x128xf32>
    %c0_33 = arith.constant 0 : index
    %c0_34 = arith.constant 0 : index
    %c0_35 = arith.constant 0 : index
    %c0_36 = arith.constant 0 : index
    %132 = vector.load %arg4[%c0_33, %c0_34, %c0_35, %c0_36] : memref<1x8x24x128xf32, #tpu.memory_space<vmem>>, vector<1x8x24x128xf32>
    %133 = vector.shape_cast %132 : vector<1x8x24x128xf32> to vector<8x24x128xf32>
    %134 = vector.shape_cast %131 : vector<8x24x128xf32> to vector<1x8x24x128xf32>
    tpu.vector_store %arg4[%c0_33, %c0_34, %c0_35, %c0_36], %134 {strides = array<i32>} : memref<1x8x24x128xf32, #tpu.memory_space<vmem>>, vector<1x8x24x128xf32>,
    %135 = tpu.iota {dimensions = array<i32: 1>} : vector<8x128xi32>
    %136 = tpu.iota {dimensions = array<i32: 0>} : vector<8x128xi32>
    %c1_i32 = arith.constant 1 : i32
    %137 = vector.broadcast %c1_i32 : i32 to vector<8x128xi32>
    %138 = arith.addi %136, %137 : vector<8x128xi32>
    %139 = arith.cmpi eq, %135, %138 : vector<8x128xi32>
    %140 = arith.extui %139 : vector<8x128xi1> to vector<8x128xi32>
    %141 = arith.sitofp %140 : vector<8x128xi32> to vector<8x128xf32>
    %c1_i32_37 = arith.constant 1 : i32
    %142 = vector.broadcast %c1_i32_37 : i32 to vector<8x128xi32>
    %143 = arith.addi %136, %142 : vector<8x128xi32>
    %c8_i32_38 = arith.constant 8 : i32
    %144 = vector.broadcast %c8_i32_38 : i32 to vector<8x128xi32>
    %145 = arith.addi %143, %144 : vector<8x128xi32>
    %146 = arith.cmpi eq, %135, %145 : vector<8x128xi32>
    %147 = arith.extui %146 : vector<8x128xi1> to vector<8x128xi32>
    %148 = arith.sitofp %147 : vector<8x128xi32> to vector<8x128xf32>
    %149 = tpu.iota {dimensions = array<i32: 1>} : vector<1x128xi32>
    %c0_i32 = arith.constant 0 : i32
    %150 = vector.broadcast %c0_i32 : i32 to vector<1x128xi32>
    %151 = arith.cmpi eq, %149, %150 : vector<1x128xi32>
    %152 = arith.extui %151 : vector<1x128xi1> to vector<1x128xi32>
    %153 = arith.sitofp %152 : vector<1x128xi32> to vector<1x128xf32>
    %154 = vector.broadcast %58 : vector<1x1xf32> to vector<1x128xf32>
    %155 = arith.mulf %154, %153 : vector<1x128xf32>
    %cst_39 = arith.constant dense<0.000000e+00> : vector<1x128xf32>
    %156 = tpu.matmul %81, %141, %cst_39 {dimension_numbers = #tpu.dot_dimension_numbers<[1], [0], [0], [1], [0, 0, 1, 1], [], []>} : vector<1x8xf32>, vector<8x128xf32>, vector<1x128xf32> -> vector<1x128xf32>
    %157 = arith.addf %155, %156 : vector<1x128xf32>
    %cst_40 = arith.constant dense<0.000000e+00> : vector<1x128xf32>
    %158 = tpu.matmul %98, %148, %cst_40 {dimension_numbers = #tpu.dot_dimension_numbers<[1], [0], [0], [1], [0, 0, 1, 1], [], []>} : vector<1x8xf32>, vector<8x128xf32>, vector<1x128xf32> -> vector<1x128xf32>
    %159 = arith.addf %157, %158 : vector<1x128xf32>
    %c0_41 = arith.constant 0 : index
    %c0_42 = arith.constant 0 : index
    %c0_43 = arith.constant 0 : index
    %160 = vector.load %arg5[%c0_41, %c0_42, %c0_43] : memref<1x1x128xf32, #tpu.memory_space<vmem>>, vector<1x1x128xf32>
    %161 = vector.shape_cast %160 : vector<1x1x128xf32> to vector<1x128xf32>
    %162 = vector.shape_cast %159 : vector<1x128xf32> to vector<1x1x128xf32>
    tpu.vector_store %arg5[%c0_41, %c0_42, %c0_43], %162 {strides = array<i32>} : memref<1x1x128xf32, #tpu.memory_space<vmem>>, vector<1x1x128xf32>,
    return
  }
  func.func @transform_0(%arg0: i32) -> (i32, i32, i32) {
    %c0_i32 = arith.constant 0 : i32
    %c0_i32_0 = arith.constant 0 : i32
    %c0_i32_1 = arith.constant 0 : i32
    return %arg0, %c0_i32, %c0_i32_0 : i32, i32, i32
  }
  func.func @transform_1(%arg0: i32) -> (i32, i32) {
    %c0_i32 = arith.constant 0 : i32
    %c0_i32_0 = arith.constant 0 : i32
    %c0_i32_1 = arith.constant 0 : i32
    return %c0_i32, %c0_i32_0 : i32, i32
  }
  func.func @transform_2(%arg0: i32) -> (i32, i32) {
    %c0_i32 = arith.constant 0 : i32
    %c0_i32_0 = arith.constant 0 : i32
    %c0_i32_1 = arith.constant 0 : i32
    return %c0_i32, %c0_i32_0 : i32, i32
  }
  func.func @transform_3(%arg0: i32) -> (i32, i32, i32, i32) {
    %c0_i32 = arith.constant 0 : i32
    %c0_i32_0 = arith.constant 0 : i32
    %c0_i32_1 = arith.constant 0 : i32
    %c0_i32_2 = arith.constant 0 : i32
    return %arg0, %c0_i32, %c0_i32_0, %c0_i32_1 : i32, i32, i32, i32
  }
  func.func @transform_4(%arg0: i32) -> (i32, i32, i32) {
    %c0_i32 = arith.constant 0 : i32
    %c0_i32_0 = arith.constant 0 : i32
    %c0_i32_1 = arith.constant 0 : i32
    return %arg0, %c0_i32, %c0_i32_0 : i32, i32, i32
  }
}

</mosaic_0001>

<llo_original>
// kernel: tpu_custom_call.1
$region0: #{tpu_custom_call.1}
  #allocation0 [shape = 'u32[]', space=smem, size = 0x4, offset = 0x4, fixed_abs, tag = 'smem constant byte address 0x4 - core index']
  #allocation1 [shape = 'u32[144,128]{1,0:T(1,128)}', space=vmem, size = 0x12000, scoped, tag = 'internal scratch']
  %s0 = inlined_call_operand.vmem [shape: f32[2,128,64], index: 0, kind: input, shape index: {}]
  %s1 = inlined_call_operand.vmem [shape: bf16[128,128], index: 1, kind: input, shape index: {}]
  %s2 = inlined_call_operand.vmem [shape: f32[64,8], index: 2, kind: input, shape index: {}]
  %s3 = inlined_call_operand.hbm [shape: f32[2,8,24,128], index: 3, kind: output, shape index: {0}]
  %s4 = inlined_call_operand.hbm [shape: f32[2,1,128], index: 4, kind: output, shape index: {1}]
  %5 = xla_tuple %s3, %s4
  %s6 = sld [smem:[#allocation0]]
  $region53: #{tpu_custom_call.1} parent=0
    _
  %s8 = ssub.s32 1, %s6
  %s9 = scalar_select 0, %s8, %s6
  $region1: #{tpu_custom_call.1} parent=0
    #allocation2 [shape = 'u8[196608]{0}', space=vmem, size = 0x30000, scoped, tag = 'output window, operand 0']
    #allocation3 [shape = 's32[2]{0}', space=sflag, size = 0x8, scoped, tag = 'scoped memory for tpu_custom_call.1']
    #allocation4 [shape = 'u8[1024]{0}', space=vmem, size = 0x400, scoped, tag = 'output window, operand 1']
    #allocation5 [shape = 's32[2]{0}', space=sflag, size = 0x8, scoped, tag = 'scoped memory for tpu_custom_call.1']
    %10 = vsyncpa [#allocation3], 0
    %s11 = scalar_lea.sflag [#allocation3], 1
    %12 = vsyncpa %s11, 0
    %13 = vsyncpa [#allocation5], 0
    %s14 = scalar_lea.sflag [#allocation5], 1
    %15 = vsyncpa %s14, 0
    loop: start=0, step=1, limit=4
    $region2: #{tpu_custom_call.1} parent=1 // loop_pre_header
      _
    $region3: #{tpu_custom_call.1} parent=1 // loop_header
      %s17 = sphi 0, %s21
      %p18 = scmp.ge.s32.totalorder %s17, 4
      %s27 = sphi 0, %s29
      %s30 = sphi 0, %s27
      %s31 = sphi 0, %s30
      %s47 = sphi 0, %s31
      %s51 = sphi 0, %s51
      %s53 = sphi 0, %s51
      %s54 = sphi 0, %s53
      %s68 = sphi 0, %s54
      %s72 = sphi 0, %s72
      %s74 = sphi 0, %s72
      %s75 = sphi 0, %s74
      %s89 = sphi 0, %s75
      %s95 = sphi 0, %s97
      %s98 = sphi 0, %s95
      %s99 = sphi 0, %s98
      %s115 = sphi 0, %s99
      %s121 = sphi 0, %s123
      %s124 = sphi 0, %s121
      %s125 = sphi 0, %s124
      %s141 = sphi 0, %s125
    $region4: #{tpu_custom_call.1} parent=1 // loop_header_branch
      %20 = sbr.rel (%p18) target = $region8
    $region5: #{tpu_custom_call.1} parent=1 // loop_body
      %s22 = ssub.s32 %s17, 1
      %s23 = ssub.s32 %s17, 2
      %s24 = sadd.s32 %s17, 1
      %s25 = ssub.s32 %s17, %s24
      %p26 = scmp.eq.s32.totalorder %s25, 0
      %s28 = sadd.s32 %s27, 1
      %s29 = scalar_select %p26, %s27, %s28
      %p32 = pneg %p26
      %p33 = scmp.eq.s32.totalorder %s17, 1
      %p34 = por %p32, %p33
      %p35 = scmp.ne.s32.totalorder %s27, %s30
      %p36 = scmp.eq.s32.totalorder %s17, 0
      %p37 = por %p35, %p36
      %p38 = scmp.ne.s32.totalorder %s27, %s30
      %p39 = scmp.eq.s32.totalorder %s22, 1
      %p40 = por %p38, %p39
      %p41 = scmp.ne.s32.totalorder %s30, %s31
      %p42 = scmp.eq.s32.totalorder %s22, 0
      %p43 = por %p41, %p42
      %p44 = scmp.ne.s32.totalorder %s30, %s31
      %p45 = scmp.eq.s32.totalorder %s23, 1
      %p46 = por %p44, %p45
      %p48 = scmp.ne.s32.totalorder %s31, %s47
      %p49 = scmp.eq.s32.totalorder %s23, 0
      %p50 = por %p48, %p49
      %s52 = sadd.s32 %s51, 1
      %p55 = scmp.eq.s32.totalorder %s17, 1
      %p56 = scmp.ne.s32.totalorder %s51, %s53
      %p57 = scmp.eq.s32.totalorder %s17, 0
      %p58 = por %p56, %p57
      %p59 = scmp.ne.s32.totalorder %s51, %s53
      %p60 = scmp.eq.s32.totalorder %s22, 1
      %p61 = por %p59, %p60
      %p62 = scmp.ne.s32.totalorder %s53, %s54
      %p63 = scmp.eq.s32.totalorder %s22, 0
      %p64 = por %p62, %p63
      %p65 = scmp.ne.s32.totalorder %s53, %s54
      %p66 = scmp.eq.s32.totalorder %s23, 1
      %p67 = por %p65, %p66
      %p69 = scmp.ne.s32.totalorder %s54, %s68
      %p70 = scmp.eq.s32.totalorder %s23, 0
      %p71 = por %p69, %p70
      %s73 = sadd.s32 %s72, 1
      %p76 = scmp.eq.s32.totalorder %s17, 1
      %p77 = scmp.ne.s32.totalorder %s72, %s74
      %p78 = scmp.eq.s32.totalorder %s17, 0
      %p79 = por %p77, %p78
      %p80 = scmp.ne.s32.totalorder %s72, %s74
      %p81 = scmp.eq.s32.totalorder %s22, 1
      %p82 = por %p80, %p81
      %p83 = scmp.ne.s32.totalorder %s74, %s75
      %p84 = scmp.eq.s32.totalorder %s22, 0
      %p85 = por %p83, %p84
      %p86 = scmp.ne.s32.totalorder %s74, %s75
      %p87 = scmp.eq.s32.totalorder %s23, 1
      %p88 = por %p86, %p87
      %p90 = scmp.ne.s32.totalorder %s75, %s89
      %p91 = scmp.eq.s32.totalorder %s23, 0
      %p92 = por %p90, %p91
      %s93 = ssub.s32 %s17, %s24
      %p94 = scmp.eq.s32.totalorder %s93, 0
      %s96 = sadd.s32 %s95, 1
      %s97 = scalar_select %p94, %s95, %s96
      %p100 = pneg %p94
      %p101 = scmp.eq.s32.totalorder %s17, 1
      %p102 = por %p100, %p101
      %p103 = scmp.ne.s32.totalorder %s95, %s98
      %p104 = scmp.eq.s32.totalorder %s17, 0
      %p105 = por %p103, %p104
      %p106 = scmp.ne.s32.totalorder %s95, %s98
      %p107 = scmp.eq.s32.totalorder %s22, 1
      %p108 = por %p106, %p107
      %p109 = scmp.ne.s32.totalorder %s98, %s99
      %p110 = scmp.eq.s32.totalorder %s22, 0
      %p111 = por %p109, %p110
      %p112 = scmp.ne.s32.totalorder %s98, %s99
      %p113 = scmp.eq.s32.totalorder %s23, 1
      %p114 = por %p112, %p113
      %p116 = scmp.ne.s32.totalorder %s99, %s115
      %p117 = scmp.eq.s32.totalorder %s23, 0
      %p118 = por %p116, %p117
      %s119 = ssub.s32 %s17, %s24
      %p120 = scmp.eq.s32.totalorder %s119, 0
      %s122 = sadd.s32 %s121, 1
      %s123 = scalar_select %p120, %s121, %s122
      %p126 = pneg %p120
      %p127 = scmp.eq.s32.totalorder %s17, 1
      %p128 = por %p126, %p127
      %p129 = scmp.ne.s32.totalorder %s121, %s124
      %p130 = scmp.eq.s32.totalorder %s17, 0
      %p131 = por %p129, %p130
      %p132 = scmp.ne.s32.totalorder %s121, %s124
      %p133 = scmp.eq.s32.totalorder %s22, 1
      %p134 = por %p132, %p133
      %p135 = scmp.ne.s32.totalorder %s124, %s125
      %p136 = scmp.eq.s32.totalorder %s22, 0
      %p137 = por %p135, %p136
      %p138 = scmp.ne.s32.totalorder %s124, %s125
      %p139 = scmp.eq.s32.totalorder %s23, 1
      %p140 = por %p138, %p139
      %p142 = scmp.ne.s32.totalorder %s125, %s141
      %p143 = scmp.eq.s32.totalorder %s23, 0
      %p144 = por %p142, %p143
      %p145 = scmp.le.s32.totalorder 1, %s17
      %p146 = scmp.lt.s32.totalorder %s17, 3
      %p147 = pnand %p145, %p146
      %p148 = pneg %p147
      // Predicated region
      $region9: #{tpu_custom_call.1} parent=5 // pred_check
        _
      $region10: #{tpu_custom_call.1} parent=5 // pred_check_branch
        %150 = sbr.rel (%p147) target = $region12
      $region11: #{tpu_custom_call.1} parent=5 // pred_region
        %s151 = ssub.s32 %s17, 1
        // Predicated region
        $region13: #{tpu_custom_call.1} parent=11 // pred_check
          %p152 = pneg %p64
        $region14: #{tpu_custom_call.1} parent=11 // pred_check_branch
          %154 = sbr.rel (%p152) target = $region16
        $region15: #{tpu_custom_call.1} parent=11 // pred_region
          _
        $region16: #{tpu_custom_call.1} parent=11 // pred_fallthru
          _
        // Predicated region
        $region17: #{tpu_custom_call.1} parent=11 // pred_check
          %p155 = pneg %p85
        $region18: #{tpu_custom_call.1} parent=11 // pred_check_branch
          %157 = sbr.rel (%p155) target = $region20
        $region19: #{tpu_custom_call.1} parent=11 // pred_region
          _
        $region20: #{tpu_custom_call.1} parent=11 // pred_fallthru
          _
      $region12: #{tpu_custom_call.1} parent=5 // pred_fallthru
        _
      %p158 = scmp.lt.s32.totalorder %s17, 2
      // Predicated region
      $region21: #{tpu_custom_call.1} parent=5 // pred_check
        %p159 = pneg %p158
      $region22: #{tpu_custom_call.1} parent=5 // pred_check_branch
        %161 = sbr.rel (%p159) target = $region24
      $region23: #{tpu_custom_call.1} parent=5 // pred_region
        // Predicated region
        $region25: #{tpu_custom_call.1} parent=23 // pred_check
          %p162 = pneg %p37
        $region26: #{tpu_custom_call.1} parent=23 // pred_check_branch
          %164 = sbr.rel (%p162) target = $region28
        $region27: #{tpu_custom_call.1} parent=23 // pred_region
          %p165 = scmp.lt.s32.totalorder %s17, 1
          %s166 = scalar_select %p165, %s17, 1
          %s167 = smul.addr %s166, 16
          %s168 = smul.addr %s167, 8
          %s169 = scalar_lea.vmem %s0, %s168
        $region28: #{tpu_custom_call.1} parent=23 // pred_fallthru
          _
      $region24: #{tpu_custom_call.1} parent=5 // pred_fallthru
        _
      %p170 = scmp.le.s32.totalorder 1, %s17
      %p171 = scmp.lt.s32.totalorder %s17, 3
      %p172 = pnand %p170, %p171
      %p173 = pneg %p172
      // Predicated region
      $region29: #{tpu_custom_call.1} parent=5 // pred_check
        _
      $region30: #{tpu_custom_call.1} parent=5 // pred_check_branch
        %175 = sbr.rel (%p172) target = $region32
      $region31: #{tpu_custom_call.1} parent=5 // pred_region
        %s176 = ssub.s32 %s17, 1
        %p177 = scmp.lt.s32.totalorder %s22, 1
        %s178 = scalar_select %p177, %s22, 1
        %s179 = smul.addr %s178, 16
        %s180 = smul.addr %s179, 8
        %s181 = scalar_lea.vmem %s0, %s180
        %p182 = pneg %p43
        %p183 = pneg %p40
        %p184 = pneg %p64
        %p185 = pneg %p61
        %p186 = pneg %p85
        %p187 = pneg %p82
        %p188 = pneg %p111
        %p189 = pneg %p108
        %s190 = sand.u32 %s98, 1
        %s191 = scalar_lea.sflag [#allocation3], %s190
        %s192 = sand.u32 %s98, 1
        %s193 = smul.addr %s192, 192
        %s194 = scalar_lea.vmem [#allocation2], %s193
        %p195 = pneg %p137
        %p196 = pneg %p134
        %s197 = sand.u32 %s124, 1
        %s198 = scalar_lea.sflag [#allocation5], %s197
        %s199 = sand.u32 %s124, 1
        %s200 = scalar_lea.vmem [#allocation4], %s199
        %p201 = scmp.lt.s32.totalorder %s22, 1
        %s202 = scalar_select %p201, %s22, 1
        %s203 = smul.addr %s202, 16
        %s204 = smul.addr %s203, 8
        %s205 = scalar_lea.vmem %s0, %s204
        %v207 = vld [vmem:[%s205] sm:$0xff]
        %v208 = vld [vmem:[%s205 + $0x8] sm:$0xff]
        %v209 = vld [vmem:[%s205 + $0x10] sm:$0xff]
        %v210 = vld [vmem:[%s205 + $0x18] sm:$0xff]
        %v211 = vld [vmem:[%s205 + $0x20] sm:$0xff]
        %v212 = vld [vmem:[%s205 + $0x28] sm:$0xff]
        %v213 = vld [vmem:[%s205 + $0x30] sm:$0xff]
        %v214 = vld [vmem:[%s205 + $0x38] sm:$0xff]
        %v215 = vld [vmem:[%s205 + $0x40] sm:$0xff]
        %v216 = vld [vmem:[%s205 + $0x48] sm:$0xff]
        %v217 = vld [vmem:[%s205 + $0x50] sm:$0xff]
        %v218 = vld [vmem:[%s205 + $0x58] sm:$0xff]
        %v219 = vld [vmem:[%s205 + $0x60] sm:$0xff]
        %v220 = vld [vmem:[%s205 + $0x68] sm:$0xff]
        %v221 = vld [vmem:[%s205 + $0x70] sm:$0xff]
        %v222 = vld [vmem:[%s205 + $0x78] sm:$0xff]
        %v223 = vld [vmem:[%s2] sm:$0xff]
        %v224 = vld [vmem:[%s2 + $0x8] sm:$0xff]
        %v225 = vld [vmem:[%s2 + $0x10] sm:$0xff]
        %v226 = vld [vmem:[%s2 + $0x18] sm:$0xff]
        %v227 = vld [vmem:[%s2 + $0x20] sm:$0xff]
        %v228 = vld [vmem:[%s2 + $0x28] sm:$0xff]
        %v229 = vld [vmem:[%s2 + $0x30] sm:$0xff]
        %v230 = vld [vmem:[%s2 + $0x38] sm:$0xff]
        %vm231 = vcmask 523264
        %v233 = vsel %vm231, %v207, 0
        %v236 = vsel %vm231, %v208, 0
        %v239 = vsel %vm231, %v209, 0
        %v242 = vsel %vm231, %v210, 0
        %v245 = vsel %vm231, %v211, 0
        %v248 = vsel %vm231, %v212, 0
        %v251 = vsel %vm231, %v213, 0
        %v254 = vsel %vm231, %v214, 0
        %v257 = vsel %vm231, %v215, 0
        %v260 = vsel %vm231, %v216, 0
        %v263 = vsel %vm231, %v217, 0
        %v266 = vsel %vm231, %v218, 0
        %v269 = vsel %vm231, %v219, 0
        %v272 = vsel %vm231, %v220, 0
        %v275 = vsel %vm231, %v221, 0
        %v278 = vsel %vm231, %v222, 0
        %280 = vmatprep.subr.mxu0 0.0
        %281 = vmatpush1.msra.mxu0 %v223
        %282 = vmatprep.subr.mxu0 0.0
        %283 = vmatpush1.msra.mxu0 %v224
        %284 = vmatprep.subr.mxu0 0.0
        %285 = vmatpush1.msra.mxu0 %v225
        %286 = vmatprep.subr.mxu0 0.0
        %287 = vmatpush1.msra.mxu0 %v226
        %288 = vmatprep.subr.mxu0 0.0
        %289 = vmatpush1.msra.mxu0 %v227
        %290 = vmatprep.subr.mxu0 0.0
        %291 = vmatpush1.msra.mxu0 %v228
        %292 = vmatprep.subr.mxu0 0.0
        %293 = vmatpush1.msra.mxu0 %v229
        %294 = vmatprep.subr.mxu0 0.0
        %295 = vmatpush1.msra.mxu0 %v230
        %296 = vmatprep.subr.mxu0 0.0
        %297 = vmatpush1.msra.mxu0 0.0
        %298 = vmatprep.subr.mxu0 0.0
        %299 = vmatpush1.msra.mxu0 0.0
        %300 = vmatprep.subr.mxu0 0.0
        %301 = vmatpush1.msra.mxu0 0.0
        %302 = vmatprep.subr.mxu0 0.0
        %303 = vmatpush1.msra.mxu0 0.0
        %304 = vmatprep.subr.mxu0 0.0
        %305 = vmatpush1.msra.mxu0 0.0
        %306 = vmatprep.subr.mxu0 0.0
        %307 = vmatpush1.msra.mxu0 0.0
        %308 = vmatprep.subr.mxu0 0.0
        %309 = vmatpush1.msra.mxu0 0.0
        %310 = vmatprep.subr.mxu0 0.0
        %311 = vmatpush1.msra.mxu0 0.0
        %312 = vmatprep.subr.mxu0 0.0
        %313 = vmatpush1.msra.mxu0 0.0
        %314 = vmatprep.subr.mxu0 0.0
        %315 = vmatpush1.msra.mxu0 0.0
        %316 = vmatprep.subr.mxu0 0.0
        %317 = vmatpush1.msra.mxu0 0.0
        %318 = vmatprep.subr.mxu0 0.0
        %319 = vmatpush1.msra.mxu0 0.0
        %320 = vmatprep.subr.mxu0 0.0
        %321 = vmatpush1.msra.mxu0 0.0
        %322 = vmatprep.subr.mxu0 0.0
        %323 = vmatpush1.msra.mxu0 0.0
        %324 = vmatprep.subr.mxu0 0.0
        %325 = vmatpush1.msra.mxu0 0.0
        %326 = vmatprep.subr.mxu0 0.0
        %327 = vmatpush1.msra.mxu0 0.0
        %328 = vmatprep.subr.mxu0 0.0
        %329 = vmatpush1.msra.mxu0 0.0
        %330 = vmatprep.subr.mxu0 0.0
        %331 = vmatpush1.msra.mxu0 0.0
        %332 = vmatprep.subr.mxu0 0.0
        %333 = vmatpush1.msra.mxu0 0.0
        %334 = vmatprep.subr.mxu0 0.0
        %335 = vmatpush1.msra.mxu0 0.0
        %336 = vmatprep.subr.mxu0 0.0
        %337 = vmatpush1.msra.mxu0 0.0
        %338 = vmatprep.subr.mxu0 0.0
        %339 = vmatpush1.msra.mxu0 0.0
        %340 = vmatprep.subr.mxu0 0.0
        %341 = vmatpush1.msra.mxu0 0.0
        %342 = vmatprep.subr.mxu0 0.0
        %343 = vmatpush1.msra.mxu0 0.0
        %344 = vmatprep.mubr.f32.mxu0 0.0
        %345 = vmatmul.mubr.f32.gmra.mrb[0].mxu0 %v233
        %v346 = vpop.f32.mrb[0].mxu0
        %v347 = vadd.f32 0.0, %v346
        %v348 = vpop.f32.mrb[0].mxu0
        %349 = vmatprep.mubr.f32.mxu0 0.0
        %350 = vmatmul.mubr.f32.gmra.mrb[0].mxu0 %v236
        %v351 = vpop.f32.mrb[0].mxu0
        %v352 = vadd.f32 0.0, %v351
        %v353 = vpop.f32.mrb[0].mxu0
        %354 = vmatprep.mubr.f32.mxu0 0.0
        %355 = vmatmul.mubr.f32.gmra.mrb[0].mxu0 %v239
        %v356 = vpop.f32.mrb[0].mxu0
        %v357 = vadd.f32 0.0, %v356
        %v358 = vpop.f32.mrb[0].mxu0
        %359 = vmatprep.mubr.f32.mxu0 0.0
        %360 = vmatmul.mubr.f32.gmra.mrb[0].mxu0 %v242
        %v361 = vpop.f32.mrb[0].mxu0
        %v362 = vadd.f32 0.0, %v361
        %v363 = vpop.f32.mrb[0].mxu0
        %364 = vmatprep.mubr.f32.mxu0 0.0
        %365 = vmatmul.mubr.f32.gmra.mrb[0].mxu0 %v245
        %v366 = vpop.f32.mrb[0].mxu0
        %v367 = vadd.f32 0.0, %v366
        %v368 = vpop.f32.mrb[0].mxu0
        %369 = vmatprep.mubr.f32.mxu0 0.0
        %370 = vmatmul.mubr.f32.gmra.mrb[0].mxu0 %v248
        %v371 = vpop.f32.mrb[0].mxu0
        %v372 = vadd.f32 0.0, %v371
        %v373 = vpop.f32.mrb[0].mxu0
        %374 = vmatprep.mubr.f32.mxu0 0.0
        %375 = vmatmul.mubr.f32.gmra.mrb[0].mxu0 %v251
        %v376 = vpop.f32.mrb[0].mxu0
        %v377 = vadd.f32 0.0, %v376
        %v378 = vpop.f32.mrb[0].mxu0
        %379 = vmatprep.mubr.f32.mxu0 0.0
        %380 = vmatmul.mubr.f32.gmra.mrb[0].mxu0 %v254
        %v381 = vpop.f32.mrb[0].mxu0
        %v382 = vadd.f32 0.0, %v381
        %v383 = vpop.f32.mrb[0].mxu0
        %384 = vmatprep.mubr.f32.mxu0 0.0
        %385 = vmatmul.mubr.f32.gmra.mrb[0].mxu0 %v257
        %v386 = vpop.f32.mrb[0].mxu0
        %v387 = vadd.f32 0.0, %v386
        %v388 = vpop.f32.mrb[0].mxu0
        %389 = vmatprep.mubr.f32.mxu0 0.0
        %390 = vmatmul.mubr.f32.gmra.mrb[0].mxu0 %v260
        %v391 = vpop.f32.mrb[0].mxu0
        %v392 = vadd.f32 0.0, %v391
        %v393 = vpop.f32.mrb[0].mxu0
        %394 = vmatprep.mubr.f32.mxu0 0.0
        %395 = vmatmul.mubr.f32.gmra.mrb[0].mxu0 %v263
        %v396 = vpop.f32.mrb[0].mxu0
        %v397 = vadd.f32 0.0, %v396
        %v398 = vpop.f32.mrb[0].mxu0
        %399 = vmatprep.mubr.f32.mxu0 0.0
        %400 = vmatmul.mubr.f32.gmra.mrb[0].mxu0 %v266
        %v401 = vpop.f32.mrb[0].mxu0
        %v402 = vadd.f32 0.0, %v401
        %v403 = vpop.f32.mrb[0].mxu0
        %404 = vmatprep.mubr.f32.mxu0 0.0
        %405 = vmatmul.mubr.f32.gmra.mrb[0].mxu0 %v269
        %v406 = vpop.f32.mrb[0].mxu0
        %v407 = vadd.f32 0.0, %v406
        %v408 = vpop.f32.mrb[0].mxu0
        %409 = vmatprep.mubr.f32.mxu0 0.0
        %410 = vmatmul.mubr.f32.gmra.mrb[0].mxu0 %v272
        %v411 = vpop.f32.mrb[0].mxu0
        %v412 = vadd.f32 0.0, %v411
        %v413 = vpop.f32.mrb[0].mxu0
        %414 = vmatprep.mubr.f32.mxu0 0.0
        %415 = vmatmul.mubr.f32.gmra.mrb[0].mxu0 %v275
        %v416 = vpop.f32.mrb[0].mxu0
        %v417 = vadd.f32 0.0, %v416
        %v418 = vpop.f32.mrb[0].mxu0
        %419 = vmatprep.mubr.f32.mxu0 0.0
        %420 = vmatmul.mubr.f32.gmra.mrb[0].mxu0 %v278
        %v421 = vpop.f32.mrb[0].mxu0
        %v422 = vadd.f32 0.0, %v421
        %v423 = vpop.f32.mrb[0].mxu0
        %424 = vdwg.mxu0
        %vm425 = vcmask 64512
        %v426 = vsel %vm425, %v347, -inf
        %427 = vmax.xlane.f32.xlu0 %v426
        %v428 = vpop.xlane.xlu0 %427
        %v429 = vsel %vm425, %v352, -inf
        %430 = vmax.xlane.f32.xlu0 %v429
        %v431 = vpop.xlane.xlu0 %430
        %v432 = vsel %vm425, %v357, -inf
        %433 = vmax.xlane.f32.xlu0 %v432
        %v434 = vpop.xlane.xlu0 %433
        %v435 = vsel %vm425, %v362, -inf
        %436 = vmax.xlane.f32.xlu0 %v435
        %v437 = vpop.xlane.xlu0 %436
        %v438 = vsel %vm425, %v367, -inf
        %439 = vmax.xlane.f32.xlu0 %v438
        %v440 = vpop.xlane.xlu0 %439
        %v441 = vsel %vm425, %v372, -inf
        %442 = vmax.xlane.f32.xlu0 %v441
        %v443 = vpop.xlane.xlu0 %442
        %v444 = vsel %vm425, %v377, -inf
        %445 = vmax.xlane.f32.xlu0 %v444
        %v446 = vpop.xlane.xlu0 %445
        %v447 = vsel %vm425, %v382, -inf
        %448 = vmax.xlane.f32.xlu0 %v447
        %v449 = vpop.xlane.xlu0 %448
        %v450 = vsel %vm425, %v387, -inf
        %451 = vmax.xlane.f32.xlu0 %v450
        %v452 = vpop.xlane.xlu0 %451
        %v453 = vsel %vm425, %v392, -inf
        %454 = vmax.xlane.f32.xlu0 %v453
        %v455 = vpop.xlane.xlu0 %454
        %v456 = vsel %vm425, %v397, -inf
        %457 = vmax.xlane.f32.xlu0 %v456
        %v458 = vpop.xlane.xlu0 %457
        %v459 = vsel %vm425, %v402, -inf
        %460 = vmax.xlane.f32.xlu0 %v459
        %v461 = vpop.xlane.xlu0 %460
        %v462 = vsel %vm425, %v407, -inf
        %463 = vmax.xlane.f32.xlu0 %v462
        %v464 = vpop.xlane.xlu0 %463
        %v465 = vsel %vm425, %v412, -inf
        %466 = vmax.xlane.f32.xlu0 %v465
        %v467 = vpop.xlane.xlu0 %466
        %v468 = vsel %vm425, %v417, -inf
        %469 = vmax.xlane.f32.xlu0 %v468
        %v470 = vpop.xlane.xlu0 %469
        %v471 = vsel %vm425, %v422, -inf
        %472 = vmax.xlane.f32.xlu0 %v471
        %v473 = vpop.xlane.xlu0 %472
        %v474 = vsub.f32 %v347, %v428
        %v475 = vsub.f32 %v352, %v431
        %v476 = vsub.f32 %v357, %v434
        %v477 = vsub.f32 %v362, %v437
        %v478 = vsub.f32 %v367, %v440
        %v479 = vsub.f32 %v372, %v443
        %v480 = vsub.f32 %v377, %v446
        %v481 = vsub.f32 %v382, %v449
        %v482 = vsub.f32 %v387, %v452
        %v483 = vsub.f32 %v392, %v455
        %v484 = vsub.f32 %v397, %v458
        %v485 = vsub.f32 %v402, %v461
        %v486 = vsub.f32 %v407, %v464
        %v487 = vsub.f32 %v412, %v467
        %v488 = vsub.f32 %v417, %v470
        %v489 = vsub.f32 %v422, %v473
        %v490 = vmul.f32 %v474, 1.442695
        %v491 = vpow.pop %v490
        %v492 = vmul.f32 %v475, 1.442695
        %v493 = vpow.pop %v492
        %v494 = vmul.f32 %v476, 1.442695
        %v495 = vpow.pop %v494
        %v496 = vmul.f32 %v477, 1.442695
        %v497 = vpow.pop %v496
        %v498 = vmul.f32 %v478, 1.442695
        %v499 = vpow.pop %v498
        %v500 = vmul.f32 %v479, 1.442695
        %v501 = vpow.pop %v500
        %v502 = vmul.f32 %v480, 1.442695
        %v503 = vpow.pop %v502
        %v504 = vmul.f32 %v481, 1.442695
        %v505 = vpow.pop %v504
        %v506 = vmul.f32 %v482, 1.442695
        %v507 = vpow.pop %v506
        %v508 = vmul.f32 %v483, 1.442695
        %v509 = vpow.pop %v508
        %v510 = vmul.f32 %v484, 1.442695
        %v511 = vpow.pop %v510
        %v512 = vmul.f32 %v485, 1.442695
        %v513 = vpow.pop %v512
        %v514 = vmul.f32 %v486, 1.442695
        %v515 = vpow.pop %v514
        %v516 = vmul.f32 %v487, 1.442695
        %v517 = vpow.pop %v516
        %v518 = vmul.f32 %v488, 1.442695
        %v519 = vpow.pop %v518
        %v520 = vmul.f32 %v489, 1.442695
        %v521 = vpow.pop %v520
        %v522 = vsel %vm425, %v491, 0.0
        %523 = vadd.xlane.f32.xlu0 %v522
        %v524 = vpop.xlane.xlu0 %523
        %v525 = vsel %vm425, %v493, 0.0
        %526 = vadd.xlane.f32.xlu0 %v525
        %v527 = vpop.xlane.xlu0 %526
        %v528 = vsel %vm425, %v495, 0.0
        %529 = vadd.xlane.f32.xlu0 %v528
        %v530 = vpop.xlane.xlu0 %529
        %v531 = vsel %vm425, %v497, 0.0
        %532 = vadd.xlane.f32.xlu0 %v531
        %v533 = vpop.xlane.xlu0 %532
        %v534 = vsel %vm425, %v499, 0.0
        %535 = vadd.xlane.f32.xlu0 %v534
        %v536 = vpop.xlane.xlu0 %535
        %v537 = vsel %vm425, %v501, 0.0
        %538 = vadd.xlane.f32.xlu0 %v537
        %v539 = vpop.xlane.xlu0 %538
        %v540 = vsel %vm425, %v503, 0.0
        %541 = vadd.xlane.f32.xlu0 %v540
        %v542 = vpop.xlane.xlu0 %541
        %v543 = vsel %vm425, %v505, 0.0
        %544 = vadd.xlane.f32.xlu0 %v543
        %v545 = vpop.xlane.xlu0 %544
        %v546 = vsel %vm425, %v507, 0.0
        %547 = vadd.xlane.f32.xlu0 %v546
        %v548 = vpop.xlane.xlu0 %547
        %v549 = vsel %vm425, %v509, 0.0
        %550 = vadd.xlane.f32.xlu0 %v549
        %v551 = vpop.xlane.xlu0 %550
        %v552 = vsel %vm425, %v511, 0.0
        %553 = vadd.xlane.f32.xlu0 %v552
        %v554 = vpop.xlane.xlu0 %553
        %v555 = vsel %vm425, %v513, 0.0
        %556 = vadd.xlane.f32.xlu0 %v555
        %v557 = vpop.xlane.xlu0 %556
        %v558 = vsel %vm425, %v515, 0.0
        %559 = vadd.xlane.f32.xlu0 %v558
        %v560 = vpop.xlane.xlu0 %559
        %v561 = vsel %vm425, %v517, 0.0
        %562 = vadd.xlane.f32.xlu0 %v561
        %v563 = vpop.xlane.xlu0 %562
        %v564 = vsel %vm425, %v519, 0.0
        %565 = vadd.xlane.f32.xlu0 %v564
        %v566 = vpop.xlane.xlu0 %565
        %v567 = vsel %vm425, %v521, 0.0
        %568 = vadd.xlane.f32.xlu0 %v567
        %v569 = vpop.xlane.xlu0 %568
        %v570 = vrcp.pop %v524
        %v571 = vmul.f32 %v491, %v570
        %v572 = vrcp.pop %v527
        %v573 = vmul.f32 %v493, %v572
        %v574 = vrcp.pop %v530
        %v575 = vmul.f32 %v495, %v574
        %v576 = vrcp.pop %v533
        %v577 = vmul.f32 %v497, %v576
        %v578 = vrcp.pop %v536
        %v579 = vmul.f32 %v499, %v578
        %v580 = vrcp.pop %v539
        %v581 = vmul.f32 %v501, %v580
        %v582 = vrcp.pop %v542
        %v583 = vmul.f32 %v503, %v582
        %v584 = vrcp.pop %v545
        %v585 = vmul.f32 %v505, %v584
        %v586 = vrcp.pop %v548
        %v587 = vmul.f32 %v507, %v586
        %v588 = vrcp.pop %v551
        %v589 = vmul.f32 %v509, %v588
        %v590 = vrcp.pop %v554
        %v591 = vmul.f32 %v511, %v590
        %v592 = vrcp.pop %v557
        %v593 = vmul.f32 %v513, %v592
        %v594 = vrcp.pop %v560
        %v595 = vmul.f32 %v515, %v594
        %v596 = vrcp.pop %v563
        %v597 = vmul.f32 %v517, %v596
        %v598 = vrcp.pop %v566
        %v599 = vmul.f32 %v519, %v598
        %v600 = vrcp.pop %v569
        %v601 = vmul.f32 %v521, %v600
        %v602 = vlaneseq
        %v603 = vand.u32 %v602, 127
        %v604 = vsel %vm425, %v571, -inf
        %605 = vmax.xlane.f32.xlu0 %v604
        %v606 = vpop.xlane.xlu0 %605
        %v607 = vsel %vm425, %v573, -inf
        %608 = vmax.xlane.f32.xlu0 %v607
        %v609 = vpop.xlane.xlu0 %608
        %v610 = vsel %vm425, %v575, -inf
        %611 = vmax.xlane.f32.xlu0 %v610
        %v612 = vpop.xlane.xlu0 %611
        %v613 = vsel %vm425, %v577, -inf
        %614 = vmax.xlane.f32.xlu0 %v613
        %v615 = vpop.xlane.xlu0 %614
        %v616 = vsel %vm425, %v579, -inf
        %617 = vmax.xlane.f32.xlu0 %v616
        %v618 = vpop.xlane.xlu0 %617
        %v619 = vsel %vm425, %v581, -inf
        %620 = vmax.xlane.f32.xlu0 %v619
        %v621 = vpop.xlane.xlu0 %620
        %v622 = vsel %vm425, %v583, -inf
        %623 = vmax.xlane.f32.xlu0 %v622
        %v624 = vpop.xlane.xlu0 %623
        %v625 = vsel %vm425, %v585, -inf
        %626 = vmax.xlane.f32.xlu0 %v625
        %v627 = vpop.xlane.xlu0 %626
        %v628 = vsel %vm425, %v587, -inf
        %629 = vmax.xlane.f32.xlu0 %v628
        %v630 = vpop.xlane.xlu0 %629
        %v631 = vsel %vm425, %v589, -inf
        %632 = vmax.xlane.f32.xlu0 %v631
        %v633 = vpop.xlane.xlu0 %632
        %v634 = vsel %vm425, %v591, -inf
        %635 = vmax.xlane.f32.xlu0 %v634
        %v636 = vpop.xlane.xlu0 %635
        %v637 = vsel %vm425, %v593, -inf
        %638 = vmax.xlane.f32.xlu0 %v637
        %v639 = vpop.xlane.xlu0 %638
        %v640 = vsel %vm425, %v595, -inf
        %641 = vmax.xlane.f32.xlu0 %v640
        %v642 = vpop.xlane.xlu0 %641
        %v643 = vsel %vm425, %v597, -inf
        %644 = vmax.xlane.f32.xlu0 %v643
        %v645 = vpop.xlane.xlu0 %644
        %v646 = vsel %vm425, %v599, -inf
        %647 = vmax.xlane.f32.xlu0 %v646
        %v648 = vpop.xlane.xlu0 %647
        %v649 = vsel %vm425, %v601, -inf
        %650 = vmax.xlane.f32.xlu0 %v649
        %v651 = vpop.xlane.xlu0 %650
        %vm652 = vcmp.ge.f32.partialorder %v571, %v606
        %vm653 = vcmp.ge.f32.partialorder %v573, %v609
        %vm654 = vcmp.ge.f32.partialorder %v575, %v612
        %vm655 = vcmp.ge.f32.partialorder %v577, %v615
        %vm656 = vcmp.ge.f32.partialorder %v579, %v618
        %vm657 = vcmp.ge.f32.partialorder %v581, %v621
        %vm658 = vcmp.ge.f32.partialorder %v583, %v624
        %vm659 = vcmp.ge.f32.partialorder %v585, %v627
        %vm660 = vcmp.ge.f32.partialorder %v587, %v630
        %vm661 = vcmp.ge.f32.partialorder %v589, %v633
        %vm662 = vcmp.ge.f32.partialorder %v591, %v636
        %vm663 = vcmp.ge.f32.partialorder %v593, %v639
        %vm664 = vcmp.ge.f32.partialorder %v595, %v642
        %vm665 = vcmp.ge.f32.partialorder %v597, %v645
        %vm666 = vcmp.ge.f32.partialorder %v599, %v648
        %vm667 = vcmp.ge.f32.partialorder %v601, %v651
        %v668 = vsel %vm652, %v603, 8
        %v669 = vsel %vm653, %v603, 8
        %v670 = vsel %vm654, %v603, 8
        %v671 = vsel %vm655, %v603, 8
        %v672 = vsel %vm656, %v603, 8
        %v673 = vsel %vm657, %v603, 8
        %v674 = vsel %vm658, %v603, 8
        %v675 = vsel %vm659, %v603, 8
        %v676 = vsel %vm660, %v603, 8
        %v677 = vsel %vm661, %v603, 8
        %v678 = vsel %vm662, %v603, 8
        %v679 = vsel %vm663, %v603, 8
        %v680 = vsel %vm664, %v603, 8
        %v681 = vsel %vm665, %v603, 8
        %v682 = vsel %vm666, %v603, 8
        %v683 = vsel %vm667, %v603, 8
        %v684 = vsel %vm425, %v668, 2147483647
        %v685 = vand.u32 %v684, 65535
        %v686 = vshra.s32 %v684, 16
        %v687 = vcvt.s32.f32 %v685
        %v688 = vcvt.s32.f32 %v686
        %689 = vmin.xlane.f32.xlu0 %v688
        %v690 = vpop.xlane.xlu0 %689
        %vm691 = vcmp.eq.f32.partialorder %v688, %v690
        %v692 = vsel %vm691, %v687, inf
        %693 = vmin.xlane.f32.xlu0 %v692
        %v694 = vpop.xlane.xlu0 %693
        %v695 = vcvt.f32.s32 %v694
        %v696 = vcvt.f32.s32 %v690
        %v697 = vshll.u32 %v696, 16
        %v698 = vadd.s32 %v697, %v695
        %v699 = vsel %vm425, %v669, 2147483647
        %v700 = vand.u32 %v699, 65535
        %v701 = vshra.s32 %v699, 16
        %v702 = vcvt.s32.f32 %v700
        %v703 = vcvt.s32.f32 %v701
        %704 = vmin.xlane.f32.xlu0 %v703
        %v705 = vpop.xlane.xlu0 %704
        %vm706 = vcmp.eq.f32.partialorder %v703, %v705
        %v707 = vsel %vm706, %v702, inf
        %708 = vmin.xlane.f32.xlu0 %v707
        %v709 = vpop.xlane.xlu0 %708
        %v710 = vcvt.f32.s32 %v709
        %v711 = vcvt.f32.s32 %v705
        %v712 = vshll.u32 %v711, 16
        %v713 = vadd.s32 %v712, %v710
        %v714 = vsel %vm425, %v670, 2147483647
        %v715 = vand.u32 %v714, 65535
        %v716 = vshra.s32 %v714, 16
        %v717 = vcvt.s32.f32 %v715
        %v718 = vcvt.s32.f32 %v716
        %719 = vmin.xlane.f32.xlu0 %v718
        %v720 = vpop.xlane.xlu0 %719
        %vm721 = vcmp.eq.f32.partialorder %v718, %v720
        %v722 = vsel %vm721, %v717, inf
        %723 = vmin.xlane.f32.xlu0 %v722
        %v724 = vpop.xlane.xlu0 %723
        %v725 = vcvt.f32.s32 %v724
        %v726 = vcvt.f32.s32 %v720
        %v727 = vshll.u32 %v726, 16
        %v728 = vadd.s32 %v727, %v725
        %v729 = vsel %vm425, %v671, 2147483647
        %v730 = vand.u32 %v729, 65535
        %v731 = vshra.s32 %v729, 16
        %v732 = vcvt.s32.f32 %v730
        %v733 = vcvt.s32.f32 %v731
        %734 = vmin.xlane.f32.xlu0 %v733
        %v735 = vpop.xlane.xlu0 %734
        %vm736 = vcmp.eq.f32.partialorder %v733, %v735
        %v737 = vsel %vm736, %v732, inf
        %738 = vmin.xlane.f32.xlu0 %v737
        %v739 = vpop.xlane.xlu0 %738
        %v740 = vcvt.f32.s32 %v739
        %v741 = vcvt.f32.s32 %v735
        %v742 = vshll.u32 %v741, 16
        %v743 = vadd.s32 %v742, %v740
        %v744 = vsel %vm425, %v672, 2147483647
        %v745 = vand.u32 %v744, 65535
        %v746 = vshra.s32 %v744, 16
        %v747 = vcvt.s32.f32 %v745
        %v748 = vcvt.s32.f32 %v746
        %749 = vmin.xlane.f32.xlu0 %v748
        %v750 = vpop.xlane.xlu0 %749
        %vm751 = vcmp.eq.f32.partialorder %v748, %v750
        %v752 = vsel %vm751, %v747, inf
        %753 = vmin.xlane.f32.xlu0 %v752
        %v754 = vpop.xlane.xlu0 %753
        %v755 = vcvt.f32.s32 %v754
        %v756 = vcvt.f32.s32 %v750
        %v757 = vshll.u32 %v756, 16
        %v758 = vadd.s32 %v757, %v755
        %v759 = vsel %vm425, %v673, 2147483647
        %v760 = vand.u32 %v759, 65535
        %v761 = vshra.s32 %v759, 16
        %v762 = vcvt.s32.f32 %v760
        %v763 = vcvt.s32.f32 %v761
        %764 = vmin.xlane.f32.xlu0 %v763
        %v765 = vpop.xlane.xlu0 %764
        %vm766 = vcmp.eq.f32.partialorder %v763, %v765
        %v767 = vsel %vm766, %v762, inf
        %768 = vmin.xlane.f32.xlu0 %v767
        %v769 = vpop.xlane.xlu0 %768
        %v770 = vcvt.f32.s32 %v769
        %v771 = vcvt.f32.s32 %v765
        %v772 = vshll.u32 %v771, 16
        %v773 = vadd.s32 %v772, %v770
        %v774 = vsel %vm425, %v674, 2147483647
        %v775 = vand.u32 %v774, 65535
        %v776 = vshra.s32 %v774, 16
        %v777 = vcvt.s32.f32 %v775
        %v778 = vcvt.s32.f32 %v776
        %779 = vmin.xlane.f32.xlu0 %v778
        %v780 = vpop.xlane.xlu0 %779
        %vm781 = vcmp.eq.f32.partialorder %v778, %v780
        %v782 = vsel %vm781, %v777, inf
        %783 = vmin.xlane.f32.xlu0 %v782
        %v784 = vpop.xlane.xlu0 %783
        %v785 = vcvt.f32.s32 %v784
        %v786 = vcvt.f32.s32 %v780
        %v787 = vshll.u32 %v786, 16
        %v788 = vadd.s32 %v787, %v785
        %v789 = vsel %vm425, %v675, 2147483647
        %v790 = vand.u32 %v789, 65535
        %v791 = vshra.s32 %v789, 16
        %v792 = vcvt.s32.f32 %v790
        %v793 = vcvt.s32.f32 %v791
        %794 = vmin.xlane.f32.xlu0 %v793
        %v795 = vpop.xlane.xlu0 %794
        %vm796 = vcmp.eq.f32.partialorder %v793, %v795
        %v797 = vsel %vm796, %v792, inf
        %798 = vmin.xlane.f32.xlu0 %v797
        %v799 = vpop.xlane.xlu0 %798
        %v800 = vcvt.f32.s32 %v799
        %v801 = vcvt.f32.s32 %v795
        %v802 = vshll.u32 %v801, 16
        %v803 = vadd.s32 %v802, %v800
        %v804 = vsel %vm425, %v676, 2147483647
        %v805 = vand.u32 %v804, 65535
        %v806 = vshra.s32 %v804, 16
        %v807 = vcvt.s32.f32 %v805
        %v808 = vcvt.s32.f32 %v806
        %809 = vmin.xlane.f32.xlu0 %v808
        %v810 = vpop.xlane.xlu0 %809
        %vm811 = vcmp.eq.f32.partialorder %v808, %v810
        %v812 = vsel %vm811, %v807, inf
        %813 = vmin.xlane.f32.xlu0 %v812
        %v814 = vpop.xlane.xlu0 %813
        %v815 = vcvt.f32.s32 %v814
        %v816 = vcvt.f32.s32 %v810
        %v817 = vshll.u32 %v816, 16
        %v818 = vadd.s32 %v817, %v815
        %v819 = vsel %vm425, %v677, 2147483647
        %v820 = vand.u32 %v819, 65535
        %v821 = vshra.s32 %v819, 16
        %v822 = vcvt.s32.f32 %v820
        %v823 = vcvt.s32.f32 %v821
        %824 = vmin.xlane.f32.xlu0 %v823
        %v825 = vpop.xlane.xlu0 %824
        %vm826 = vcmp.eq.f32.partialorder %v823, %v825
        %v827 = vsel %vm826, %v822, inf
        %828 = vmin.xlane.f32.xlu0 %v827
        %v829 = vpop.xlane.xlu0 %828
        %v830 = vcvt.f32.s32 %v829
        %v831 = vcvt.f32.s32 %v825
        %v832 = vshll.u32 %v831, 16
        %v833 = vadd.s32 %v832, %v830
        %v834 = vsel %vm425, %v678, 2147483647
        %v835 = vand.u32 %v834, 65535
        %v836 = vshra.s32 %v834, 16
        %v837 = vcvt.s32.f32 %v835
        %v838 = vcvt.s32.f32 %v836
        %839 = vmin.xlane.f32.xlu0 %v838
        %v840 = vpop.xlane.xlu0 %839
        %vm841 = vcmp.eq.f32.partialorder %v838, %v840
        %v842 = vsel %vm841, %v837, inf
        %843 = vmin.xlane.f32.xlu0 %v842
        %v844 = vpop.xlane.xlu0 %843
        %v845 = vcvt.f32.s32 %v844
        %v846 = vcvt.f32.s32 %v840
        %v847 = vshll.u32 %v846, 16
        %v848 = vadd.s32 %v847, %v845
        %v849 = vsel %vm425, %v679, 2147483647
        %v850 = vand.u32 %v849, 65535
        %v851 = vshra.s32 %v849, 16
        %v852 = vcvt.s32.f32 %v850
        %v853 = vcvt.s32.f32 %v851
        %854 = vmin.xlane.f32.xlu0 %v853
        %v855 = vpop.xlane.xlu0 %854
        %vm856 = vcmp.eq.f32.partialorder %v853, %v855
        %v857 = vsel %vm856, %v852, inf
        %858 = vmin.xlane.f32.xlu0 %v857
        %v859 = vpop.xlane.xlu0 %858
        %v860 = vcvt.f32.s32 %v859
        %v861 = vcvt.f32.s32 %v855
        %v862 = vshll.u32 %v861, 16
        %v863 = vadd.s32 %v862, %v860
        %v864 = vsel %vm425, %v680, 2147483647
        %v865 = vand.u32 %v864, 65535
        %v866 = vshra.s32 %v864, 16
        %v867 = vcvt.s32.f32 %v865
        %v868 = vcvt.s32.f32 %v866
        %869 = vmin.xlane.f32.xlu0 %v868
        %v870 = vpop.xlane.xlu0 %869
        %vm871 = vcmp.eq.f32.partialorder %v868, %v870
        %v872 = vsel %vm871, %v867, inf
        %873 = vmin.xlane.f32.xlu0 %v872
        %v874 = vpop.xlane.xlu0 %873
        %v875 = vcvt.f32.s32 %v874
        %v876 = vcvt.f32.s32 %v870
        %v877 = vshll.u32 %v876, 16
        %v878 = vadd.s32 %v877, %v875
        %v879 = vsel %vm425, %v681, 2147483647
        %v880 = vand.u32 %v879, 65535
        %v881 = vshra.s32 %v879, 16
        %v882 = vcvt.s32.f32 %v880
        %v883 = vcvt.s32.f32 %v881
        %884 = vmin.xlane.f32.xlu0 %v883
        %v885 = vpop.xlane.xlu0 %884
        %vm886 = vcmp.eq.f32.partialorder %v883, %v885
        %v887 = vsel %vm886, %v882, inf
        %888 = vmin.xlane.f32.xlu0 %v887
        %v889 = vpop.xlane.xlu0 %888
        %v890 = vcvt.f32.s32 %v889
        %v891 = vcvt.f32.s32 %v885
        %v892 = vshll.u32 %v891, 16
        %v893 = vadd.s32 %v892, %v890
        %v894 = vsel %vm425, %v682, 2147483647
        %v895 = vand.u32 %v894, 65535
        %v896 = vshra.s32 %v894, 16
        %v897 = vcvt.s32.f32 %v895
        %v898 = vcvt.s32.f32 %v896
        %899 = vmin.xlane.f32.xlu0 %v898
        %v900 = vpop.xlane.xlu0 %899
        %vm901 = vcmp.eq.f32.partialorder %v898, %v900
        %v902 = vsel %vm901, %v897, inf
        %903 = vmin.xlane.f32.xlu0 %v902
        %v904 = vpop.xlane.xlu0 %903
        %v905 = vcvt.f32.s32 %v904
        %v906 = vcvt.f32.s32 %v900
        %v907 = vshll.u32 %v906, 16
        %v908 = vadd.s32 %v907, %v905
        %v909 = vsel %vm425, %v683, 2147483647
        %v910 = vand.u32 %v909, 65535
        %v911 = vshra.s32 %v909, 16
        %v912 = vcvt.s32.f32 %v910
        %v913 = vcvt.s32.f32 %v911
        %914 = vmin.xlane.f32.xlu0 %v913
        %v915 = vpop.xlane.xlu0 %914
        %vm916 = vcmp.eq.f32.partialorder %v913, %v915
        %v917 = vsel %vm916, %v912, inf
        %918 = vmin.xlane.f32.xlu0 %v917
        %v919 = vpop.xlane.xlu0 %918
        %v920 = vcvt.f32.s32 %v919
        %v921 = vcvt.f32.s32 %v915
        %v922 = vshll.u32 %v921, 16
        %v923 = vadd.s32 %v922, %v920
        %vm924 = vcmp.eq.s32.totalorder %v603, %v698
        %vm925 = vcmp.eq.s32.totalorder %v603, %v713
        %vm926 = vcmp.eq.s32.totalorder %v603, %v728
        %vm927 = vcmp.eq.s32.totalorder %v603, %v743
        %vm928 = vcmp.eq.s32.totalorder %v603, %v758
        %vm929 = vcmp.eq.s32.totalorder %v603, %v773
        %vm930 = vcmp.eq.s32.totalorder %v603, %v788
        %vm931 = vcmp.eq.s32.totalorder %v603, %v803
        %vm932 = vcmp.eq.s32.totalorder %v603, %v818
        %vm933 = vcmp.eq.s32.totalorder %v603, %v833
        %vm934 = vcmp.eq.s32.totalorder %v603, %v848
        %vm935 = vcmp.eq.s32.totalorder %v603, %v863
        %vm936 = vcmp.eq.s32.totalorder %v603, %v878
        %vm937 = vcmp.eq.s32.totalorder %v603, %v893
        %vm938 = vcmp.eq.s32.totalorder %v603, %v908
        %vm939 = vcmp.eq.s32.totalorder %v603, %v923
        %v940 = vsel %vm924, 1, 0
        %v941 = vsel %vm925, 1, 0
        %v942 = vsel %vm926, 1, 0
        %v943 = vsel %vm927, 1, 0
        %v944 = vsel %vm928, 1, 0
        %v945 = vsel %vm929, 1, 0
        %v946 = vsel %vm930, 1, 0
        %v947 = vsel %vm931, 1, 0
        %v948 = vsel %vm932, 1, 0
        %v949 = vsel %vm933, 1, 0
        %v950 = vsel %vm934, 1, 0
        %v951 = vsel %vm935, 1, 0
        %v952 = vsel %vm936, 1, 0
        %v953 = vsel %vm937, 1, 0
        %v954 = vsel %vm938, 1, 0
        %v955 = vsel %vm939, 1, 0
        %v956 = vcvt.s32.f32 %v940
        %v957 = vcvt.s32.f32 %v941
        %v958 = vcvt.s32.f32 %v942
        %v959 = vcvt.s32.f32 %v943
        %v960 = vcvt.s32.f32 %v944
        %v961 = vcvt.s32.f32 %v945
        %v962 = vcvt.s32.f32 %v946
        %v963 = vcvt.s32.f32 %v947
        %v964 = vcvt.s32.f32 %v948
        %v965 = vcvt.s32.f32 %v949
        %v966 = vcvt.s32.f32 %v950
        %v967 = vcvt.s32.f32 %v951
        %v968 = vcvt.s32.f32 %v952
        %v969 = vcvt.s32.f32 %v953
        %v970 = vcvt.s32.f32 %v954
        %v971 = vcvt.s32.f32 %v955
        %v972 = vsub.f32 1.0, %v956
        %v973 = vsub.f32 1.0, %v957
        %v974 = vsub.f32 1.0, %v958
        %v975 = vsub.f32 1.0, %v959
        %v976 = vsub.f32 1.0, %v960
        %v977 = vsub.f32 1.0, %v961
        %v978 = vsub.f32 1.0, %v962
        %v979 = vsub.f32 1.0, %v963
        %v980 = vsub.f32 1.0, %v964
        %v981 = vsub.f32 1.0, %v965
        %v982 = vsub.f32 1.0, %v966
        %v983 = vsub.f32 1.0, %v967
        %v984 = vsub.f32 1.0, %v968
        %v985 = vsub.f32 1.0, %v969
        %v986 = vsub.f32 1.0, %v970
        %v987 = vsub.f32 1.0, %v971
        %v988 = vmul.f32 %v571, %v972
        %v989 = vmul.f32 %v573, %v973
        %v990 = vmul.f32 %v575, %v974
        %v991 = vmul.f32 %v577, %v975
        %v992 = vmul.f32 %v579, %v976
        %v993 = vmul.f32 %v581, %v977
        %v994 = vmul.f32 %v583, %v978
        %v995 = vmul.f32 %v585, %v979
        %v996 = vmul.f32 %v587, %v980
        %v997 = vmul.f32 %v589, %v981
        %v998 = vmul.f32 %v591, %v982
        %v999 = vmul.f32 %v593, %v983
        %v1000 = vmul.f32 %v595, %v984
        %v1001 = vmul.f32 %v597, %v985
        %v1002 = vmul.f32 %v599, %v986
        %v1003 = vmul.f32 %v601, %v987
        %v1004 = vsel %vm425, %v988, -inf
        %1005 = vmax.xlane.f32.xlu0 %v1004
        %v1006 = vpop.xlane.xlu0 %1005
        %v1007 = vsel %vm425, %v989, -inf
        %1008 = vmax.xlane.f32.xlu0 %v1007
        %v1009 = vpop.xlane.xlu0 %1008
        %v1010 = vsel %vm425, %v990, -inf
        %1011 = vmax.xlane.f32.xlu0 %v1010
        %v1012 = vpop.xlane.xlu0 %1011
        %v1013 = vsel %vm425, %v991, -inf
        %1014 = vmax.xlane.f32.xlu0 %v1013
        %v1015 = vpop.xlane.xlu0 %1014
        %v1016 = vsel %vm425, %v992, -inf
        %1017 = vmax.xlane.f32.xlu0 %v1016
        %v1018 = vpop.xlane.xlu0 %1017
        %v1019 = vsel %vm425, %v993, -inf
        %1020 = vmax.xlane.f32.xlu0 %v1019
        %v1021 = vpop.xlane.xlu0 %1020
        %v1022 = vsel %vm425, %v994, -inf
        %1023 = vmax.xlane.f32.xlu0 %v1022
        %v1024 = vpop.xlane.xlu0 %1023
        %v1025 = vsel %vm425, %v995, -inf
        %1026 = vmax.xlane.f32.xlu0 %v1025
        %v1027 = vpop.xlane.xlu0 %1026
        %v1028 = vsel %vm425, %v996, -inf
        %1029 = vmax.xlane.f32.xlu0 %v1028
        %v1030 = vpop.xlane.xlu0 %1029
        %v1031 = vsel %vm425, %v997, -inf
        %1032 = vmax.xlane.f32.xlu0 %v1031
        %v1033 = vpop.xlane.xlu0 %1032
        %v1034 = vsel %vm425, %v998, -inf
        %1035 = vmax.xlane.f32.xlu0 %v1034
        %v1036 = vpop.xlane.xlu0 %1035
        %v1037 = vsel %vm425, %v999, -inf
        %1038 = vmax.xlane.f32.xlu0 %v1037
        %v1039 = vpop.xlane.xlu0 %1038
        %v1040 = vsel %vm425, %v1000, -inf
        %1041 = vmax.xlane.f32.xlu0 %v1040
        %v1042 = vpop.xlane.xlu0 %1041
        %v1043 = vsel %vm425, %v1001, -inf
        %1044 = vmax.xlane.f32.xlu0 %v1043
        %v1045 = vpop.xlane.xlu0 %1044
        %v1046 = vsel %vm425, %v1002, -inf
        %1047 = vmax.xlane.f32.xlu0 %v1046
        %v1048 = vpop.xlane.xlu0 %1047
        %v1049 = vsel %vm425, %v1003, -inf
        %1050 = vmax.xlane.f32.xlu0 %v1049
        %v1051 = vpop.xlane.xlu0 %1050
        %vm1052 = vcmp.ge.f32.partialorder %v988, %v1006
        %vm1053 = vcmp.ge.f32.partialorder %v989, %v1009
        %vm1054 = vcmp.ge.f32.partialorder %v990, %v1012
        %vm1055 = vcmp.ge.f32.partialorder %v991, %v1015
        %vm1056 = vcmp.ge.f32.partialorder %v992, %v1018
        %vm1057 = vcmp.ge.f32.partialorder %v993, %v1021
        %vm1058 = vcmp.ge.f32.partialorder %v994, %v1024
        %vm1059 = vcmp.ge.f32.partialorder %v995, %v1027
        %vm1060 = vcmp.ge.f32.partialorder %v996, %v1030
        %vm1061 = vcmp.ge.f32.partialorder %v997, %v1033
        %vm1062 = vcmp.ge.f32.partialorder %v998, %v1036
        %vm1063 = vcmp.ge.f32.partialorder %v999, %v1039
        %vm1064 = vcmp.ge.f32.partialorder %v1000, %v1042
        %vm1065 = vcmp.ge.f32.partialorder %v1001, %v1045
        %vm1066 = vcmp.ge.f32.partialorder %v1002, %v1048
        %vm1067 = vcmp.ge.f32.partialorder %v1003, %v1051
        %v1068 = vsel %vm1052, %v603, 8
        %v1069 = vsel %vm1053, %v603, 8
        %v1070 = vsel %vm1054, %v603, 8
        %v1071 = vsel %vm1055, %v603, 8
        %v1072 = vsel %vm1056, %v603, 8
        %v1073 = vsel %vm1057, %v603, 8
        %v1074 = vsel %vm1058, %v603, 8
        %v1075 = vsel %vm1059, %v603, 8
        %v1076 = vsel %vm1060, %v603, 8
        %v1077 = vsel %vm1061, %v603, 8
        %v1078 = vsel %vm1062, %v603, 8
        %v1079 = vsel %vm1063, %v603, 8
        %v1080 = vsel %vm1064, %v603, 8
        %v1081 = vsel %vm1065, %v603, 8
        %v1082 = vsel %vm1066, %v603, 8
        %v1083 = vsel %vm1067, %v603, 8
        %v1084 = vsel %vm425, %v1068, 2147483647
        %v1085 = vand.u32 %v1084, 65535
        %v1086 = vshra.s32 %v1084, 16
        %v1087 = vcvt.s32.f32 %v1085
        %v1088 = vcvt.s32.f32 %v1086
        %1089 = vmin.xlane.f32.xlu0 %v1088
        %v1090 = vpop.xlane.xlu0 %1089
        %vm1091 = vcmp.eq.f32.partialorder %v1088, %v1090
        %v1092 = vsel %vm1091, %v1087, inf
        %1093 = vmin.xlane.f32.xlu0 %v1092
        %v1094 = vpop.xlane.xlu0 %1093
        %v1095 = vcvt.f32.s32 %v1094
        %v1096 = vcvt.f32.s32 %v1090
        %v1097 = vshll.u32 %v1096, 16
        %v1098 = vadd.s32 %v1097, %v1095
        %v1099 = vsel %vm425, %v1069, 2147483647
        %v1100 = vand.u32 %v1099, 65535
        %v1101 = vshra.s32 %v1099, 16
        %v1102 = vcvt.s32.f32 %v1100
        %v1103 = vcvt.s32.f32 %v1101
        %1104 = vmin.xlane.f32.xlu0 %v1103
        %v1105 = vpop.xlane.xlu0 %1104
        %vm1106 = vcmp.eq.f32.partialorder %v1103, %v1105
        %v1107 = vsel %vm1106, %v1102, inf
        %1108 = vmin.xlane.f32.xlu0 %v1107
        %v1109 = vpop.xlane.xlu0 %1108
        %v1110 = vcvt.f32.s32 %v1109
        %v1111 = vcvt.f32.s32 %v1105
        %v1112 = vshll.u32 %v1111, 16
        %v1113 = vadd.s32 %v1112, %v1110
        %v1114 = vsel %vm425, %v1070, 2147483647
        %v1115 = vand.u32 %v1114, 65535
        %v1116 = vshra.s32 %v1114, 16
        %v1117 = vcvt.s32.f32 %v1115
        %v1118 = vcvt.s32.f32 %v1116
        %1119 = vmin.xlane.f32.xlu0 %v1118
        %v1120 = vpop.xlane.xlu0 %1119
        %vm1121 = vcmp.eq.f32.partialorder %v1118, %v1120
        %v1122 = vsel %vm1121, %v1117, inf
        %1123 = vmin.xlane.f32.xlu0 %v1122
        %v1124 = vpop.xlane.xlu0 %1123
        %v1125 = vcvt.f32.s32 %v1124
        %v1126 = vcvt.f32.s32 %v1120
        %v1127 = vshll.u32 %v1126, 16
        %v1128 = vadd.s32 %v1127, %v1125
        %v1129 = vsel %vm425, %v1071, 2147483647
        %v1130 = vand.u32 %v1129, 65535
        %v1131 = vshra.s32 %v1129, 16
        %v1132 = vcvt.s32.f32 %v1130
        %v1133 = vcvt.s32.f32 %v1131
        %1134 = vmin.xlane.f32.xlu0 %v1133
        %v1135 = vpop.xlane.xlu0 %1134
        %vm1136 = vcmp.eq.f32.partialorder %v1133, %v1135
        %v1137 = vsel %vm1136, %v1132, inf
        %1138 = vmin.xlane.f32.xlu0 %v1137
        %v1139 = vpop.xlane.xlu0 %1138
        %v1140 = vcvt.f32.s32 %v1139
        %v1141 = vcvt.f32.s32 %v1135
        %v1142 = vshll.u32 %v1141, 16
        %v1143 = vadd.s32 %v1142, %v1140
        %v1144 = vsel %vm425, %v1072, 2147483647
        %v1145 = vand.u32 %v1144, 65535
        %v1146 = vshra.s32 %v1144, 16
        %v1147 = vcvt.s32.f32 %v1145
        %v1148 = vcvt.s32.f32 %v1146
        %1149 = vmin.xlane.f32.xlu0 %v1148
        %v1150 = vpop.xlane.xlu0 %1149
        %vm1151 = vcmp.eq.f32.partialorder %v1148, %v1150
        %v1152 = vsel %vm1151, %v1147, inf
        %1153 = vmin.xlane.f32.xlu0 %v1152
        %v1154 = vpop.xlane.xlu0 %1153
        %v1155 = vcvt.f32.s32 %v1154
        %v1156 = vcvt.f32.s32 %v1150
        %v1157 = vshll.u32 %v1156, 16
        %v1158 = vadd.s32 %v1157, %v1155
        %v1159 = vsel %vm425, %v1073, 2147483647
        %v1160 = vand.u32 %v1159, 65535
        %v1161 = vshra.s32 %v1159, 16
        %v1162 = vcvt.s32.f32 %v1160
        %v1163 = vcvt.s32.f32 %v1161
        %1164 = vmin.xlane.f32.xlu0 %v1163
        %v1165 = vpop.xlane.xlu0 %1164
        %vm1166 = vcmp.eq.f32.partialorder %v1163, %v1165
        %v1167 = vsel %vm1166, %v1162, inf
        %1168 = vmin.xlane.f32.xlu0 %v1167
        %v1169 = vpop.xlane.xlu0 %1168
        %v1170 = vcvt.f32.s32 %v1169
        %v1171 = vcvt.f32.s32 %v1165
        %v1172 = vshll.u32 %v1171, 16
        %v1173 = vadd.s32 %v1172, %v1170
        %v1174 = vsel %vm425, %v1074, 2147483647
        %v1175 = vand.u32 %v1174, 65535
        %v1176 = vshra.s32 %v1174, 16
        %v1177 = vcvt.s32.f32 %v1175
        %v1178 = vcvt.s32.f32 %v1176
        %1179 = vmin.xlane.f32.xlu0 %v1178
        %v1180 = vpop.xlane.xlu0 %1179
        %vm1181 = vcmp.eq.f32.partialorder %v1178, %v1180
        %v1182 = vsel %vm1181, %v1177, inf
        %1183 = vmin.xlane.f32.xlu0 %v1182
        %v1184 = vpop.xlane.xlu0 %1183
        %v1185 = vcvt.f32.s32 %v1184
        %v1186 = vcvt.f32.s32 %v1180
        %v1187 = vshll.u32 %v1186, 16
        %v1188 = vadd.s32 %v1187, %v1185
        %v1189 = vsel %vm425, %v1075, 2147483647
        %v1190 = vand.u32 %v1189, 65535
        %v1191 = vshra.s32 %v1189, 16
        %v1192 = vcvt.s32.f32 %v1190
        %v1193 = vcvt.s32.f32 %v1191
        %1194 = vmin.xlane.f32.xlu0 %v1193
        %v1195 = vpop.xlane.xlu0 %1194
        %vm1196 = vcmp.eq.f32.partialorder %v1193, %v1195
        %v1197 = vsel %vm1196, %v1192, inf
        %1198 = vmin.xlane.f32.xlu0 %v1197
        %v1199 = vpop.xlane.xlu0 %1198
        %v1200 = vcvt.f32.s32 %v1199
        %v1201 = vcvt.f32.s32 %v1195
        %v1202 = vshll.u32 %v1201, 16
        %v1203 = vadd.s32 %v1202, %v1200
        %v1204 = vsel %vm425, %v1076, 2147483647
        %v1205 = vand.u32 %v1204, 65535
        %v1206 = vshra.s32 %v1204, 16
        %v1207 = vcvt.s32.f32 %v1205
        %v1208 = vcvt.s32.f32 %v1206
        %1209 = vmin.xlane.f32.xlu0 %v1208
        %v1210 = vpop.xlane.xlu0 %1209
        %vm1211 = vcmp.eq.f32.partialorder %v1208, %v1210
        %v1212 = vsel %vm1211, %v1207, inf
        %1213 = vmin.xlane.f32.xlu0 %v1212
        %v1214 = vpop.xlane.xlu0 %1213
        %v1215 = vcvt.f32.s32 %v1214
        %v1216 = vcvt.f32.s32 %v1210
        %v1217 = vshll.u32 %v1216, 16
        %v1218 = vadd.s32 %v1217, %v1215
        %v1219 = vsel %vm425, %v1077, 2147483647
        %v1220 = vand.u32 %v1219, 65535
        %v1221 = vshra.s32 %v1219, 16
        %v1222 = vcvt.s32.f32 %v1220
        %v1223 = vcvt.s32.f32 %v1221
        %1224 = vmin.xlane.f32.xlu0 %v1223
        %v1225 = vpop.xlane.xlu0 %1224
        %vm1226 = vcmp.eq.f32.partialorder %v1223, %v1225
        %v1227 = vsel %vm1226, %v1222, inf
        %1228 = vmin.xlane.f32.xlu0 %v1227
        %v1229 = vpop.xlane.xlu0 %1228
        %v1230 = vcvt.f32.s32 %v1229
        %v1231 = vcvt.f32.s32 %v1225
        %v1232 = vshll.u32 %v1231, 16
        %v1233 = vadd.s32 %v1232, %v1230
        %v1234 = vsel %vm425, %v1078, 2147483647
        %v1235 = vand.u32 %v1234, 65535
        %v1236 = vshra.s32 %v1234, 16
        %v1237 = vcvt.s32.f32 %v1235
        %v1238 = vcvt.s32.f32 %v1236
        %1239 = vmin.xlane.f32.xlu0 %v1238
        %v1240 = vpop.xlane.xlu0 %1239
        %vm1241 = vcmp.eq.f32.partialorder %v1238, %v1240
        %v1242 = vsel %vm1241, %v1237, inf
        %1243 = vmin.xlane.f32.xlu0 %v1242
        %v1244 = vpop.xlane.xlu0 %1243
        %v1245 = vcvt.f32.s32 %v1244
        %v1246 = vcvt.f32.s32 %v1240
        %v1247 = vshll.u32 %v1246, 16
        %v1248 = vadd.s32 %v1247, %v1245
        %v1249 = vsel %vm425, %v1079, 2147483647
        %v1250 = vand.u32 %v1249, 65535
        %v1251 = vshra.s32 %v1249, 16
        %v1252 = vcvt.s32.f32 %v1250
        %v1253 = vcvt.s32.f32 %v1251
        %1254 = vmin.xlane.f32.xlu0 %v1253
        %v1255 = vpop.xlane.xlu0 %1254
        %vm1256 = vcmp.eq.f32.partialorder %v1253, %v1255
        %v1257 = vsel %vm1256, %v1252, inf
        %1258 = vmin.xlane.f32.xlu0 %v1257
        %v1259 = vpop.xlane.xlu0 %1258
        %v1260 = vcvt.f32.s32 %v1259
        %v1261 = vcvt.f32.s32 %v1255
        %v1262 = vshll.u32 %v1261, 16
        %v1263 = vadd.s32 %v1262, %v1260
        %v1264 = vsel %vm425, %v1080, 2147483647
        %v1265 = vand.u32 %v1264, 65535
        %v1266 = vshra.s32 %v1264, 16
        %v1267 = vcvt.s32.f32 %v1265
        %v1268 = vcvt.s32.f32 %v1266
        %1269 = vmin.xlane.f32.xlu0 %v1268
        %v1270 = vpop.xlane.xlu0 %1269
        %vm1271 = vcmp.eq.f32.partialorder %v1268, %v1270
        %v1272 = vsel %vm1271, %v1267, inf
        %1273 = vmin.xlane.f32.xlu0 %v1272
        %v1274 = vpop.xlane.xlu0 %1273
        %v1275 = vcvt.f32.s32 %v1274
        %v1276 = vcvt.f32.s32 %v1270
        %v1277 = vshll.u32 %v1276, 16
        %v1278 = vadd.s32 %v1277, %v1275
        %v1279 = vsel %vm425, %v1081, 2147483647
        %v1280 = vand.u32 %v1279, 65535
        %v1281 = vshra.s32 %v1279, 16
        %v1282 = vcvt.s32.f32 %v1280
        %v1283 = vcvt.s32.f32 %v1281
        %1284 = vmin.xlane.f32.xlu0 %v1283
        %v1285 = vpop.xlane.xlu0 %1284
        %vm1286 = vcmp.eq.f32.partialorder %v1283, %v1285
        %v1287 = vsel %vm1286, %v1282, inf
        %1288 = vmin.xlane.f32.xlu0 %v1287
        %v1289 = vpop.xlane.xlu0 %1288
        %v1290 = vcvt.f32.s32 %v1289
        %v1291 = vcvt.f32.s32 %v1285
        %v1292 = vshll.u32 %v1291, 16
        %v1293 = vadd.s32 %v1292, %v1290
        %v1294 = vsel %vm425, %v1082, 2147483647
        %v1295 = vand.u32 %v1294, 65535
        %v1296 = vshra.s32 %v1294, 16
        %v1297 = vcvt.s32.f32 %v1295
        %v1298 = vcvt.s32.f32 %v1296
        %1299 = vmin.xlane.f32.xlu0 %v1298
        %v1300 = vpop.xlane.xlu0 %1299
        %vm1301 = vcmp.eq.f32.partialorder %v1298, %v1300
        %v1302 = vsel %vm1301, %v1297, inf
        %1303 = vmin.xlane.f32.xlu0 %v1302
        %v1304 = vpop.xlane.xlu0 %1303
        %v1305 = vcvt.f32.s32 %v1304
        %v1306 = vcvt.f32.s32 %v1300
        %v1307 = vshll.u32 %v1306, 16
        %v1308 = vadd.s32 %v1307, %v1305
        %v1309 = vsel %vm425, %v1083, 2147483647
        %v1310 = vand.u32 %v1309, 65535
        %v1311 = vshra.s32 %v1309, 16
        %v1312 = vcvt.s32.f32 %v1310
        %v1313 = vcvt.s32.f32 %v1311
        %1314 = vmin.xlane.f32.xlu0 %v1313
        %v1315 = vpop.xlane.xlu0 %1314
        %vm1316 = vcmp.eq.f32.partialorder %v1313, %v1315
        %v1317 = vsel %vm1316, %v1312, inf
        %1318 = vmin.xlane.f32.xlu0 %v1317
        %v1319 = vpop.xlane.xlu0 %1318
        %v1320 = vcvt.f32.s32 %v1319
        %v1321 = vcvt.f32.s32 %v1315
        %v1322 = vshll.u32 %v1321, 16
        %v1323 = vadd.s32 %v1322, %v1320
        %vm1324 = vcmp.eq.s32.totalorder %v603, %v1098
        %vm1325 = vcmp.eq.s32.totalorder %v603, %v1113
        %vm1326 = vcmp.eq.s32.totalorder %v603, %v1128
        %vm1327 = vcmp.eq.s32.totalorder %v603, %v1143
        %vm1328 = vcmp.eq.s32.totalorder %v603, %v1158
        %vm1329 = vcmp.eq.s32.totalorder %v603, %v1173
        %vm1330 = vcmp.eq.s32.totalorder %v603, %v1188
        %vm1331 = vcmp.eq.s32.totalorder %v603, %v1203
        %vm1332 = vcmp.eq.s32.totalorder %v603, %v1218
        %vm1333 = vcmp.eq.s32.totalorder %v603, %v1233
        %vm1334 = vcmp.eq.s32.totalorder %v603, %v1248
        %vm1335 = vcmp.eq.s32.totalorder %v603, %v1263
        %vm1336 = vcmp.eq.s32.totalorder %v603, %v1278
        %vm1337 = vcmp.eq.s32.totalorder %v603, %v1293
        %vm1338 = vcmp.eq.s32.totalorder %v603, %v1308
        %vm1339 = vcmp.eq.s32.totalorder %v603, %v1323
        %v1340 = vsel %vm1324, 1, 0
        %v1341 = vsel %vm1325, 1, 0
        %v1342 = vsel %vm1326, 1, 0
        %v1343 = vsel %vm1327, 1, 0
        %v1344 = vsel %vm1328, 1, 0
        %v1345 = vsel %vm1329, 1, 0
        %v1346 = vsel %vm1330, 1, 0
        %v1347 = vsel %vm1331, 1, 0
        %v1348 = vsel %vm1332, 1, 0
        %v1349 = vsel %vm1333, 1, 0
        %v1350 = vsel %vm1334, 1, 0
        %v1351 = vsel %vm1335, 1, 0
        %v1352 = vsel %vm1336, 1, 0
        %v1353 = vsel %vm1337, 1, 0
        %v1354 = vsel %vm1338, 1, 0
        %v1355 = vsel %vm1339, 1, 0
        %v1356 = vcvt.s32.f32 %v1340
        %v1357 = vcvt.s32.f32 %v1341
        %v1358 = vcvt.s32.f32 %v1342
        %v1359 = vcvt.s32.f32 %v1343
        %v1360 = vcvt.s32.f32 %v1344
        %v1361 = vcvt.s32.f32 %v1345
        %v1362 = vcvt.s32.f32 %v1346
        %v1363 = vcvt.s32.f32 %v1347
        %v1364 = vcvt.s32.f32 %v1348
        %v1365 = vcvt.s32.f32 %v1349
        %v1366 = vcvt.s32.f32 %v1350
        %v1367 = vcvt.s32.f32 %v1351
        %v1368 = vcvt.s32.f32 %v1352
        %v1369 = vcvt.s32.f32 %v1353
        %v1370 = vcvt.s32.f32 %v1354
        %v1371 = vcvt.s32.f32 %v1355
        %v1372 = vadd.f32 %v606, %v1006
        %v1373 = vadd.f32 %v609, %v1009
        %v1374 = vadd.f32 %v612, %v1012
        %v1375 = vadd.f32 %v615, %v1015
        %v1376 = vadd.f32 %v618, %v1018
        %v1377 = vadd.f32 %v621, %v1021
        %v1378 = vadd.f32 %v624, %v1024
        %v1379 = vadd.f32 %v627, %v1027
        %v1380 = vadd.f32 %v630, %v1030
        %v1381 = vadd.f32 %v633, %v1033
        %v1382 = vadd.f32 %v636, %v1036
        %v1383 = vadd.f32 %v639, %v1039
        %v1384 = vadd.f32 %v642, %v1042
        %v1385 = vadd.f32 %v645, %v1045
        %v1386 = vadd.f32 %v648, %v1048
        %v1387 = vadd.f32 %v651, %v1051
        %v1388 = vadd.f32 %v1372, 1e-09
        %v1389 = vadd.f32 %v1373, 1e-09
        %v1390 = vadd.f32 %v1374, 1e-09
        %v1391 = vadd.f32 %v1375, 1e-09
        %v1392 = vadd.f32 %v1376, 1e-09
        %v1393 = vadd.f32 %v1377, 1e-09
        %v1394 = vadd.f32 %v1378, 1e-09
        %v1395 = vadd.f32 %v1379, 1e-09
        %v1396 = vadd.f32 %v1380, 1e-09
        %v1397 = vadd.f32 %v1381, 1e-09
        %v1398 = vadd.f32 %v1382, 1e-09
        %v1399 = vadd.f32 %v1383, 1e-09
        %v1400 = vadd.f32 %v1384, 1e-09
        %v1401 = vadd.f32 %v1385, 1e-09
        %v1402 = vadd.f32 %v1386, 1e-09
        %v1403 = vadd.f32 %v1387, 1e-09
        %v1404 = vrcp.pop %v1388
        %v1405 = vmul.f32 %v606, %v1404
        %v1406 = vrcp.pop %v1389
        %v1407 = vmul.f32 %v609, %v1406
        %v1408 = vrcp.pop %v1390
        %v1409 = vmul.f32 %v612, %v1408
        %v1410 = vrcp.pop %v1391
        %v1411 = vmul.f32 %v615, %v1410
        %v1412 = vrcp.pop %v1392
        %v1413 = vmul.f32 %v618, %v1412
        %v1414 = vrcp.pop %v1393
        %v1415 = vmul.f32 %v621, %v1414
        %v1416 = vrcp.pop %v1394
        %v1417 = vmul.f32 %v624, %v1416
        %v1418 = vrcp.pop %v1395
        %v1419 = vmul.f32 %v627, %v1418
        %v1420 = vrcp.pop %v1396
        %v1421 = vmul.f32 %v630, %v1420
        %v1422 = vrcp.pop %v1397
        %v1423 = vmul.f32 %v633, %v1422
        %v1424 = vrcp.pop %v1398
        %v1425 = vmul.f32 %v636, %v1424
        %v1426 = vrcp.pop %v1399
        %v1427 = vmul.f32 %v639, %v1426
        %v1428 = vrcp.pop %v1400
        %v1429 = vmul.f32 %v642, %v1428
        %v1430 = vrcp.pop %v1401
        %v1431 = vmul.f32 %v645, %v1430
        %v1432 = vrcp.pop %v1402
        %v1433 = vmul.f32 %v648, %v1432
        %v1434 = vrcp.pop %v1403
        %v1435 = vmul.f32 %v651, %v1434
        %v1436 = vmul.f32 %v1006, %v1404
        %v1437 = vmul.f32 %v1009, %v1406
        %v1438 = vmul.f32 %v1012, %v1408
        %v1439 = vmul.f32 %v1015, %v1410
        %v1440 = vmul.f32 %v1018, %v1412
        %v1441 = vmul.f32 %v1021, %v1414
        %v1442 = vmul.f32 %v1024, %v1416
        %v1443 = vmul.f32 %v1027, %v1418
        %v1444 = vmul.f32 %v1030, %v1420
        %v1445 = vmul.f32 %v1033, %v1422
        %v1446 = vmul.f32 %v1036, %v1424
        %v1447 = vmul.f32 %v1039, %v1426
        %v1448 = vmul.f32 %v1042, %v1428
        %v1449 = vmul.f32 %v1045, %v1430
        %v1450 = vmul.f32 %v1048, %v1432
        %v1451 = vmul.f32 %v1051, %v1434
        %v1452 = vsel %vm425, %v956, 0.0
        %v1453 = vsel %vm425, %v957, 0.0
        %v1454 = vadd.f32 %v1452, %v1453
        %v1455 = vsel %vm425, %v958, 0.0
        %v1456 = vadd.f32 %v1454, %v1455
        %v1457 = vsel %vm425, %v959, 0.0
        %v1458 = vadd.f32 %v1456, %v1457
        %v1459 = vsel %vm425, %v960, 0.0
        %v1460 = vadd.f32 %v1458, %v1459
        %v1461 = vsel %vm425, %v961, 0.0
        %v1462 = vadd.f32 %v1460, %v1461
        %v1463 = vsel %vm425, %v962, 0.0
        %v1464 = vadd.f32 %v1462, %v1463
        %v1465 = vsel %vm425, %v963, 0.0
        %v1466 = vadd.f32 %v1464, %v1465
        %v1467 = vsel %vm425, %v964, 0.0
        %v1468 = vadd.f32 %v1466, %v1467
        %v1469 = vsel %vm425, %v965, 0.0
        %v1470 = vadd.f32 %v1468, %v1469
        %v1471 = vsel %vm425, %v966, 0.0
        %v1472 = vadd.f32 %v1470, %v1471
        %v1473 = vsel %vm425, %v967, 0.0
        %v1474 = vadd.f32 %v1472, %v1473
        %v1475 = vsel %vm425, %v968, 0.0
        %v1476 = vadd.f32 %v1474, %v1475
        %v1477 = vsel %vm425, %v969, 0.0
        %v1478 = vadd.f32 %v1476, %v1477
        %v1479 = vsel %vm425, %v970, 0.0
        %v1480 = vadd.f32 %v1478, %v1479
        %v1481 = vsel %vm425, %v971, 0.0
        %v1482 = vadd.f32 %v1480, %v1481
        %v1483 = vrot.slane %v1482, 4
        %v1484 = vadd.f32 %v1482, %v1483
        %v1485 = vrot.slane %v1484, 2
        %v1486 = vadd.f32 %v1484, %v1485
        %v1487 = vrot.slane %v1486, 1
        %v1488 = vadd.f32 %v1486, %v1487
        %v1489 = vrcp.pop 128.0
        %v1490 = vmul.f32 %v1488, %v1489
        %v1491 = vsel %vm425, %v571, 0.0
        %v1492 = vsel %vm425, %v573, 0.0
        %v1493 = vadd.f32 %v1491, %v1492
        %v1494 = vsel %vm425, %v575, 0.0
        %v1495 = vadd.f32 %v1493, %v1494
        %v1496 = vsel %vm425, %v577, 0.0
        %v1497 = vadd.f32 %v1495, %v1496
        %v1498 = vsel %vm425, %v579, 0.0
        %v1499 = vadd.f32 %v1497, %v1498
        %v1500 = vsel %vm425, %v581, 0.0
        %v1501 = vadd.f32 %v1499, %v1500
        %v1502 = vsel %vm425, %v583, 0.0
        %v1503 = vadd.f32 %v1501, %v1502
        %v1504 = vsel %vm425, %v585, 0.0
        %v1505 = vadd.f32 %v1503, %v1504
        %v1506 = vsel %vm425, %v587, 0.0
        %v1507 = vadd.f32 %v1505, %v1506
        %v1508 = vsel %vm425, %v589, 0.0
        %v1509 = vadd.f32 %v1507, %v1508
        %v1510 = vsel %vm425, %v591, 0.0
        %v1511 = vadd.f32 %v1509, %v1510
        %v1512 = vsel %vm425, %v593, 0.0
        %v1513 = vadd.f32 %v1511, %v1512
        %v1514 = vsel %vm425, %v595, 0.0
        %v1515 = vadd.f32 %v1513, %v1514
        %v1516 = vsel %vm425, %v597, 0.0
        %v1517 = vadd.f32 %v1515, %v1516
        %v1518 = vsel %vm425, %v599, 0.0
        %v1519 = vadd.f32 %v1517, %v1518
        %v1520 = vsel %vm425, %v601, 0.0
        %v1521 = vadd.f32 %v1519, %v1520
        %v1522 = vrot.slane %v1521, 4
        %v1523 = vadd.f32 %v1521, %v1522
        %v1524 = vrot.slane %v1523, 2
        %v1525 = vadd.f32 %v1523, %v1524
        %v1526 = vrot.slane %v1525, 1
        %v1527 = vadd.f32 %v1525, %v1526
        %v1528 = vmul.f32 %v1527, %v1489
        %v1529 = vmul.f32 %v1528, %v1490
        %v1530 = vsel %vm425, %v1529, 0.0
        %1531 = vadd.xlane.f32.xlu0 %v1530
        %v1532 = vpop.xlane.xlu0 %1531
        %v1533 = vmul.f32 %v1532, 8.0
        %v1534 = vadd.s32 %v1098, 8
        %v1535 = vadd.s32 %v1113, 8
        %v1536 = vadd.s32 %v1128, 8
        %v1537 = vadd.s32 %v1143, 8
        %v1538 = vadd.s32 %v1158, 8
        %v1539 = vadd.s32 %v1173, 8
        %v1540 = vadd.s32 %v1188, 8
        %v1541 = vadd.s32 %v1203, 8
        %v1542 = vadd.s32 %v1218, 8
        %v1543 = vadd.s32 %v1233, 8
        %v1544 = vadd.s32 %v1248, 8
        %v1545 = vadd.s32 %v1263, 8
        %v1546 = vadd.s32 %v1278, 8
        %v1547 = vadd.s32 %v1293, 8
        %v1548 = vadd.s32 %v1308, 8
        %v1549 = vadd.s32 %v1323, 8
        %vm1550 = vcmp.eq.s32.totalorder %v603, %v1534
        %vm1551 = vcmp.eq.s32.totalorder %v603, %v1535
        %vm1552 = vcmp.eq.s32.totalorder %v603, %v1536
        %vm1553 = vcmp.eq.s32.totalorder %v603, %v1537
        %vm1554 = vcmp.eq.s32.totalorder %v603, %v1538
        %vm1555 = vcmp.eq.s32.totalorder %v603, %v1539
        %vm1556 = vcmp.eq.s32.totalorder %v603, %v1540
        %vm1557 = vcmp.eq.s32.totalorder %v603, %v1541
        %vm1558 = vcmp.eq.s32.totalorder %v603, %v1542
        %vm1559 = vcmp.eq.s32.totalorder %v603, %v1543
        %vm1560 = vcmp.eq.s32.totalorder %v603, %v1544
        %vm1561 = vcmp.eq.s32.totalorder %v603, %v1545
        %vm1562 = vcmp.eq.s32.totalorder %v603, %v1546
        %vm1563 = vcmp.eq.s32.totalorder %v603, %v1547
        %vm1564 = vcmp.eq.s32.totalorder %v603, %v1548
        %vm1565 = vcmp.eq.s32.totalorder %v603, %v1549
        %vm1566 = vmor %vm924, %vm1550
        %vm1567 = vmor %vm925, %vm1551
        %vm1568 = vmor %vm926, %vm1552
        %vm1569 = vmor %vm927, %vm1553
        %vm1570 = vmor %vm928, %vm1554
        %vm1571 = vmor %vm929, %vm1555
        %vm1572 = vmor %vm930, %vm1556
        %vm1573 = vmor %vm931, %vm1557
        %vm1574 = vmor %vm932, %vm1558
        %vm1575 = vmor %vm933, %vm1559
        %vm1576 = vmor %vm934, %vm1560
        %vm1577 = vmor %vm935, %vm1561
        %vm1578 = vmor %vm936, %vm1562
        %vm1579 = vmor %vm937, %vm1563
        %vm1580 = vmor %vm938, %vm1564
        %vm1581 = vmor %vm939, %vm1565
        %v1582 = vsel %vm1566, 1, 0
        %v1583 = vsel %vm1567, 1, 0
        %v1584 = vsel %vm1568, 1, 0
        %v1585 = vsel %vm1569, 1, 0
        %v1586 = vsel %vm1570, 1, 0
        %v1587 = vsel %vm1571, 1, 0
        %v1588 = vsel %vm1572, 1, 0
        %v1589 = vsel %vm1573, 1, 0
        %v1590 = vsel %vm1574, 1, 0
        %v1591 = vsel %vm1575, 1, 0
        %v1592 = vsel %vm1576, 1, 0
        %v1593 = vsel %vm1577, 1, 0
        %v1594 = vsel %vm1578, 1, 0
        %v1595 = vsel %vm1579, 1, 0
        %v1596 = vsel %vm1580, 1, 0
        %v1597 = vsel %vm1581, 1, 0
        %v1598 = vcvt.s32.f32 %v1582
        %v1599 = vcvt.s32.f32 %v1583
        %v1600 = vcvt.s32.f32 %v1584
        %v1601 = vcvt.s32.f32 %v1585
        %v1602 = vcvt.s32.f32 %v1586
        %v1603 = vcvt.s32.f32 %v1587
        %v1604 = vcvt.s32.f32 %v1588
        %v1605 = vcvt.s32.f32 %v1589
        %v1606 = vcvt.s32.f32 %v1590
        %v1607 = vcvt.s32.f32 %v1591
        %v1608 = vcvt.s32.f32 %v1592
        %v1609 = vcvt.s32.f32 %v1593
        %v1610 = vcvt.s32.f32 %v1594
        %v1611 = vcvt.s32.f32 %v1595
        %v1612 = vcvt.s32.f32 %v1596
        %v1613 = vcvt.s32.f32 %v1597
        %v1614 = vpack.c.bf16 %v1599, %v1598
        %v1615 = vpack.c.bf16 %v1601, %v1600
        %v1616 = vpack.c.bf16 %v1603, %v1602
        %v1617 = vpack.c.bf16 %v1605, %v1604
        %v1618 = vpack.c.bf16 %v1607, %v1606
        %v1619 = vpack.c.bf16 %v1609, %v1608
        %v1620 = vpack.c.bf16 %v1611, %v1610
        %v1621 = vpack.c.bf16 %v1613, %v1612
        %v1622 = vld [vmem:[%s1] sm:$0xf]
        %v1623 = vld [vmem:[%s1 + $0x4] sm:$0xf]
        %v1624 = vld [vmem:[%s1 + $0x8] sm:$0xf]
        %v1625 = vld [vmem:[%s1 + $0xc] sm:$0xf]
        %v1626 = vld [vmem:[%s1 + $0x10] sm:$0xf]
        %v1627 = vld [vmem:[%s1 + $0x14] sm:$0xf]
        %v1628 = vld [vmem:[%s1 + $0x18] sm:$0xf]
        %v1629 = vld [vmem:[%s1 + $0x1c] sm:$0xf]
        %v1630 = vld [vmem:[%s1 + $0x20] sm:$0xf]
        %v1631 = vld [vmem:[%s1 + $0x24] sm:$0xf]
        %v1632 = vld [vmem:[%s1 + $0x28] sm:$0xf]
        %v1633 = vld [vmem:[%s1 + $0x2c] sm:$0xf]
        %v1634 = vld [vmem:[%s1 + $0x30] sm:$0xf]
        %v1635 = vld [vmem:[%s1 + $0x34] sm:$0xf]
        %v1636 = vld [vmem:[%s1 + $0x38] sm:$0xf]
        %v1637 = vld [vmem:[%s1 + $0x3c] sm:$0xf]
        %v1654 = vunpack.c.l.b16 %v1622
        %v1655 = vunpack.c.l.b16 %v1623
        %v1656 = vunpack.c.l.b16 %v1624
        %v1657 = vunpack.c.l.b16 %v1625
        %v1658 = vunpack.c.l.b16 %v1626
        %v1659 = vunpack.c.l.b16 %v1627
        %v1660 = vunpack.c.l.b16 %v1628
        %v1661 = vunpack.c.l.b16 %v1629
        %v1662 = vunpack.c.l.b16 %v1630
        %v1663 = vunpack.c.l.b16 %v1631
        %v1664 = vunpack.c.l.b16 %v1632
        %v1665 = vunpack.c.l.b16 %v1633
        %v1666 = vunpack.c.l.b16 %v1634
        %v1667 = vunpack.c.l.b16 %v1635
        %v1668 = vunpack.c.l.b16 %v1636
        %v1669 = vunpack.c.l.b16 %v1637
        %v1670 = vpack.c.b16 %v1655, %v1654
        %v1671 = vpack.c.b16 %v1657, %v1656
        %v1672 = vpack.c.b16 %v1659, %v1658
        %v1673 = vpack.c.b16 %v1661, %v1660
        %v1674 = vpack.c.b16 %v1663, %v1662
        %v1675 = vpack.c.b16 %v1665, %v1664
        %v1676 = vpack.c.b16 %v1667, %v1666
        %v1677 = vpack.c.b16 %v1669, %v1668
        %1686 = vmatprep.subr.bf16.mxu0 0
        %1687 = vmatpush1.bf16.msra.mxu0 %v1614
        %1688 = vmatprep.subr.bf16.mxu0 0
        %1689 = vmatpush1.bf16.msra.mxu0 %v1615
        %1690 = vmatprep.subr.bf16.mxu0 0
        %1691 = vmatpush1.bf16.msra.mxu0 %v1616
        %1692 = vmatprep.subr.bf16.mxu0 0
        %1693 = vmatpush1.bf16.msra.mxu0 %v1617
        %1694 = vmatprep.subr.bf16.mxu0 0
        %1695 = vmatpush1.bf16.msra.mxu0 %v1618
        %1696 = vmatprep.subr.bf16.mxu0 0
        %1697 = vmatpush1.bf16.msra.mxu0 %v1619
        %1698 = vmatprep.subr.bf16.mxu0 0
        %1699 = vmatpush1.bf16.msra.mxu0 %v1620
        %1700 = vmatprep.subr.bf16.mxu0 0
        %1701 = vmatpush1.bf16.msra.mxu0 %v1621
        %1702 = vmatprep.subr.bf16.mxu0 0
        %1703 = vmatpush1.bf16.msra.mxu0 0
        %1704 = vmatprep.subr.bf16.mxu0 0
        %1705 = vmatpush1.bf16.msra.mxu0 0
        %1706 = vmatprep.subr.bf16.mxu0 0
        %1707 = vmatpush1.bf16.msra.mxu0 0
        %1708 = vmatprep.subr.bf16.mxu0 0
        %1709 = vmatpush1.bf16.msra.mxu0 0
        %1710 = vmatprep.subr.bf16.mxu0 0
        %1711 = vmatpush1.bf16.msra.mxu0 0
        %1712 = vmatprep.subr.bf16.mxu0 0
        %1713 = vmatpush1.bf16.msra.mxu0 0
        %1714 = vmatprep.subr.bf16.mxu0 0
        %1715 = vmatpush1.bf16.msra.mxu0 0
        %1716 = vmatprep.subr.bf16.mxu0 0
        %1717 = vmatpush1.bf16.msra.mxu0 0
        %1718 = vmatprep.mubr.bf16.mxu0 0
        %1719 = vmatmul.mubr.bf16.gmra.mrb[0].mxu0 %v1670
        %v1720 = vpop.f32.mrb[0].mxu0
        %v1721 = vadd.f32 0.0, %v1720
        %v1722 = vpop.f32.mrb[0].mxu0
        %v1723 = vpop.f32.mrb[0].mxu0
        %v1724 = vadd.f32 0.0, %v1723
        %v1725 = vpop.f32.mrb[0].mxu0
        %1726 = vmatprep.mubr.bf16.mxu0 0
        %1727 = vmatmul.mubr.bf16.gmra.mrb[0].mxu0 %v1671
        %v1728 = vpop.f32.mrb[0].mxu0
        %v1729 = vadd.f32 0.0, %v1728
        %v1730 = vpop.f32.mrb[0].mxu0
        %v1731 = vpop.f32.mrb[0].mxu0
        %v1732 = vadd.f32 0.0, %v1731
        %v1733 = vpop.f32.mrb[0].mxu0
        %1734 = vmatprep.mubr.bf16.mxu0 0
        %1735 = vmatmul.mubr.bf16.gmra.mrb[0].mxu0 %v1672
        %v1736 = vpop.f32.mrb[0].mxu0
        %v1737 = vadd.f32 0.0, %v1736
        %v1738 = vpop.f32.mrb[0].mxu0
        %v1739 = vpop.f32.mrb[0].mxu0
        %v1740 = vadd.f32 0.0, %v1739
        %v1741 = vpop.f32.mrb[0].mxu0
        %1742 = vmatprep.mubr.bf16.mxu0 0
        %1743 = vmatmul.mubr.bf16.gmra.mrb[0].mxu0 %v1673
        %v1744 = vpop.f32.mrb[0].mxu0
        %v1745 = vadd.f32 0.0, %v1744
        %v1746 = vpop.f32.mrb[0].mxu0
        %v1747 = vpop.f32.mrb[0].mxu0
        %v1748 = vadd.f32 0.0, %v1747
        %v1749 = vpop.f32.mrb[0].mxu0
        %1750 = vmatprep.mubr.bf16.mxu0 0
        %1751 = vmatmul.mubr.bf16.gmra.mrb[0].mxu0 %v1674
        %v1752 = vpop.f32.mrb[0].mxu0
        %v1753 = vadd.f32 0.0, %v1752
        %v1754 = vpop.f32.mrb[0].mxu0
        %v1755 = vpop.f32.mrb[0].mxu0
        %v1756 = vadd.f32 0.0, %v1755
        %v1757 = vpop.f32.mrb[0].mxu0
        %1758 = vmatprep.mubr.bf16.mxu0 0
        %1759 = vmatmul.mubr.bf16.gmra.mrb[0].mxu0 %v1675
        %v1760 = vpop.f32.mrb[0].mxu0
        %v1761 = vadd.f32 0.0, %v1760
        %v1762 = vpop.f32.mrb[0].mxu0
        %v1763 = vpop.f32.mrb[0].mxu0
        %v1764 = vadd.f32 0.0, %v1763
        %v1765 = vpop.f32.mrb[0].mxu0
        %1766 = vmatprep.mubr.bf16.mxu0 0
        %1767 = vmatmul.mubr.bf16.gmra.mrb[0].mxu0 %v1676
        %v1768 = vpop.f32.mrb[0].mxu0
        %v1769 = vadd.f32 0.0, %v1768
        %v1770 = vpop.f32.mrb[0].mxu0
        %v1771 = vpop.f32.mrb[0].mxu0
        %v1772 = vadd.f32 0.0, %v1771
        %v1773 = vpop.f32.mrb[0].mxu0
        %1774 = vmatprep.mubr.bf16.mxu0 0
        %1775 = vmatmul.mubr.bf16.gmra.mrb[0].mxu0 %v1677
        %v1776 = vpop.f32.mrb[0].mxu0
        %v1777 = vadd.f32 0.0, %v1776
        %v1778 = vpop.f32.mrb[0].mxu0
        %v1779 = vpop.f32.mrb[0].mxu0
        %v1780 = vadd.f32 0.0, %v1779
        %v1781 = vpop.f32.mrb[0].mxu0
        %1782 = vdwg.mxu0
        %v1783 = vmul.f32 %v1721, %v956
        %v1784 = vmul.f32 %v1724, %v957
        %v1785 = vmul.f32 %v1729, %v958
        %v1786 = vmul.f32 %v1732, %v959
        %v1787 = vmul.f32 %v1737, %v960
        %v1788 = vmul.f32 %v1740, %v961
        %v1789 = vmul.f32 %v1745, %v962
        %v1790 = vmul.f32 %v1748, %v963
        %v1791 = vmul.f32 %v1753, %v964
        %v1792 = vmul.f32 %v1756, %v965
        %v1793 = vmul.f32 %v1761, %v966
        %v1794 = vmul.f32 %v1764, %v967
        %v1795 = vmul.f32 %v1769, %v968
        %v1796 = vmul.f32 %v1772, %v969
        %v1797 = vmul.f32 %v1777, %v970
        %v1798 = vmul.f32 %v1780, %v971
        %vm1799 = vcmp.lt.f32.partialorder %v1783, 20.0
        %vm1800 = vcmp.lt.f32.partialorder %v1784, 20.0
        %vm1801 = vcmp.lt.f32.partialorder %v1785, 20.0
        %vm1802 = vcmp.lt.f32.partialorder %v1786, 20.0
        %vm1803 = vcmp.lt.f32.partialorder %v1787, 20.0
        %vm1804 = vcmp.lt.f32.partialorder %v1788, 20.0
        %vm1805 = vcmp.lt.f32.partialorder %v1789, 20.0
        %vm1806 = vcmp.lt.f32.partialorder %v1790, 20.0
        %vm1807 = vcmp.lt.f32.partialorder %v1791, 20.0
        %vm1808 = vcmp.lt.f32.partialorder %v1792, 20.0
        %vm1809 = vcmp.lt.f32.partialorder %v1793, 20.0
        %vm1810 = vcmp.lt.f32.partialorder %v1794, 20.0
        %vm1811 = vcmp.lt.f32.partialorder %v1795, 20.0
        %vm1812 = vcmp.lt.f32.partialorder %v1796, 20.0
        %vm1813 = vcmp.lt.f32.partialorder %v1797, 20.0
        %vm1814 = vcmp.lt.f32.partialorder %v1798, 20.0
        %v1815 = vsel %vm1799, 1, 0
        %v1816 = vsel %vm1800, 1, 0
        %v1817 = vsel %vm1801, 1, 0
        %v1818 = vsel %vm1802, 1, 0
        %v1819 = vsel %vm1803, 1, 0
        %v1820 = vsel %vm1804, 1, 0
        %v1821 = vsel %vm1805, 1, 0
        %v1822 = vsel %vm1806, 1, 0
        %v1823 = vsel %vm1807, 1, 0
        %v1824 = vsel %vm1808, 1, 0
        %v1825 = vsel %vm1809, 1, 0
        %v1826 = vsel %vm1810, 1, 0
        %v1827 = vsel %vm1811, 1, 0
        %v1828 = vsel %vm1812, 1, 0
        %v1829 = vsel %vm1813, 1, 0
        %v1830 = vsel %vm1814, 1, 0
        %v1831 = vcvt.s32.f32 %v1815
        %v1832 = vcvt.s32.f32 %v1816
        %v1833 = vcvt.s32.f32 %v1817
        %v1834 = vcvt.s32.f32 %v1818
        %v1835 = vcvt.s32.f32 %v1819
        %v1836 = vcvt.s32.f32 %v1820
        %v1837 = vcvt.s32.f32 %v1821
        %v1838 = vcvt.s32.f32 %v1822
        %v1839 = vcvt.s32.f32 %v1823
        %v1840 = vcvt.s32.f32 %v1824
        %v1841 = vcvt.s32.f32 %v1825
        %v1842 = vcvt.s32.f32 %v1826
        %v1843 = vcvt.s32.f32 %v1827
        %v1844 = vcvt.s32.f32 %v1828
        %v1845 = vcvt.s32.f32 %v1829
        %v1846 = vcvt.s32.f32 %v1830
        %v1847 = vmul.f32 %v956, %v1831
        %v1848 = vmul.f32 %v957, %v1832
        %v1849 = vmul.f32 %v958, %v1833
        %v1850 = vmul.f32 %v959, %v1834
        %v1851 = vmul.f32 %v960, %v1835
        %v1852 = vmul.f32 %v961, %v1836
        %v1853 = vmul.f32 %v962, %v1837
        %v1854 = vmul.f32 %v963, %v1838
        %v1855 = vmul.f32 %v964, %v1839
        %v1856 = vmul.f32 %v965, %v1840
        %v1857 = vmul.f32 %v966, %v1841
        %v1858 = vmul.f32 %v967, %v1842
        %v1859 = vmul.f32 %v968, %v1843
        %v1860 = vmul.f32 %v969, %v1844
        %v1861 = vmul.f32 %v970, %v1845
        %v1862 = vmul.f32 %v971, %v1846
        %v1863 = vsel %vm425, %v1847, 0.0
        %v1864 = vsel %vm425, %v1848, 0.0
        %v1865 = vadd.f32 %v1863, %v1864
        %v1866 = vsel %vm425, %v1849, 0.0
        %v1867 = vadd.f32 %v1865, %v1866
        %v1868 = vsel %vm425, %v1850, 0.0
        %v1869 = vadd.f32 %v1867, %v1868
        %v1870 = vsel %vm425, %v1851, 0.0
        %v1871 = vadd.f32 %v1869, %v1870
        %v1872 = vsel %vm425, %v1852, 0.0
        %v1873 = vadd.f32 %v1871, %v1872
        %v1874 = vsel %vm425, %v1853, 0.0
        %v1875 = vadd.f32 %v1873, %v1874
        %v1876 = vsel %vm425, %v1854, 0.0
        %v1877 = vadd.f32 %v1875, %v1876
        %v1878 = vsel %vm425, %v1855, 0.0
        %v1879 = vadd.f32 %v1877, %v1878
        %v1880 = vsel %vm425, %v1856, 0.0
        %v1881 = vadd.f32 %v1879, %v1880
        %v1882 = vsel %vm425, %v1857, 0.0
        %v1883 = vadd.f32 %v1881, %v1882
        %v1884 = vsel %vm425, %v1858, 0.0
        %v1885 = vadd.f32 %v1883, %v1884
        %v1886 = vsel %vm425, %v1859, 0.0
        %v1887 = vadd.f32 %v1885, %v1886
        %v1888 = vsel %vm425, %v1860, 0.0
        %v1889 = vadd.f32 %v1887, %v1888
        %v1890 = vsel %vm425, %v1861, 0.0
        %v1891 = vadd.f32 %v1889, %v1890
        %v1892 = vsel %vm425, %v1862, 0.0
        %v1893 = vadd.f32 %v1891, %v1892
        %v1894 = vrot.slane %v1893, 4
        %v1895 = vadd.f32 %v1893, %v1894
        %v1896 = vrot.slane %v1895, 2
        %v1897 = vadd.f32 %v1895, %v1896
        %v1898 = vrot.slane %v1897, 1
        %v1899 = vadd.f32 %v1897, %v1898
        %1900 = vadd.xlane.f32.xlu0 %v1863
        %v1901 = vpop.xlane.xlu0 %1900
        %1902 = vadd.xlane.f32.xlu0 %v1864
        %v1903 = vpop.xlane.xlu0 %1902
        %1904 = vadd.xlane.f32.xlu0 %v1866
        %v1905 = vpop.xlane.xlu0 %1904
        %1906 = vadd.xlane.f32.xlu0 %v1868
        %v1907 = vpop.xlane.xlu0 %1906
        %1908 = vadd.xlane.f32.xlu0 %v1870
        %v1909 = vpop.xlane.xlu0 %1908
        %1910 = vadd.xlane.f32.xlu0 %v1872
        %v1911 = vpop.xlane.xlu0 %1910
        %1912 = vadd.xlane.f32.xlu0 %v1874
        %v1913 = vpop.xlane.xlu0 %1912
        %1914 = vadd.xlane.f32.xlu0 %v1876
        %v1915 = vpop.xlane.xlu0 %1914
        %1916 = vadd.xlane.f32.xlu0 %v1878
        %v1917 = vpop.xlane.xlu0 %1916
        %1918 = vadd.xlane.f32.xlu0 %v1880
        %v1919 = vpop.xlane.xlu0 %1918
        %1920 = vadd.xlane.f32.xlu0 %v1882
        %v1921 = vpop.xlane.xlu0 %1920
        %1922 = vadd.xlane.f32.xlu0 %v1884
        %v1923 = vpop.xlane.xlu0 %1922
        %1924 = vadd.xlane.f32.xlu0 %v1886
        %v1925 = vpop.xlane.xlu0 %1924
        %1926 = vadd.xlane.f32.xlu0 %v1888
        %v1927 = vpop.xlane.xlu0 %1926
        %1928 = vadd.xlane.f32.xlu0 %v1890
        %v1929 = vpop.xlane.xlu0 %1928
        %1930 = vadd.xlane.f32.xlu0 %v1892
        %v1931 = vpop.xlane.xlu0 %1930
        %v1932 = vsel %vm425, %v1783, 0.0
        %1933 = vadd.xlane.f32.xlu0 %v1932
        %v1934 = vpop.xlane.xlu0 %1933
        %v1935 = vsel %vm425, %v1784, 0.0
        %1936 = vadd.xlane.f32.xlu0 %v1935
        %v1937 = vpop.xlane.xlu0 %1936
        %v1938 = vsel %vm425, %v1785, 0.0
        %1939 = vadd.xlane.f32.xlu0 %v1938
        %v1940 = vpop.xlane.xlu0 %1939
        %v1941 = vsel %vm425, %v1786, 0.0
        %1942 = vadd.xlane.f32.xlu0 %v1941
        %v1943 = vpop.xlane.xlu0 %1942
        %v1944 = vsel %vm425, %v1787, 0.0
        %1945 = vadd.xlane.f32.xlu0 %v1944
        %v1946 = vpop.xlane.xlu0 %1945
        %v1947 = vsel %vm425, %v1788, 0.0
        %1948 = vadd.xlane.f32.xlu0 %v1947
        %v1949 = vpop.xlane.xlu0 %1948
        %v1950 = vsel %vm425, %v1789, 0.0
        %1951 = vadd.xlane.f32.xlu0 %v1950
        %v1952 = vpop.xlane.xlu0 %1951
        %v1953 = vsel %vm425, %v1790, 0.0
        %1954 = vadd.xlane.f32.xlu0 %v1953
        %v1955 = vpop.xlane.xlu0 %1954
        %v1956 = vsel %vm425, %v1791, 0.0
        %1957 = vadd.xlane.f32.xlu0 %v1956
        %v1958 = vpop.xlane.xlu0 %1957
        %v1959 = vsel %vm425, %v1792, 0.0
        %1960 = vadd.xlane.f32.xlu0 %v1959
        %v1961 = vpop.xlane.xlu0 %1960
        %v1962 = vsel %vm425, %v1793, 0.0
        %1963 = vadd.xlane.f32.xlu0 %v1962
        %v1964 = vpop.xlane.xlu0 %1963
        %v1965 = vsel %vm425, %v1794, 0.0
        %1966 = vadd.xlane.f32.xlu0 %v1965
        %v1967 = vpop.xlane.xlu0 %1966
        %v1968 = vsel %vm425, %v1795, 0.0
        %1969 = vadd.xlane.f32.xlu0 %v1968
        %v1970 = vpop.xlane.xlu0 %1969
        %v1971 = vsel %vm425, %v1796, 0.0
        %1972 = vadd.xlane.f32.xlu0 %v1971
        %v1973 = vpop.xlane.xlu0 %1972
        %v1974 = vsel %vm425, %v1797, 0.0
        %1975 = vadd.xlane.f32.xlu0 %v1974
        %v1976 = vpop.xlane.xlu0 %1975
        %v1977 = vsel %vm425, %v1798, 0.0
        %1978 = vadd.xlane.f32.xlu0 %v1977
        %v1979 = vpop.xlane.xlu0 %1978
        %v1980 = vmul.f32 %v1405, %v1901
        %v1981 = vmul.f32 %v1407, %v1903
        %v1982 = vmul.f32 %v1409, %v1905
        %v1983 = vmul.f32 %v1411, %v1907
        %v1984 = vmul.f32 %v1413, %v1909
        %v1985 = vmul.f32 %v1415, %v1911
        %v1986 = vmul.f32 %v1417, %v1913
        %v1987 = vmul.f32 %v1419, %v1915
        %v1988 = vmul.f32 %v1421, %v1917
        %v1989 = vmul.f32 %v1423, %v1919
        %v1990 = vmul.f32 %v1425, %v1921
        %v1991 = vmul.f32 %v1427, %v1923
        %v1992 = vmul.f32 %v1429, %v1925
        %v1993 = vmul.f32 %v1431, %v1927
        %v1994 = vmul.f32 %v1433, %v1929
        %v1995 = vmul.f32 %v1435, %v1931
        %1997 = vrot.lane.b32.xlu0 %v1899, 8
        %v1998 = vpop.permute.xlu0 %1997
        %v2000 = vadd.f32 %v1721, %v1998
        %v2001 = vadd.f32 %v1724, %v1998
        %v2002 = vadd.f32 %v1729, %v1998
        %v2003 = vadd.f32 %v1732, %v1998
        %v2004 = vadd.f32 %v1737, %v1998
        %v2005 = vadd.f32 %v1740, %v1998
        %v2006 = vadd.f32 %v1745, %v1998
        %v2007 = vadd.f32 %v1748, %v1998
        %v2008 = vadd.f32 %v1753, %v1998
        %v2009 = vadd.f32 %v1756, %v1998
        %v2010 = vadd.f32 %v1761, %v1998
        %v2011 = vadd.f32 %v1764, %v1998
        %v2012 = vadd.f32 %v1769, %v1998
        %v2013 = vadd.f32 %v1772, %v1998
        %v2014 = vadd.f32 %v1777, %v1998
        %v2015 = vadd.f32 %v1780, %v1998
        %2032 = vrot.lane.b32.xlu0 %v1356, 8
        %v2033 = vpop.permute.xlu0 %2032
        %2034 = vrot.lane.b32.xlu0 %v1357, 8
        %v2035 = vpop.permute.xlu0 %2034
        %2036 = vrot.lane.b32.xlu0 %v1358, 8
        %v2037 = vpop.permute.xlu0 %2036
        %2038 = vrot.lane.b32.xlu0 %v1359, 8
        %v2039 = vpop.permute.xlu0 %2038
        %2040 = vrot.lane.b32.xlu0 %v1360, 8
        %v2041 = vpop.permute.xlu0 %2040
        %2042 = vrot.lane.b32.xlu0 %v1361, 8
        %v2043 = vpop.permute.xlu0 %2042
        %2044 = vrot.lane.b32.xlu0 %v1362, 8
        %v2045 = vpop.permute.xlu0 %2044
        %2046 = vrot.lane.b32.xlu0 %v1363, 8
        %v2047 = vpop.permute.xlu0 %2046
        %2048 = vrot.lane.b32.xlu0 %v1364, 8
        %v2049 = vpop.permute.xlu0 %2048
        %2050 = vrot.lane.b32.xlu0 %v1365, 8
        %v2051 = vpop.permute.xlu0 %2050
        %2052 = vrot.lane.b32.xlu0 %v1366, 8
        %v2053 = vpop.permute.xlu0 %2052
        %2054 = vrot.lane.b32.xlu0 %v1367, 8
        %v2055 = vpop.permute.xlu0 %2054
        %2056 = vrot.lane.b32.xlu0 %v1368, 8
        %v2057 = vpop.permute.xlu0 %2056
        %2058 = vrot.lane.b32.xlu0 %v1369, 8
        %v2059 = vpop.permute.xlu0 %2058
        %2060 = vrot.lane.b32.xlu0 %v1370, 8
        %v2061 = vpop.permute.xlu0 %2060
        %2062 = vrot.lane.b32.xlu0 %v1371, 8
        %v2063 = vpop.permute.xlu0 %2062
        %v2080 = vmul.f32 %v2000, %v2033
        %v2081 = vmul.f32 %v2001, %v2035
        %v2082 = vmul.f32 %v2002, %v2037
        %v2083 = vmul.f32 %v2003, %v2039
        %v2084 = vmul.f32 %v2004, %v2041
        %v2085 = vmul.f32 %v2005, %v2043
        %v2086 = vmul.f32 %v2006, %v2045
        %v2087 = vmul.f32 %v2007, %v2047
        %v2088 = vmul.f32 %v2008, %v2049
        %v2089 = vmul.f32 %v2009, %v2051
        %v2090 = vmul.f32 %v2010, %v2053
        %v2091 = vmul.f32 %v2011, %v2055
        %v2092 = vmul.f32 %v2012, %v2057
        %v2093 = vmul.f32 %v2013, %v2059
        %v2094 = vmul.f32 %v2014, %v2061
        %v2095 = vmul.f32 %v2015, %v2063
        %vm2096 = vcmp.lt.f32.partialorder %v2080, 20.0
        %vm2097 = vcmp.lt.f32.partialorder %v2081, 20.0
        %vm2098 = vcmp.lt.f32.partialorder %v2082, 20.0
        %vm2099 = vcmp.lt.f32.partialorder %v2083, 20.0
        %vm2100 = vcmp.lt.f32.partialorder %v2084, 20.0
        %vm2101 = vcmp.lt.f32.partialorder %v2085, 20.0
        %vm2102 = vcmp.lt.f32.partialorder %v2086, 20.0
        %vm2103 = vcmp.lt.f32.partialorder %v2087, 20.0
        %vm2104 = vcmp.lt.f32.partialorder %v2088, 20.0
        %vm2105 = vcmp.lt.f32.partialorder %v2089, 20.0
        %vm2106 = vcmp.lt.f32.partialorder %v2090, 20.0
        %vm2107 = vcmp.lt.f32.partialorder %v2091, 20.0
        %vm2108 = vcmp.lt.f32.partialorder %v2092, 20.0
        %vm2109 = vcmp.lt.f32.partialorder %v2093, 20.0
        %vm2110 = vcmp.lt.f32.partialorder %v2094, 20.0
        %vm2111 = vcmp.lt.f32.partialorder %v2095, 20.0
        %v2112 = vsel %vm2096, 1, 0
        %v2113 = vsel %vm2097, 1, 0
        %v2114 = vsel %vm2098, 1, 0
        %v2115 = vsel %vm2099, 1, 0
        %v2116 = vsel %vm2100, 1, 0
        %v2117 = vsel %vm2101, 1, 0
        %v2118 = vsel %vm2102, 1, 0
        %v2119 = vsel %vm2103, 1, 0
        %v2120 = vsel %vm2104, 1, 0
        %v2121 = vsel %vm2105, 1, 0
        %v2122 = vsel %vm2106, 1, 0
        %v2123 = vsel %vm2107, 1, 0
        %v2124 = vsel %vm2108, 1, 0
        %v2125 = vsel %vm2109, 1, 0
        %v2126 = vsel %vm2110, 1, 0
        %v2127 = vsel %vm2111, 1, 0
        %v2128 = vcvt.s32.f32 %v2112
        %v2129 = vcvt.s32.f32 %v2113
        %v2130 = vcvt.s32.f32 %v2114
        %v2131 = vcvt.s32.f32 %v2115
        %v2132 = vcvt.s32.f32 %v2116
        %v2133 = vcvt.s32.f32 %v2117
        %v2134 = vcvt.s32.f32 %v2118
        %v2135 = vcvt.s32.f32 %v2119
        %v2136 = vcvt.s32.f32 %v2120
        %v2137 = vcvt.s32.f32 %v2121
        %v2138 = vcvt.s32.f32 %v2122
        %v2139 = vcvt.s32.f32 %v2123
        %v2140 = vcvt.s32.f32 %v2124
        %v2141 = vcvt.s32.f32 %v2125
        %v2142 = vcvt.s32.f32 %v2126
        %v2143 = vcvt.s32.f32 %v2127
        %2160 = vrot.lane.b32.xlu0 %v2128, 120
        %v2161 = vpop.permute.xlu0 %2160
        %2162 = vrot.lane.b32.xlu0 %v2129, 120
        %v2163 = vpop.permute.xlu0 %2162
        %2164 = vrot.lane.b32.xlu0 %v2130, 120
        %v2165 = vpop.permute.xlu0 %2164
        %2166 = vrot.lane.b32.xlu0 %v2131, 120
        %v2167 = vpop.permute.xlu0 %2166
        %2168 = vrot.lane.b32.xlu0 %v2132, 120
        %v2169 = vpop.permute.xlu0 %2168
        %2170 = vrot.lane.b32.xlu0 %v2133, 120
        %v2171 = vpop.permute.xlu0 %2170
        %2172 = vrot.lane.b32.xlu0 %v2134, 120
        %v2173 = vpop.permute.xlu0 %2172
        %2174 = vrot.lane.b32.xlu0 %v2135, 120
        %v2175 = vpop.permute.xlu0 %2174
        %2176 = vrot.lane.b32.xlu0 %v2136, 120
        %v2177 = vpop.permute.xlu0 %2176
        %2178 = vrot.lane.b32.xlu0 %v2137, 120
        %v2179 = vpop.permute.xlu0 %2178
        %2180 = vrot.lane.b32.xlu0 %v2138, 120
        %v2181 = vpop.permute.xlu0 %2180
        %2182 = vrot.lane.b32.xlu0 %v2139, 120
        %v2183 = vpop.permute.xlu0 %2182
        %2184 = vrot.lane.b32.xlu0 %v2140, 120
        %v2185 = vpop.permute.xlu0 %2184
        %2186 = vrot.lane.b32.xlu0 %v2141, 120
        %v2187 = vpop.permute.xlu0 %2186
        %2188 = vrot.lane.b32.xlu0 %v2142, 120
        %v2189 = vpop.permute.xlu0 %2188
        %2190 = vrot.lane.b32.xlu0 %v2143, 120
        %v2191 = vpop.permute.xlu0 %2190
        %v2208 = vmul.f32 %v1356, %v2161
        %v2209 = vmul.f32 %v1357, %v2163
        %v2210 = vmul.f32 %v1358, %v2165
        %v2211 = vmul.f32 %v1359, %v2167
        %v2212 = vmul.f32 %v1360, %v2169
        %v2213 = vmul.f32 %v1361, %v2171
        %v2214 = vmul.f32 %v1362, %v2173
        %v2215 = vmul.f32 %v1363, %v2175
        %v2216 = vmul.f32 %v1364, %v2177
        %v2217 = vmul.f32 %v1365, %v2179
        %v2218 = vmul.f32 %v1366, %v2181
        %v2219 = vmul.f32 %v1367, %v2183
        %v2220 = vmul.f32 %v1368, %v2185
        %v2221 = vmul.f32 %v1369, %v2187
        %v2222 = vmul.f32 %v1370, %v2189
        %v2223 = vmul.f32 %v1371, %v2191
        %v2224 = vsel %vm425, %v2208, 0.0
        %2225 = vadd.xlane.f32.xlu0 %v2224
        %v2226 = vpop.xlane.xlu0 %2225
        %v2227 = vsel %vm425, %v2209, 0.0
        %2228 = vadd.xlane.f32.xlu0 %v2227
        %v2229 = vpop.xlane.xlu0 %2228
        %v2230 = vsel %vm425, %v2210, 0.0
        %2231 = vadd.xlane.f32.xlu0 %v2230
        %v2232 = vpop.xlane.xlu0 %2231
        %v2233 = vsel %vm425, %v2211, 0.0
        %2234 = vadd.xlane.f32.xlu0 %v2233
        %v2235 = vpop.xlane.xlu0 %2234
        %v2236 = vsel %vm425, %v2212, 0.0
        %2237 = vadd.xlane.f32.xlu0 %v2236
        %v2238 = vpop.xlane.xlu0 %2237
        %v2239 = vsel %vm425, %v2213, 0.0
        %2240 = vadd.xlane.f32.xlu0 %v2239
        %v2241 = vpop.xlane.xlu0 %2240
        %v2242 = vsel %vm425, %v2214, 0.0
        %2243 = vadd.xlane.f32.xlu0 %v2242
        %v2244 = vpop.xlane.xlu0 %2243
        %v2245 = vsel %vm425, %v2215, 0.0
        %2246 = vadd.xlane.f32.xlu0 %v2245
        %v2247 = vpop.xlane.xlu0 %2246
        %v2248 = vsel %vm425, %v2216, 0.0
        %2249 = vadd.xlane.f32.xlu0 %v2248
        %v2250 = vpop.xlane.xlu0 %2249
        %v2251 = vsel %vm425, %v2217, 0.0
        %2252 = vadd.xlane.f32.xlu0 %v2251
        %v2253 = vpop.xlane.xlu0 %2252
        %v2254 = vsel %vm425, %v2218, 0.0
        %2255 = vadd.xlane.f32.xlu0 %v2254
        %v2256 = vpop.xlane.xlu0 %2255
        %v2257 = vsel %vm425, %v2219, 0.0
        %2258 = vadd.xlane.f32.xlu0 %v2257
        %v2259 = vpop.xlane.xlu0 %2258
        %v2260 = vsel %vm425, %v2220, 0.0
        %2261 = vadd.xlane.f32.xlu0 %v2260
        %v2262 = vpop.xlane.xlu0 %2261
        %v2263 = vsel %vm425, %v2221, 0.0
        %2264 = vadd.xlane.f32.xlu0 %v2263
        %v2265 = vpop.xlane.xlu0 %2264
        %v2266 = vsel %vm425, %v2222, 0.0
        %2267 = vadd.xlane.f32.xlu0 %v2266
        %v2268 = vpop.xlane.xlu0 %2267
        %v2269 = vsel %vm425, %v2223, 0.0
        %2270 = vadd.xlane.f32.xlu0 %v2269
        %v2271 = vpop.xlane.xlu0 %2270
        %v2272 = vadd.f32 %v2224, %v2227
        %v2273 = vadd.f32 %v2272, %v2230
        %v2274 = vadd.f32 %v2273, %v2233
        %v2275 = vadd.f32 %v2274, %v2236
        %v2276 = vadd.f32 %v2275, %v2239
        %v2277 = vadd.f32 %v2276, %v2242
        %v2278 = vadd.f32 %v2277, %v2245
        %v2279 = vadd.f32 %v2278, %v2248
        %v2280 = vadd.f32 %v2279, %v2251
        %v2281 = vadd.f32 %v2280, %v2254
        %v2282 = vadd.f32 %v2281, %v2257
        %v2283 = vadd.f32 %v2282, %v2260
        %v2284 = vadd.f32 %v2283, %v2263
        %v2285 = vadd.f32 %v2284, %v2266
        %v2286 = vadd.f32 %v2285, %v2269
        %v2287 = vrot.slane %v2286, 4
        %v2288 = vadd.f32 %v2286, %v2287
        %v2289 = vrot.slane %v2288, 2
        %v2290 = vadd.f32 %v2288, %v2289
        %v2291 = vrot.slane %v2290, 1
        %v2292 = vadd.f32 %v2290, %v2291
        %2309 = vrot.lane.b32.xlu0 %v2080, 120
        %v2310 = vpop.permute.xlu0 %2309
        %2311 = vrot.lane.b32.xlu0 %v2081, 120
        %v2312 = vpop.permute.xlu0 %2311
        %2313 = vrot.lane.b32.xlu0 %v2082, 120
        %v2314 = vpop.permute.xlu0 %2313
        %2315 = vrot.lane.b32.xlu0 %v2083, 120
        %v2316 = vpop.permute.xlu0 %2315
        %2317 = vrot.lane.b32.xlu0 %v2084, 120
        %v2318 = vpop.permute.xlu0 %2317
        %2319 = vrot.lane.b32.xlu0 %v2085, 120
        %v2320 = vpop.permute.xlu0 %2319
        %2321 = vrot.lane.b32.xlu0 %v2086, 120
        %v2322 = vpop.permute.xlu0 %2321
        %2323 = vrot.lane.b32.xlu0 %v2087, 120
        %v2324 = vpop.permute.xlu0 %2323
        %2325 = vrot.lane.b32.xlu0 %v2088, 120
        %v2326 = vpop.permute.xlu0 %2325
        %2327 = vrot.lane.b32.xlu0 %v2089, 120
        %v2328 = vpop.permute.xlu0 %2327
        %2329 = vrot.lane.b32.xlu0 %v2090, 120
        %v2330 = vpop.permute.xlu0 %2329
        %2331 = vrot.lane.b32.xlu0 %v2091, 120
        %v2332 = vpop.permute.xlu0 %2331
        %2333 = vrot.lane.b32.xlu0 %v2092, 120
        %v2334 = vpop.permute.xlu0 %2333
        %2335 = vrot.lane.b32.xlu0 %v2093, 120
        %v2336 = vpop.permute.xlu0 %2335
        %2337 = vrot.lane.b32.xlu0 %v2094, 120
        %v2338 = vpop.permute.xlu0 %2337
        %2339 = vrot.lane.b32.xlu0 %v2095, 120
        %v2340 = vpop.permute.xlu0 %2339
        %v2357 = vsel %vm425, %v2310, 0.0
        %2358 = vadd.xlane.f32.xlu0 %v2357
        %v2359 = vpop.xlane.xlu0 %2358
        %v2360 = vsel %vm425, %v2312, 0.0
        %2361 = vadd.xlane.f32.xlu0 %v2360
        %v2362 = vpop.xlane.xlu0 %2361
        %v2363 = vsel %vm425, %v2314, 0.0
        %2364 = vadd.xlane.f32.xlu0 %v2363
        %v2365 = vpop.xlane.xlu0 %2364
        %v2366 = vsel %vm425, %v2316, 0.0
        %2367 = vadd.xlane.f32.xlu0 %v2366
        %v2368 = vpop.xlane.xlu0 %2367
        %v2369 = vsel %vm425, %v2318, 0.0
        %2370 = vadd.xlane.f32.xlu0 %v2369
        %v2371 = vpop.xlane.xlu0 %2370
        %v2372 = vsel %vm425, %v2320, 0.0
        %2373 = vadd.xlane.f32.xlu0 %v2372
        %v2374 = vpop.xlane.xlu0 %2373
        %v2375 = vsel %vm425, %v2322, 0.0
        %2376 = vadd.xlane.f32.xlu0 %v2375
        %v2377 = vpop.xlane.xlu0 %2376
        %v2378 = vsel %vm425, %v2324, 0.0
        %2379 = vadd.xlane.f32.xlu0 %v2378
        %v2380 = vpop.xlane.xlu0 %2379
        %v2381 = vsel %vm425, %v2326, 0.0
        %2382 = vadd.xlane.f32.xlu0 %v2381
        %v2383 = vpop.xlane.xlu0 %2382
        %v2384 = vsel %vm425, %v2328, 0.0
        %2385 = vadd.xlane.f32.xlu0 %v2384
        %v2386 = vpop.xlane.xlu0 %2385
        %v2387 = vsel %vm425, %v2330, 0.0
        %2388 = vadd.xlane.f32.xlu0 %v2387
        %v2389 = vpop.xlane.xlu0 %2388
        %v2390 = vsel %vm425, %v2332, 0.0
        %2391 = vadd.xlane.f32.xlu0 %v2390
        %v2392 = vpop.xlane.xlu0 %2391
        %v2393 = vsel %vm425, %v2334, 0.0
        %2394 = vadd.xlane.f32.xlu0 %v2393
        %v2395 = vpop.xlane.xlu0 %2394
        %v2396 = vsel %vm425, %v2336, 0.0
        %2397 = vadd.xlane.f32.xlu0 %v2396
        %v2398 = vpop.xlane.xlu0 %2397
        %v2399 = vsel %vm425, %v2338, 0.0
        %2400 = vadd.xlane.f32.xlu0 %v2399
        %v2401 = vpop.xlane.xlu0 %2400
        %v2402 = vsel %vm425, %v2340, 0.0
        %2403 = vadd.xlane.f32.xlu0 %v2402
        %v2404 = vpop.xlane.xlu0 %2403
        %v2405 = vmul.f32 %v1436, %v2226
        %v2406 = vmul.f32 %v1437, %v2229
        %v2407 = vmul.f32 %v1438, %v2232
        %v2408 = vmul.f32 %v1439, %v2235
        %v2409 = vmul.f32 %v1440, %v2238
        %v2410 = vmul.f32 %v1441, %v2241
        %v2411 = vmul.f32 %v1442, %v2244
        %v2412 = vmul.f32 %v1443, %v2247
        %v2413 = vmul.f32 %v1444, %v2250
        %v2414 = vmul.f32 %v1445, %v2253
        %v2415 = vmul.f32 %v1446, %v2256
        %v2416 = vmul.f32 %v1447, %v2259
        %v2417 = vmul.f32 %v1448, %v2262
        %v2418 = vmul.f32 %v1449, %v2265
        %v2419 = vmul.f32 %v1450, %v2268
        %v2420 = vmul.f32 %v1451, %v2271
        %v2421 = vcvt.f32.s32.to.zero.pseudo %v1934
        %v2422 = vcvt.f32.s32.to.zero.pseudo %v1937
        %v2423 = vcvt.f32.s32.to.zero.pseudo %v1940
        %v2424 = vcvt.f32.s32.to.zero.pseudo %v1943
        %v2425 = vcvt.f32.s32.to.zero.pseudo %v1946
        %v2426 = vcvt.f32.s32.to.zero.pseudo %v1949
        %v2427 = vcvt.f32.s32.to.zero.pseudo %v1952
        %v2428 = vcvt.f32.s32.to.zero.pseudo %v1955
        %v2429 = vcvt.f32.s32.to.zero.pseudo %v1958
        %v2430 = vcvt.f32.s32.to.zero.pseudo %v1961
        %v2431 = vcvt.f32.s32.to.zero.pseudo %v1964
        %v2432 = vcvt.f32.s32.to.zero.pseudo %v1967
        %v2433 = vcvt.f32.s32.to.zero.pseudo %v1970
        %v2434 = vcvt.f32.s32.to.zero.pseudo %v1973
        %v2435 = vcvt.f32.s32.to.zero.pseudo %v1976
        %v2436 = vcvt.f32.s32.to.zero.pseudo %v1979
        %vm2437 = vcmp.eq.s32.totalorder %v603, %v2421
        %vm2438 = vcmp.eq.s32.totalorder %v603, %v2422
        %vm2439 = vcmp.eq.s32.totalorder %v603, %v2423
        %vm2440 = vcmp.eq.s32.totalorder %v603, %v2424
        %vm2441 = vcmp.eq.s32.totalorder %v603, %v2425
        %vm2442 = vcmp.eq.s32.totalorder %v603, %v2426
        %vm2443 = vcmp.eq.s32.totalorder %v603, %v2427
        %vm2444 = vcmp.eq.s32.totalorder %v603, %v2428
        %vm2445 = vcmp.eq.s32.totalorder %v603, %v2429
        %vm2446 = vcmp.eq.s32.totalorder %v603, %v2430
        %vm2447 = vcmp.eq.s32.totalorder %v603, %v2431
        %vm2448 = vcmp.eq.s32.totalorder %v603, %v2432
        %vm2449 = vcmp.eq.s32.totalorder %v603, %v2433
        %vm2450 = vcmp.eq.s32.totalorder %v603, %v2434
        %vm2451 = vcmp.eq.s32.totalorder %v603, %v2435
        %vm2452 = vcmp.eq.s32.totalorder %v603, %v2436
        %v2453 = vsel %vm2437, %v1980, 0.0
        %v2454 = vsel %vm2438, %v1981, 0.0
        %v2455 = vsel %vm2439, %v1982, 0.0
        %v2456 = vsel %vm2440, %v1983, 0.0
        %v2457 = vsel %vm2441, %v1984, 0.0
        %v2458 = vsel %vm2442, %v1985, 0.0
        %v2459 = vsel %vm2443, %v1986, 0.0
        %v2460 = vsel %vm2444, %v1987, 0.0
        %v2461 = vsel %vm2445, %v1988, 0.0
        %v2462 = vsel %vm2446, %v1989, 0.0
        %v2463 = vsel %vm2447, %v1990, 0.0
        %v2464 = vsel %vm2448, %v1991, 0.0
        %v2465 = vsel %vm2449, %v1992, 0.0
        %v2466 = vsel %vm2450, %v1993, 0.0
        %v2467 = vsel %vm2451, %v1994, 0.0
        %v2468 = vsel %vm2452, %v1995, 0.0
        %v2469 = vcvt.f32.s32.to.zero.pseudo %v2359
        %v2470 = vcvt.f32.s32.to.zero.pseudo %v2362
        %v2471 = vcvt.f32.s32.to.zero.pseudo %v2365
        %v2472 = vcvt.f32.s32.to.zero.pseudo %v2368
        %v2473 = vcvt.f32.s32.to.zero.pseudo %v2371
        %v2474 = vcvt.f32.s32.to.zero.pseudo %v2374
        %v2475 = vcvt.f32.s32.to.zero.pseudo %v2377
        %v2476 = vcvt.f32.s32.to.zero.pseudo %v2380
        %v2477 = vcvt.f32.s32.to.zero.pseudo %v2383
        %v2478 = vcvt.f32.s32.to.zero.pseudo %v2386
        %v2479 = vcvt.f32.s32.to.zero.pseudo %v2389
        %v2480 = vcvt.f32.s32.to.zero.pseudo %v2392
        %v2481 = vcvt.f32.s32.to.zero.pseudo %v2395
        %v2482 = vcvt.f32.s32.to.zero.pseudo %v2398
        %v2483 = vcvt.f32.s32.to.zero.pseudo %v2401
        %v2484 = vcvt.f32.s32.to.zero.pseudo %v2404
        %vm2485 = vcmp.eq.s32.totalorder %v603, %v2469
        %vm2486 = vcmp.eq.s32.totalorder %v603, %v2470
        %vm2487 = vcmp.eq.s32.totalorder %v603, %v2471
        %vm2488 = vcmp.eq.s32.totalorder %v603, %v2472
        %vm2489 = vcmp.eq.s32.totalorder %v603, %v2473
        %vm2490 = vcmp.eq.s32.totalorder %v603, %v2474
        %vm2491 = vcmp.eq.s32.totalorder %v603, %v2475
        %vm2492 = vcmp.eq.s32.totalorder %v603, %v2476
        %vm2493 = vcmp.eq.s32.totalorder %v603, %v2477
        %vm2494 = vcmp.eq.s32.totalorder %v603, %v2478
        %vm2495 = vcmp.eq.s32.totalorder %v603, %v2479
        %vm2496 = vcmp.eq.s32.totalorder %v603, %v2480
        %vm2497 = vcmp.eq.s32.totalorder %v603, %v2481
        %vm2498 = vcmp.eq.s32.totalorder %v603, %v2482
        %vm2499 = vcmp.eq.s32.totalorder %v603, %v2483
        %vm2500 = vcmp.eq.s32.totalorder %v603, %v2484
        %v2501 = vsel %vm2485, %v2405, 0.0
        %v2502 = vsel %vm2486, %v2406, 0.0
        %v2503 = vsel %vm2487, %v2407, 0.0
        %v2504 = vsel %vm2488, %v2408, 0.0
        %v2505 = vsel %vm2489, %v2409, 0.0
        %v2506 = vsel %vm2490, %v2410, 0.0
        %v2507 = vsel %vm2491, %v2411, 0.0
        %v2508 = vsel %vm2492, %v2412, 0.0
        %v2509 = vsel %vm2493, %v2413, 0.0
        %v2510 = vsel %vm2494, %v2414, 0.0
        %v2511 = vsel %vm2495, %v2415, 0.0
        %v2512 = vsel %vm2496, %v2416, 0.0
        %v2513 = vsel %vm2497, %v2417, 0.0
        %v2514 = vsel %vm2498, %v2418, 0.0
        %v2515 = vsel %vm2499, %v2419, 0.0
        %v2516 = vsel %vm2500, %v2420, 0.0
        %2517 = vxpose.xlu0.b32.start [1/16] %v1847, 128
        %2518 = vxpose.xlu0.b32.cont [2/16] %v1848, 128
        %2519 = vxpose.xlu0.b32.cont [3/16] %v1849, 128
        %2520 = vxpose.xlu0.b32.cont [4/16] %v1850, 128
        %2521 = vxpose.xlu0.b32.cont [5/16] %v1851, 128
        %2522 = vxpose.xlu0.b32.cont [6/16] %v1852, 128
        %2523 = vxpose.xlu0.b32.cont [7/16] %v1853, 128
        %2524 = vxpose.xlu0.b32.cont [8/16] %v1854, 128
        %2525 = vxpose.xlu0.b32.cont [9/16] %v1855, 128
        %2526 = vxpose.xlu0.b32.cont [10/16] %v1856, 128
        %2527 = vxpose.xlu0.b32.cont [11/16] %v1857, 128
        %2528 = vxpose.xlu0.b32.cont [12/16] %v1858, 128
        %2529 = vxpose.xlu0.b32.cont [13/16] %v1859, 128
        %2530 = vxpose.xlu0.b32.cont [14/16] %v1860, 128
        %2531 = vxpose.xlu0.b32.cont [15/16] %v1861, 128
        %2532 = vxpose.xlu0.b32.end [16/16] %v1862, 128
        %v2533 = vpop.trf.xlu0
        %v2534 = vpop.trf.xlu0
        %v2535 = vpop.trf.xlu0
        %v2536 = vpop.trf.xlu0
        %v2537 = vpop.trf.xlu0
        %v2538 = vpop.trf.xlu0
        %v2539 = vpop.trf.xlu0
        %v2540 = vpop.trf.xlu0
        %v2541 = vpop.trf.xlu0
        %v2542 = vpop.trf.xlu0
        %v2543 = vpop.trf.xlu0
        %v2544 = vpop.trf.xlu0
        %v2545 = vpop.trf.xlu0
        %v2546 = vpop.trf.xlu0
        %v2547 = vpop.trf.xlu0
        %v2548 = vpop.trf.xlu0
        %v2550 = vcombine.high %v2533, %v2533
        %v2552 = vunpack.c.l.s4 1966171168
        %v2553 = vunpack.c.0.s8 %v2552
        %v2554 = vlaneseq
        %v2555 = vshrl.u32 %v2554, 7
        %v2556 = vsub.s32 %v2553, %v2555
        %v2557 = vrot.slane %v2533, %v2556
        %v2559 = vunpack.c.l.s4 1966171168
        %v2560 = vunpack.c.0.s8 %v2559
        %v2561 = vlaneseq
        %v2562 = vshrl.u32 %v2561, 7
        %v2563 = vsub.s32 %v2560, %v2562
        %v2564 = vrot.slane %v2550, %v2563
        %v2565 = vcombine.high %v2557, %v2557
        %v2566 = vcombine.high %v2564, %v2564
        %v2568 = vunpack.c.l.s4 1966171168
        %v2569 = vunpack.c.0.s8 %v2568
        %v2570 = vlaneseq
        %v2571 = vshrl.u32 %v2570, 7
        %v2572 = vsub.s32 %v2569, %v2571
        %v2573 = vrot.slane %v2557, %v2572
        %v2575 = vunpack.c.l.s4 1966171168
        %v2576 = vunpack.c.0.s8 %v2575
        %v2577 = vlaneseq
        %v2578 = vshrl.u32 %v2577, 7
        %v2579 = vsub.s32 %v2576, %v2578
        %v2580 = vrot.slane %v2564, %v2579
        %v2582 = vunpack.c.l.s4 1966171168
        %v2583 = vunpack.c.0.s8 %v2582
        %v2584 = vlaneseq
        %v2585 = vshrl.u32 %v2584, 7
        %v2586 = vsub.s32 %v2583, %v2585
        %v2587 = vrot.slane %v2565, %v2586
        %v2589 = vunpack.c.l.s4 1966171168
        %v2590 = vunpack.c.0.s8 %v2589
        %v2591 = vlaneseq
        %v2592 = vshrl.u32 %v2591, 7
        %v2593 = vsub.s32 %v2590, %v2592
        %v2594 = vrot.slane %v2566, %v2593
        %v2595 = vcombine.high %v2573, %v2573
        %v2596 = vcombine.high %v2580, %v2580
        %v2597 = vcombine.high %v2587, %v2587
        %v2598 = vcombine.high %v2594, %v2594
        %2599 = vxpose.xlu0.b32.start [1/16] %v2453, 128
        %2600 = vxpose.xlu0.b32.cont [2/16] %v2454, 128
        %2601 = vxpose.xlu0.b32.cont [3/16] %v2455, 128
        %2602 = vxpose.xlu0.b32.cont [4/16] %v2456, 128
        %2603 = vxpose.xlu0.b32.cont [5/16] %v2457, 128
        %2604 = vxpose.xlu0.b32.cont [6/16] %v2458, 128
        %2605 = vxpose.xlu0.b32.cont [7/16] %v2459, 128
        %2606 = vxpose.xlu0.b32.cont [8/16] %v2460, 128
        %2607 = vxpose.xlu0.b32.cont [9/16] %v2461, 128
        %2608 = vxpose.xlu0.b32.cont [10/16] %v2462, 128
        %2609 = vxpose.xlu0.b32.cont [11/16] %v2463, 128
        %2610 = vxpose.xlu0.b32.cont [12/16] %v2464, 128
        %2611 = vxpose.xlu0.b32.cont [13/16] %v2465, 128
        %2612 = vxpose.xlu0.b32.cont [14/16] %v2466, 128
        %2613 = vxpose.xlu0.b32.cont [15/16] %v2467, 128
        %2614 = vxpose.xlu0.b32.end [16/16] %v2468, 128
        %v2615 = vpop.trf.xlu0
        %v2616 = vpop.trf.xlu0
        %v2617 = vpop.trf.xlu0
        %v2618 = vpop.trf.xlu0
        %v2619 = vpop.trf.xlu0
        %v2620 = vpop.trf.xlu0
        %v2621 = vpop.trf.xlu0
        %v2622 = vpop.trf.xlu0
        %v2623 = vpop.trf.xlu0
        %v2624 = vpop.trf.xlu0
        %v2625 = vpop.trf.xlu0
        %v2626 = vpop.trf.xlu0
        %v2627 = vpop.trf.xlu0
        %v2628 = vpop.trf.xlu0
        %v2629 = vpop.trf.xlu0
        %v2630 = vpop.trf.xlu0
        %v2631 = vlaneseq
        %v2632 = vshrl.u32 %v2631, 7
        %v2633 = vsub.s32 0, %v2632
        %v2634 = vrot.slane %v2573, %v2633
        %v2635 = vlaneseq
        %v2636 = vshrl.u32 %v2635, 7
        %v2637 = vsub.s32 0, %v2636
        %v2638 = vrot.slane %v2587, %v2637
        %v2639 = vlaneseq
        %v2640 = vshrl.u32 %v2639, 7
        %v2641 = vsub.s32 0, %v2640
        %v2642 = vrot.slane %v2595, %v2641
        %v2643 = vlaneseq
        %v2644 = vshrl.u32 %v2643, 7
        %v2645 = vsub.s32 0, %v2644
        %v2646 = vrot.slane %v2597, %v2645
        %v2647 = vlaneseq
        %v2648 = vshrl.u32 %v2647, 7
        %v2649 = vsub.s32 0, %v2648
        %v2650 = vrot.slane %v2580, %v2649
        %v2651 = vlaneseq
        %v2652 = vshrl.u32 %v2651, 7
        %v2653 = vsub.s32 0, %v2652
        %v2654 = vrot.slane %v2594, %v2653
        %v2655 = vlaneseq
        %v2656 = vshrl.u32 %v2655, 7
        %v2657 = vsub.s32 0, %v2656
        %v2658 = vrot.slane %v2596, %v2657
        %v2659 = vlaneseq
        %v2660 = vshrl.u32 %v2659, 7
        %v2661 = vsub.s32 0, %v2660
        %v2662 = vrot.slane %v2598, %v2661
        %v2671 = vmul.f32 %v2634, %v2615
        %v2672 = vmul.f32 %v2634, %v2616
        %v2673 = vmul.f32 %v2634, %v2617
        %v2674 = vmul.f32 %v2638, %v2615
        %v2675 = vmul.f32 %v2638, %v2616
        %v2676 = vmul.f32 %v2638, %v2617
        %v2677 = vmul.f32 %v2642, %v2615
        %v2678 = vmul.f32 %v2642, %v2616
        %v2679 = vmul.f32 %v2642, %v2617
        %v2680 = vmul.f32 %v2646, %v2615
        %v2681 = vmul.f32 %v2646, %v2616
        %v2682 = vmul.f32 %v2646, %v2617
        %v2683 = vmul.f32 %v2650, %v2615
        %v2684 = vmul.f32 %v2650, %v2616
        %v2685 = vmul.f32 %v2650, %v2617
        %v2686 = vmul.f32 %v2654, %v2615
        %v2687 = vmul.f32 %v2654, %v2616
        %v2688 = vmul.f32 %v2654, %v2617
        %v2689 = vmul.f32 %v2658, %v2615
        %v2690 = vmul.f32 %v2658, %v2616
        %v2691 = vmul.f32 %v2658, %v2617
        %v2692 = vmul.f32 %v2662, %v2615
        %v2693 = vmul.f32 %v2662, %v2616
        %v2694 = vmul.f32 %v2662, %v2617
        %2695 = vxpose.xlu0.b32.start [1/16] %v2208, 128
        %2696 = vxpose.xlu0.b32.cont [2/16] %v2209, 128
        %2697 = vxpose.xlu0.b32.cont [3/16] %v2210, 128
        %2698 = vxpose.xlu0.b32.cont [4/16] %v2211, 128
        %2699 = vxpose.xlu0.b32.cont [5/16] %v2212, 128
        %2700 = vxpose.xlu0.b32.cont [6/16] %v2213, 128
        %2701 = vxpose.xlu0.b32.cont [7/16] %v2214, 128
        %2702 = vxpose.xlu0.b32.cont [8/16] %v2215, 128
        %2703 = vxpose.xlu0.b32.cont [9/16] %v2216, 128
        %2704 = vxpose.xlu0.b32.cont [10/16] %v2217, 128
        %2705 = vxpose.xlu0.b32.cont [11/16] %v2218, 128
        %2706 = vxpose.xlu0.b32.cont [12/16] %v2219, 128
        %2707 = vxpose.xlu0.b32.cont [13/16] %v2220, 128
        %2708 = vxpose.xlu0.b32.cont [14/16] %v2221, 128
        %2709 = vxpose.xlu0.b32.cont [15/16] %v2222, 128
        %2710 = vxpose.xlu0.b32.end [16/16] %v2223, 128
        %v2711 = vpop.trf.xlu0
        %v2712 = vpop.trf.xlu0
        %v2713 = vpop.trf.xlu0
        %v2714 = vpop.trf.xlu0
        %v2715 = vpop.trf.xlu0
        %v2716 = vpop.trf.xlu0
        %v2717 = vpop.trf.xlu0
        %v2718 = vpop.trf.xlu0
        %v2719 = vpop.trf.xlu0
        %v2720 = vpop.trf.xlu0
        %v2721 = vpop.trf.xlu0
        %v2722 = vpop.trf.xlu0
        %v2723 = vpop.trf.xlu0
        %v2724 = vpop.trf.xlu0
        %v2725 = vpop.trf.xlu0
        %v2726 = vpop.trf.xlu0
        %v2728 = vcombine.high %v2711, %v2711
        %v2730 = vunpack.c.l.s4 1966171168
        %v2731 = vunpack.c.0.s8 %v2730
        %v2732 = vlaneseq
        %v2733 = vshrl.u32 %v2732, 7
        %v2734 = vsub.s32 %v2731, %v2733
        %v2735 = vrot.slane %v2711, %v2734
        %v2737 = vunpack.c.l.s4 1966171168
        %v2738 = vunpack.c.0.s8 %v2737
        %v2739 = vlaneseq
        %v2740 = vshrl.u32 %v2739, 7
        %v2741 = vsub.s32 %v2738, %v2740
        %v2742 = vrot.slane %v2728, %v2741
        %v2743 = vcombine.high %v2735, %v2735
        %v2744 = vcombine.high %v2742, %v2742
        %v2746 = vunpack.c.l.s4 1966171168
        %v2747 = vunpack.c.0.s8 %v2746
        %v2748 = vlaneseq
        %v2749 = vshrl.u32 %v2748, 7
        %v2750 = vsub.s32 %v2747, %v2749
        %v2751 = vrot.slane %v2735, %v2750
        %v2753 = vunpack.c.l.s4 1966171168
        %v2754 = vunpack.c.0.s8 %v2753
        %v2755 = vlaneseq
        %v2756 = vshrl.u32 %v2755, 7
        %v2757 = vsub.s32 %v2754, %v2756
        %v2758 = vrot.slane %v2742, %v2757
        %v2760 = vunpack.c.l.s4 1966171168
        %v2761 = vunpack.c.0.s8 %v2760
        %v2762 = vlaneseq
        %v2763 = vshrl.u32 %v2762, 7
        %v2764 = vsub.s32 %v2761, %v2763
        %v2765 = vrot.slane %v2743, %v2764
        %v2767 = vunpack.c.l.s4 1966171168
        %v2768 = vunpack.c.0.s8 %v2767
        %v2769 = vlaneseq
        %v2770 = vshrl.u32 %v2769, 7
        %v2771 = vsub.s32 %v2768, %v2770
        %v2772 = vrot.slane %v2744, %v2771
        %v2773 = vcombine.high %v2751, %v2751
        %v2774 = vcombine.high %v2758, %v2758
        %v2775 = vcombine.high %v2765, %v2765
        %v2776 = vcombine.high %v2772, %v2772
        %2777 = vxpose.xlu0.b32.start [1/16] %v2501, 128
        %2778 = vxpose.xlu0.b32.cont [2/16] %v2502, 128
        %2779 = vxpose.xlu0.b32.cont [3/16] %v2503, 128
        %2780 = vxpose.xlu0.b32.cont [4/16] %v2504, 128
        %2781 = vxpose.xlu0.b32.cont [5/16] %v2505, 128
        %2782 = vxpose.xlu0.b32.cont [6/16] %v2506, 128
        %2783 = vxpose.xlu0.b32.cont [7/16] %v2507, 128
        %2784 = vxpose.xlu0.b32.cont [8/16] %v2508, 128
        %2785 = vxpose.xlu0.b32.cont [9/16] %v2509, 128
        %2786 = vxpose.xlu0.b32.cont [10/16] %v2510, 128
        %2787 = vxpose.xlu0.b32.cont [11/16] %v2511, 128
        %2788 = vxpose.xlu0.b32.cont [12/16] %v2512, 128
        %2789 = vxpose.xlu0.b32.cont [13/16] %v2513, 128
        %2790 = vxpose.xlu0.b32.cont [14/16] %v2514, 128
        %2791 = vxpose.xlu0.b32.cont [15/16] %v2515, 128
        %2792 = vxpose.xlu0.b32.end [16/16] %v2516, 128
        %v2793 = vpop.trf.xlu0
        %v2794 = vpop.trf.xlu0
        %v2795 = vpop.trf.xlu0
        %v2796 = vpop.trf.xlu0
        %v2797 = vpop.trf.xlu0
        %v2798 = vpop.trf.xlu0
        %v2799 = vpop.trf.xlu0
        %v2800 = vpop.trf.xlu0
        %v2801 = vpop.trf.xlu0
        %v2802 = vpop.trf.xlu0
        %v2803 = vpop.trf.xlu0
        %v2804 = vpop.trf.xlu0
        %v2805 = vpop.trf.xlu0
        %v2806 = vpop.trf.xlu0
        %v2807 = vpop.trf.xlu0
        %v2808 = vpop.trf.xlu0
        %v2809 = vlaneseq
        %v2810 = vshrl.u32 %v2809, 7
        %v2811 = vsub.s32 0, %v2810
        %v2812 = vrot.slane %v2751, %v2811
        %v2813 = vlaneseq
        %v2814 = vshrl.u32 %v2813, 7
        %v2815 = vsub.s32 0, %v2814
        %v2816 = vrot.slane %v2765, %v2815
        %v2817 = vlaneseq
        %v2818 = vshrl.u32 %v2817, 7
        %v2819 = vsub.s32 0, %v2818
        %v2820 = vrot.slane %v2773, %v2819
        %v2821 = vlaneseq
        %v2822 = vshrl.u32 %v2821, 7
        %v2823 = vsub.s32 0, %v2822
        %v2824 = vrot.slane %v2775, %v2823
        %v2825 = vlaneseq
        %v2826 = vshrl.u32 %v2825, 7
        %v2827 = vsub.s32 0, %v2826
        %v2828 = vrot.slane %v2758, %v2827
        %v2829 = vlaneseq
        %v2830 = vshrl.u32 %v2829, 7
        %v2831 = vsub.s32 0, %v2830
        %v2832 = vrot.slane %v2772, %v2831
        %v2833 = vlaneseq
        %v2834 = vshrl.u32 %v2833, 7
        %v2835 = vsub.s32 0, %v2834
        %v2836 = vrot.slane %v2774, %v2835
        %v2837 = vlaneseq
        %v2838 = vshrl.u32 %v2837, 7
        %v2839 = vsub.s32 0, %v2838
        %v2840 = vrot.slane %v2776, %v2839
        %v2849 = vmul.f32 %v2812, %v2793
        %v2850 = vmul.f32 %v2812, %v2794
        %v2851 = vmul.f32 %v2812, %v2795
        %v2852 = vmul.f32 %v2816, %v2793
        %v2853 = vmul.f32 %v2816, %v2794
        %v2854 = vmul.f32 %v2816, %v2795
        %v2855 = vmul.f32 %v2820, %v2793
        %v2856 = vmul.f32 %v2820, %v2794
        %v2857 = vmul.f32 %v2820, %v2795
        %v2858 = vmul.f32 %v2824, %v2793
        %v2859 = vmul.f32 %v2824, %v2794
        %v2860 = vmul.f32 %v2824, %v2795
        %v2861 = vmul.f32 %v2828, %v2793
        %v2862 = vmul.f32 %v2828, %v2794
        %v2863 = vmul.f32 %v2828, %v2795
        %v2864 = vmul.f32 %v2832, %v2793
        %v2865 = vmul.f32 %v2832, %v2794
        %v2866 = vmul.f32 %v2832, %v2795
        %v2867 = vmul.f32 %v2836, %v2793
        %v2868 = vmul.f32 %v2836, %v2794
        %v2869 = vmul.f32 %v2836, %v2795
        %v2870 = vmul.f32 %v2840, %v2793
        %v2871 = vmul.f32 %v2840, %v2794
        %v2872 = vmul.f32 %v2840, %v2795
        %v2873 = vadd.f32 %v2671, %v2849
        %v2874 = vadd.f32 %v2672, %v2850
        %v2875 = vadd.f32 %v2673, %v2851
        %v2876 = vadd.f32 %v2674, %v2852
        %v2877 = vadd.f32 %v2675, %v2853
        %v2878 = vadd.f32 %v2676, %v2854
        %v2879 = vadd.f32 %v2677, %v2855
        %v2880 = vadd.f32 %v2678, %v2856
        %v2881 = vadd.f32 %v2679, %v2857
        %v2882 = vadd.f32 %v2680, %v2858
        %v2883 = vadd.f32 %v2681, %v2859
        %v2884 = vadd.f32 %v2682, %v2860
        %v2885 = vadd.f32 %v2683, %v2861
        %v2886 = vadd.f32 %v2684, %v2862
        %v2887 = vadd.f32 %v2685, %v2863
        %v2888 = vadd.f32 %v2686, %v2864
        %v2889 = vadd.f32 %v2687, %v2865
        %v2890 = vadd.f32 %v2688, %v2866
        %v2891 = vadd.f32 %v2689, %v2867
        %v2892 = vadd.f32 %v2690, %v2868
        %v2893 = vadd.f32 %v2691, %v2869
        %v2894 = vadd.f32 %v2692, %v2870
        %v2895 = vadd.f32 %v2693, %v2871
        %v2896 = vadd.f32 %v2694, %v2872
        %2897 = vst [vmem:[%s194] sm:$0xff] %v2873
        %2898 = vst [vmem:[%s194 + $0x8] sm:$0xff] %v2874
        %2899 = vst [vmem:[%s194 + $0x10] sm:$0xff] %v2875
        %2900 = vst [vmem:[%s194 + $0x18] sm:$0xff] %v2876
        %2901 = vst [vmem:[%s194 + $0x20] sm:$0xff] %v2877
        %2902 = vst [vmem:[%s194 + $0x28] sm:$0xff] %v2878
        %2903 = vst [vmem:[%s194 + $0x30] sm:$0xff] %v2879
        %2904 = vst [vmem:[%s194 + $0x38] sm:$0xff] %v2880
        %2905 = vst [vmem:[%s194 + $0x40] sm:$0xff] %v2881
        %2906 = vst [vmem:[%s194 + $0x48] sm:$0xff] %v2882
        %2907 = vst [vmem:[%s194 + $0x50] sm:$0xff] %v2883
        %2908 = vst [vmem:[%s194 + $0x58] sm:$0xff] %v2884
        %2909 = vst [vmem:[%s194 + $0x60] sm:$0xff] %v2885
        %2910 = vst [vmem:[%s194 + $0x68] sm:$0xff] %v2886
        %2911 = vst [vmem:[%s194 + $0x70] sm:$0xff] %v2887
        %2912 = vst [vmem:[%s194 + $0x78] sm:$0xff] %v2888
        %2913 = vst [vmem:[%s194 + $0x80] sm:$0xff] %v2889
        %2914 = vst [vmem:[%s194 + $0x88] sm:$0xff] %v2890
        %2915 = vst [vmem:[%s194 + $0x90] sm:$0xff] %v2891
        %2916 = vst [vmem:[%s194 + $0x98] sm:$0xff] %v2892
        %2917 = vst [vmem:[%s194 + $0xa0] sm:$0xff] %v2893
        %2918 = vst [vmem:[%s194 + $0xa8] sm:$0xff] %v2894
        %2919 = vst [vmem:[%s194 + $0xb0] sm:$0xff] %v2895
        %2920 = vst [vmem:[%s194 + $0xb8] sm:$0xff] %v2896
        %v2921 = vlaneseq
        %v2922 = vshrl.u32 %v2921, 7
        %v2923 = vadd.s32 %v2922, 1
        %vm2924 = vcmp.eq.s32.totalorder %v603, %v2923
        %v2925 = vsel %vm2924, 1, 0
        %v2926 = vcvt.s32.f32 %v2925
        %v2927 = vadd.s32 %v2923, 8
        %vm2928 = vcmp.eq.s32.totalorder %v603, %v2927
        %v2929 = vsel %vm2928, 1, 0
        %v2930 = vcvt.s32.f32 %v2929
        %vm2931 = vcmp.eq.s32.totalorder %v603, 0
        %v2932 = vsel %vm2931, 1, 0
        %v2933 = vcvt.s32.f32 %v2932
        %v2934 = vmul.f32 %v1533, %v2933
        %v2935 = vsel %vm425, %v1899, 0
        %2937 = vmatprep.subr.mxu0 0.0
        %2938 = vmatpush1.msra.mxu0 %v2926
        %2939 = vmatprep.subr.mxu0 0.0
        %2940 = vmatpush1.msra.mxu0 0.0
        %2941 = vmatprep.subr.mxu0 0.0
        %2942 = vmatpush1.msra.mxu0 0.0
        %2943 = vmatprep.subr.mxu0 0.0
        %2944 = vmatpush1.msra.mxu0 0.0
        %2945 = vmatprep.subr.mxu0 0.0
        %2946 = vmatpush1.msra.mxu0 0.0
        %2947 = vmatprep.subr.mxu0 0.0
        %2948 = vmatpush1.msra.mxu0 0.0
        %2949 = vmatprep.subr.mxu0 0.0
        %2950 = vmatpush1.msra.mxu0 0.0
        %2951 = vmatprep.subr.mxu0 0.0
        %2952 = vmatpush1.msra.mxu0 0.0
        %2953 = vmatprep.subr.mxu0 0.0
        %2954 = vmatpush1.msra.mxu0 0.0
        %2955 = vmatprep.subr.mxu0 0.0
        %2956 = vmatpush1.msra.mxu0 0.0
        %2957 = vmatprep.subr.mxu0 0.0
        %2958 = vmatpush1.msra.mxu0 0.0
        %2959 = vmatprep.subr.mxu0 0.0
        %2960 = vmatpush1.msra.mxu0 0.0
        %2961 = vmatprep.subr.mxu0 0.0
        %2962 = vmatpush1.msra.mxu0 0.0
        %2963 = vmatprep.subr.mxu0 0.0
        %2964 = vmatpush1.msra.mxu0 0.0
        %2965 = vmatprep.subr.mxu0 0.0
        %2966 = vmatpush1.msra.mxu0 0.0
        %2967 = vmatprep.subr.mxu0 0.0
        %2968 = vmatpush1.msra.mxu0 0.0
        %2969 = vmatprep.subr.mxu0 0.0
        %2970 = vmatpush1.msra.mxu0 0.0
        %2971 = vmatprep.subr.mxu0 0.0
        %2972 = vmatpush1.msra.mxu0 0.0
        %2973 = vmatprep.subr.mxu0 0.0
        %2974 = vmatpush1.msra.mxu0 0.0
        %2975 = vmatprep.subr.mxu0 0.0
        %2976 = vmatpush1.msra.mxu0 0.0
        %2977 = vmatprep.subr.mxu0 0.0
        %2978 = vmatpush1.msra.mxu0 0.0
        %2979 = vmatprep.subr.mxu0 0.0
        %2980 = vmatpush1.msra.mxu0 0.0
        %2981 = vmatprep.subr.mxu0 0.0
        %2982 = vmatpush1.msra.mxu0 0.0
        %2983 = vmatprep.subr.mxu0 0.0
        %2984 = vmatpush1.msra.mxu0 0.0
        %2985 = vmatprep.subr.mxu0 0.0
        %2986 = vmatpush1.msra.mxu0 0.0
        %2987 = vmatprep.subr.mxu0 0.0
        %2988 = vmatpush1.msra.mxu0 0.0
        %2989 = vmatprep.subr.mxu0 0.0
        %2990 = vmatpush1.msra.mxu0 0.0
        %2991 = vmatprep.subr.mxu0 0.0
        %2992 = vmatpush1.msra.mxu0 0.0
        %2993 = vmatprep.subr.mxu0 0.0
        %2994 = vmatpush1.msra.mxu0 0.0
        %2995 = vmatprep.subr.mxu0 0.0
        %2996 = vmatpush1.msra.mxu0 0.0
        %2997 = vmatprep.subr.mxu0 0.0
        %2998 = vmatpush1.msra.mxu0 0.0
        %2999 = vmatprep.subr.mxu0 0.0
        %3000 = vmatpush1.msra.mxu0 0.0
        %3001 = vmatprep.mubr.f32.mxu0 0.0
        %3002 = vmatmul.mubr.f32.gmra.mrb[0].mxu0 %v2935
        %v3003 = vpop.f32.mrb[0].mxu0
        %v3004 = vadd.f32 0.0, %v3003
        %v3005 = vpop.f32.mrb[0].mxu0
        %3006 = vdwg.mxu0
        %v3007 = vadd.f32 %v2934, %v3004
        %v3009 = vsel %vm425, %v2292, 0
        %3011 = vmatprep.subr.mxu0 0.0
        %3012 = vmatpush1.msra.mxu0 %v2930
        %3013 = vmatprep.subr.mxu0 0.0
        %3014 = vmatpush1.msra.mxu0 0.0
        %3015 = vmatprep.subr.mxu0 0.0
        %3016 = vmatpush1.msra.mxu0 0.0
        %3017 = vmatprep.subr.mxu0 0.0
        %3018 = vmatpush1.msra.mxu0 0.0
        %3019 = vmatprep.subr.mxu0 0.0
        %3020 = vmatpush1.msra.mxu0 0.0
        %3021 = vmatprep.subr.mxu0 0.0
        %3022 = vmatpush1.msra.mxu0 0.0
        %3023 = vmatprep.subr.mxu0 0.0
        %3024 = vmatpush1.msra.mxu0 0.0
        %3025 = vmatprep.subr.mxu0 0.0
        %3026 = vmatpush1.msra.mxu0 0.0
        %3027 = vmatprep.subr.mxu0 0.0
        %3028 = vmatpush1.msra.mxu0 0.0
        %3029 = vmatprep.subr.mxu0 0.0
        %3030 = vmatpush1.msra.mxu0 0.0
        %3031 = vmatprep.subr.mxu0 0.0
        %3032 = vmatpush1.msra.mxu0 0.0
        %3033 = vmatprep.subr.mxu0 0.0
        %3034 = vmatpush1.msra.mxu0 0.0
        %3035 = vmatprep.subr.mxu0 0.0
        %3036 = vmatpush1.msra.mxu0 0.0
        %3037 = vmatprep.subr.mxu0 0.0
        %3038 = vmatpush1.msra.mxu0 0.0
        %3039 = vmatprep.subr.mxu0 0.0
        %3040 = vmatpush1.msra.mxu0 0.0
        %3041 = vmatprep.subr.mxu0 0.0
        %3042 = vmatpush1.msra.mxu0 0.0
        %3043 = vmatprep.subr.mxu0 0.0
        %3044 = vmatpush1.msra.mxu0 0.0
        %3045 = vmatprep.subr.mxu0 0.0
        %3046 = vmatpush1.msra.mxu0 0.0
        %3047 = vmatprep.subr.mxu0 0.0
        %3048 = vmatpush1.msra.mxu0 0.0
        %3049 = vmatprep.subr.mxu0 0.0
        %3050 = vmatpush1.msra.mxu0 0.0
        %3051 = vmatprep.subr.mxu0 0.0
        %3052 = vmatpush1.msra.mxu0 0.0
        %3053 = vmatprep.subr.mxu0 0.0
        %3054 = vmatpush1.msra.mxu0 0.0
        %3055 = vmatprep.subr.mxu0 0.0
        %3056 = vmatpush1.msra.mxu0 0.0
        %3057 = vmatprep.subr.mxu0 0.0
        %3058 = vmatpush1.msra.mxu0 0.0
        %3059 = vmatprep.subr.mxu0 0.0
        %3060 = vmatpush1.msra.mxu0 0.0
        %3061 = vmatprep.subr.mxu0 0.0
        %3062 = vmatpush1.msra.mxu0 0.0
        %3063 = vmatprep.subr.mxu0 0.0
        %3064 = vmatpush1.msra.mxu0 0.0
        %3065 = vmatprep.subr.mxu0 0.0
        %3066 = vmatpush1.msra.mxu0 0.0
        %3067 = vmatprep.subr.mxu0 0.0
        %3068 = vmatpush1.msra.mxu0 0.0
        %3069 = vmatprep.subr.mxu0 0.0
        %3070 = vmatpush1.msra.mxu0 0.0
        %3071 = vmatprep.subr.mxu0 0.0
        %3072 = vmatpush1.msra.mxu0 0.0
        %3073 = vmatprep.subr.mxu0 0.0
        %3074 = vmatpush1.msra.mxu0 0.0
        %3075 = vmatprep.mubr.f32.mxu0 0.0
        %3076 = vmatmul.mubr.f32.gmra.mrb[0].mxu0 %v3009
        %v3077 = vpop.f32.mrb[0].mxu0
        %v3078 = vadd.f32 0.0, %v3077
        %v3079 = vpop.f32.mrb[0].mxu0
        %3080 = vdwg.mxu0
        %v3081 = vadd.f32 %v3007, %v3078
        %3082 = vst [vmem:[%s200] sm:$0x1] %v3081
        %s3083 = sand.u32 %s98, 1
        %s3084 = scalar_lea.sflag [#allocation3], %s3083
        %s3085 = sand.u32 %s98, 1
        %s3086 = smul.addr %s3085, 192
        %s3087 = scalar_lea.vmem [#allocation2], %s3086
        %s3088 = sand.u32 %s124, 1
        %s3089 = scalar_lea.sflag [#allocation5], %s3088
        %s3090 = sand.u32 %s124, 1
        %s3091 = scalar_lea.vmem [#allocation4], %s3090
        // Predicated region
        $region33: #{tpu_custom_call.1} parent=31 // pred_check
          %p3092 = pneg %p108
        $region34: #{tpu_custom_call.1} parent=31 // pred_check_branch
          %3094 = sbr.rel (%p3092) target = $region36
        $region35: #{tpu_custom_call.1} parent=31 // pred_region
          %s3096 = ssub.s32 3072, 3072
          %3097 = vsyncadd %s3084, %s3096
          %s3098 = smul.addr %s22, 24
          %s3099 = smul.addr %s3098, 128
          %s3100 = scalar_lea.hbm %s3, %s3099
          %s3101 = sshll.u32 %s3087, 4
          %s3102 = int_to_ptr.vmem [resolvable:$true] %s3101
          %3107 = dma.vmem_to_hbm [thread:$0]  %s3102, 3072, %s3100, %s3084, 128, 128, 8
        $region36: #{tpu_custom_call.1} parent=31 // pred_fallthru
          _
        // Predicated region
        $region37: #{tpu_custom_call.1} parent=31 // pred_check
          %p3108 = pneg %p134
        $region38: #{tpu_custom_call.1} parent=31 // pred_check_branch
          %3110 = sbr.rel (%p3108) target = $region40
        $region39: #{tpu_custom_call.1} parent=31 // pred_region
          %s3112 = ssub.s32 16, 16
          %3113 = vsyncadd %s3089, %s3112
          %s3114 = smul.addr %s22, 16
          %s3115 = scalar_lea.hbm %s4, %s3114
          %s3117 = sshll.u32 %s3091, 4
          %s3118 = int_to_ptr.vmem [resolvable:$true] %s3117
          %3120 = dma.vmem_to_hbm [thread:$0]  %s3118, 16, %s3115, %s3089
        $region40: #{tpu_custom_call.1} parent=31 // pred_fallthru
          _
      $region32: #{tpu_custom_call.1} parent=5 // pred_fallthru
        _
      %p3121 = scmp.le.s32.totalorder 2, %s17
      // Predicated region
      $region41: #{tpu_custom_call.1} parent=5 // pred_check
        %p3122 = pneg %p3121
      $region42: #{tpu_custom_call.1} parent=5 // pred_check_branch
        %3124 = sbr.rel (%p3122) target = $region44
      $region43: #{tpu_custom_call.1} parent=5 // pred_region
        %s3125 = ssub.s32 %s17, 2
        // Predicated region
        $region45: #{tpu_custom_call.1} parent=43 // pred_check
          %p3126 = pneg %p114
        $region46: #{tpu_custom_call.1} parent=43 // pred_check_branch
          %3128 = sbr.rel (%p3126) target = $region48
        $region47: #{tpu_custom_call.1} parent=43 // pred_region
          %s3129 = sand.u32 %s99, 1
          %s3130 = scalar_lea.sflag [#allocation3], %s3129
          %s3131 = sand.u32 %s99, 1
          %s3132 = smul.addr %s3131, 192
          %s3133 = scalar_lea.vmem [#allocation2], %s3132
          %3134 = dma.done %s3130, 3072
        $region48: #{tpu_custom_call.1} parent=43 // pred_fallthru
          _
        // Predicated region
        $region49: #{tpu_custom_call.1} parent=43 // pred_check
          %p3135 = pneg %p140
        $region50: #{tpu_custom_call.1} parent=43 // pred_check_branch
          %3137 = sbr.rel (%p3135) target = $region52
        $region51: #{tpu_custom_call.1} parent=43 // pred_region
          %s3138 = sand.u32 %s125, 1
          %s3139 = scalar_lea.sflag [#allocation5], %s3138
          %s3140 = sand.u32 %s125, 1
          %s3141 = scalar_lea.vmem [#allocation4], %s3140
          %3142 = dma.done %s3139, 16
        $region52: #{tpu_custom_call.1} parent=43 // pred_fallthru
          _
      $region44: #{tpu_custom_call.1} parent=5 // pred_fallthru
        _
    $region6: #{tpu_custom_call.1} parent=1 // loop_footer
      %s21 = sadd.s32 1, %s17
    $region7: #{tpu_custom_call.1} parent=1 // loop_footer_branch
      %16 = sbr.rel target = $region3
    $region8: #{tpu_custom_call.1} parent=1 // loop_exit
      _
    %3143 = vsyncpa [#allocation3], 1
    %s3144 = scalar_lea.sflag [#allocation3], 1
    %3145 = vsyncpa %s3144, 1
    %3146 = vsyncpa [#allocation5], 1
    %s3147 = scalar_lea.sflag [#allocation5], 1
    %3148 = vsyncpa %s3147, 1

</llo_original>
